<compile_context>
chip_gen: v6e
topology: v6e:2x2x1
jax: 0.10.0
libtpu: 0.0.40
codegen_flags: <defaults>
</compile_context>

<pallas_src>
import functools
import math

import jax
import jax.numpy as jnp
from jax.experimental import pallas as pl
from jax.experimental.pallas import tpu as pltpu


# ---------------------------------------------------------------------------
# Fused kernel: Graph_Learn + ajloss + cheb_conv + node-drop gather + all FCs
# + projection head + contrastive / L2 losses + classifier + sample weights.
# ---------------------------------------------------------------------------

def semigcl_kernel(idx_ref, xf_ref, xr_ref, tab_ref, out_ref,
                   feat_sc, aug_sc,
                   *, N, V, F, K, Fout, selet, C, B, alpha, off):
    f32 = jnp.float32

    def blk(name):
        r0, nr, nc = off[name]
        return tab_ref[r0:r0 + nr, 0:nc]

    def dot(a, b):
        return jnp.dot(a, b, preferred_element_type=f32)

    xf = xf_ref[...]                       # (N*V, F)   x with batch folded into rows
    xr = xr_ref[...]                       # (N, V*F)   x row-flattened (lane dense)

    # Precomputed 0/1 selection matrices (hoisted to host, part of the one slab).
    Pt = blk("Pt")                         # (N*V, N)
    Pn = blk("Pn")                         # (N, N*V)
    G1 = blk("G1")                         # (V*F, V)
    G1a = blk("G1a")                       # (V*F, V)   Graph_Learn.a folded in
    Ef = blk("Ef")                         # (F, V*F)
    Ev2 = blk("Ev2")                       # (V, N*V)
    eye = blk("eye")                       # (N*V, V)
    bmask = blk("bmask")                   # (N*V, N*V)

    # --- Graph_Learn ---------------------------------------------------------
    xi_big = dot(xf, Ef)                   # x[n,i,f] tiled over j     (N*V, V*F)
    xj_big = dot(Pt, xr)                   # x[n,j,f]                  (N*V, V*F)
    diff = xi_big - xj_big
    d1 = dot(jnp.abs(diff), G1a)           # weighted L1 distances     (N*V, V)
    q = dot(diff * diff, G1)               # squared L2 distances      (N*V, V)
    tmp_s = jnp.exp(-jnp.maximum(d1, 0.0))
    csum = dot(Pn, tmp_s)                  # per-batch column sums     (N, V)
    s = tmp_s * pl.reciprocal(dot(Pt, csum), approx=True)              # (N*V, V)

    # ajloss = F_norm_loss(S, 1) + diff_loss(diff, S, alpha)
    sloss = jnp.sum(s * s) / N
    col_s = dot(Pn, s)                     # column sums of S          (N, V)
    row_q = dot(Pn, q)                     # == row sums (q is symmetric in (i,j))
    ajloss = sloss + alpha * jnp.sum(col_s * row_q)

    # --- cheb_conv -------------------------------------------------------------
    d_big = dot(Pt, col_s)                 # per-node degree           (N*V, V)
    L = eye * d_big - s                    # D - W
    L_t = L - eye                          # 2L/lambda_max - I, lambda_max = 2
    cheb = [eye, L_t]
    for i in range(2, K):
        # elementwise multiply, exactly as in the PyTorch reference
        cheb.append(2.0 * L_t * cheb[i - 1] - cheb[i - 2])

    th0, _, _ = off["theta"]

    def theta_k(k):
        return tab_ref[th0 + k * F:th0 + (k + 1) * F, 0:Fout]

    out = dot(xf, theta_k(0))              # T_0 = I
    for k in range(1, K):
        tk_bd = dot(cheb[k], Ev2) * bmask               # block-diag (N*V, N*V)
        out = out + dot(dot(tk_bd, xf), theta_k(k))
    feat = jnp.maximum(out, 0.0)           # relu(cheb_conv)           (N*V, Fout)
    feat_sc[...] = feat

    # --- node-drop augmentation gather (aug1 rows 0..N-1, aug2 rows N..2N-1) ---
    for m in range(2 * N):
        n = m % N
        for si in range(selet):
            r = n * V + idx_ref[m, si]
            aug_sc[m:m + 1, si * Fout:(si + 1) * Fout] = feat_sc[pl.ds(r, 1), :]
    augs = aug_sc[...]                     # (2N, selet*Fout)

    # --- dense tail -------------------------------------------------------------
    def lin(x, wname, bname, relu=True):
        y = dot(x, blk(wname)) + blk(bname)
        return jnp.maximum(y, 0.0) if relu else y

    def cos_sim(u, v):
        # torch.cosine_similarity semantics: per-vector norm clamp at eps=1e-8
        inv_u = jax.lax.rsqrt(jnp.maximum(jnp.sum(u * u, axis=1, keepdims=True), 1e-16))
        inv_v = jax.lax.rsqrt(jnp.maximum(jnp.sum(v * v, axis=1, keepdims=True), 1e-16))
        return jax.lax.dot_general(u * inv_u, v * inv_v,
                                   (((1,), (1,)), ((), ())),
                                   preferred_element_type=f32)

    feature1 = lin(lin(xr, "f1_w", "f1_b"), "f2_w", "f2_b")             # (N, 64)
    gfeat = lin(lin(augs, "g1_w", "g1_b"), "g2_w", "g2_b")              # (2N, 64)
    proj = lin(lin(gfeat, "p1_w", "p1_b"), "p2_w", "p2_b", relu=False)  # (2N, 16)

    aug1_f1 = gfeat[0:N]
    aug2_f1 = gfeat[N:2 * N]
    dvec = aug1_f1 - aug2_f1
    l2 = jnp.sum(dvec * dvec) / dvec.size

    sim = cos_sim(proj[0:N], proj[N:2 * N])                             # (N, N)
    ri = jax.lax.broadcasted_iota(jnp.int32, (N, N), 0)
    ci = jax.lax.broadcasted_iota(jnp.int32, (N, N), 1)
    trace = jnp.sum(jnp.where(ri == ci, sim, 0.0))
    m_r = jnp.max(sim, axis=1, keepdims=True)
    lse_r = m_r + jnp.log(jnp.sum(jnp.exp(sim - m_r), axis=1, keepdims=True))
    m_c = jnp.max(sim, axis=0, keepdims=True)
    lse_c = m_c + jnp.log(jnp.sum(jnp.exp(sim - m_c), axis=0, keepdims=True))
    closs = (jnp.sum(lse_r) + jnp.sum(lse_c) - 2.0 * trace) / (2.0 * N)

    # classification head: concat(feature1, aug1_f1) @ c_fc1_w == two accumulated
    # matmuls against the split weight halves.
    class_feature = jnp.maximum(
        dot(feature1, blk("c1a_w")) + dot(aug1_f1, blk("c1b_w")) + blk("c1_b"), 0.0)
    pred = dot(class_feature, blk("cls_w")) + blk("cls_b")              # (N, C)

    # source/target sample weights (softmax over source rows).
    sim_sample = cos_sim(class_feature[0:B], class_feature[N - B:N])    # (B, B)
    w = jnp.mean(sim_sample, axis=1, keepdims=True)
    w = w - jnp.max(w, axis=0, keepdims=True)
    e = jnp.exp(w)
    simw = e * pl.reciprocal(jnp.sum(e, axis=0, keepdims=True), approx=True)

    # --- pack every output into one lane-dense slab ---------------------------
    out_ref[...] = jnp.zeros_like(out_ref)
    out_ref[0:N, 0:C] = pred
    out_ref[0:B, 64:65] = simw
    out_ref[0:1, 96:97] = ajloss.reshape(1, 1)
    out_ref[0:1, 97:98] = closs.reshape(1, 1)
    out_ref[0:1, 98:99] = l2.reshape(1, 1)


# ---------------------------------------------------------------------------
# Host-side packing of weights + selection-matrix constants into ONE slab.
# ---------------------------------------------------------------------------

def pack_rows(blocks):
    maxc = max(a.shape[1] for _, a in blocks)
    width = ((max(maxc, 128) + 127) // 128) * 128
    parts, off, r = [], {}, 0
    for name, a in blocks:
        a = jnp.asarray(a, jnp.float32)
        nr, nc = a.shape
        if nc < width:
            a = jnp.pad(a, ((0, 0), (0, width - nc)))
        parts.append(a)
        off[name] = (r, nr, nc)
        r += nr
    return jnp.concatenate(parts, axis=0), off


def build_tables(params, N, V, F, K, Fout):
    NV, VF = N * V, V * F
    f32 = jnp.float32
    ar = lambda n: jnp.arange(n, dtype=jnp.int32)

    Pt = (ar(NV)[:, None] // V == ar(N)[None, :]).astype(f32)          # (NV, N)
    Pn = Pt.T                                                          # (N, NV)
    G1 = (ar(VF)[:, None] // F == ar(V)[None, :]).astype(f32)          # (VF, V)
    a_rows = jnp.tile(params["gl_a"].reshape(F), V)                    # (VF,)
    G1a = G1 * a_rows[:, None]
    Ef = (ar(VF)[None, :] % F == ar(F)[:, None]).astype(f32)           # (F, VF)
    Ev2 = (ar(NV)[None, :] % V == ar(V)[:, None]).astype(f32)          # (V, NV)
    eye = (ar(NV)[:, None] % V == ar(V)[None, :]).astype(f32)          # (NV, V)
    bmask = (ar(NV)[:, None] // V == ar(NV)[None, :] // V).astype(f32)  # (NV, NV)

    h = params["f_fc2_w"].shape[1]       # width of feature1 (split point of c_fc1_w)
    blocks = [
        ("Pt", Pt), ("Pn", Pn), ("G1", G1), ("G1a", G1a), ("Ef", Ef),
        ("Ev2", Ev2), ("eye", eye), ("bmask", bmask),
        ("theta", params["theta"].reshape(K * F, Fout)),
        ("f1_w", params["f_fc1_w"]), ("f1_b", params["f_fc1_b"]),
        ("f2_w", params["f_fc2_w"]), ("f2_b", params["f_fc2_b"]),
        ("g1_w", params["g_fc1_w"]), ("g1_b", params["g_fc1_b"]),
        ("g2_w", params["g_fc2_w"]), ("g2_b", params["g_fc2_b"]),
        ("p1_w", params["ph_fc1_w"]), ("p1_b", params["ph_fc1_b"]),
        ("p2_w", params["ph_fc2_w"]), ("p2_b", params["ph_fc2_b"]),
        ("c1a_w", params["c_fc1_w"][:h]), ("c1b_w", params["c_fc1_w"][h:]),
        ("c1_b", params["c_fc1_b"]),
        ("cls_w", params["cls_w"]), ("cls_b", params["cls_b"]),
    ]
    return pack_rows(blocks)


# ---------------------------------------------------------------------------
# Parameter initialization (deterministic, PyTorch-like)
# ---------------------------------------------------------------------------

def init_linear(key, fan_in, fan_out):
    k1, k2 = jax.random.split(key)
    bound = 1.0 / math.sqrt(fan_in)
    W = jax.random.uniform(k1, (fan_in, fan_out), jnp.float32, -bound, bound)
    b = jax.random.uniform(k2, (1, fan_out), jnp.float32, -bound, bound)
    return W, b


def init_params(net_params, key):
    V = net_params["num_of_vertices"]
    F = net_params["num_of_features"]
    Fout = net_params["node_feature_hidden1"]
    K = net_params["K"]
    linearsize = net_params["linearsize"]
    selet = int(V * net_params["drop_rate"])
    keys = jax.random.split(key, 16)
    p = {}
    p["gl_a"] = jnp.ones((F,), jnp.float32)                               # Graph_Learn.a
    p["theta"] = jax.random.uniform(keys[0], (K, F, Fout), jnp.float32, 0.0, 1.0)
    p["f_fc1_w"], p["f_fc1_b"] = init_linear(keys[1], V * F, 64)          # fea_extrator_f
    p["f_fc2_w"], p["f_fc2_b"] = init_linear(keys[2], 64, 64)
    p["g_fc1_w"], p["g_fc1_b"] = init_linear(keys[3], selet * Fout, linearsize)
    p["g_fc2_w"], p["g_fc2_b"] = init_linear(keys[4], linearsize, 64)     # fea_extrator_g
    p["c_fc1_w"], p["c_fc1_b"] = init_linear(keys[5], 64 * 2, 64)         # fea_extrator_c (fc1 only)
    p["ph_fc1_w"], p["ph_fc1_b"] = init_linear(keys[6], 64, 64)           # projection_head
    p["ph_fc2_w"], p["ph_fc2_b"] = init_linear(keys[7], 64, 16)
    p["cls_w"], p["cls_b"] = init_linear(keys[8], 64, net_params["category_number"])
    return p


# ---------------------------------------------------------------------------
# Forward orchestration (one pallas_call)
# ---------------------------------------------------------------------------

def semigcl_forward(slab, off, x, net_params, aug_key):
    N, V, F = x.shape
    K = net_params["K"]
    Fout = net_params["node_feature_hidden1"]
    C = net_params["category_number"]
    B = net_params["batch_size"]
    alpha = net_params["GLalpha"]
    selet = int(V * net_params["drop_rate"])
    assert C <= 32 and B <= 8 and N <= 8

    # node-drop indices for the two augmentations (random.sample equivalent).
    keys = jax.random.split(aug_key, 2 * N)
    idx = jax.vmap(lambda k: jax.random.permutation(k, V)[:selet])(keys)
    idx = idx.astype(jnp.int32)                                          # (2N, selet)

    xf = x.reshape(N * V, F)
    xr = x.reshape(N, V * F)

    out_rows = max(8, N)
    kernel = functools.partial(
        semigcl_kernel, N=N, V=V, F=F, K=K, Fout=Fout, selet=selet,
        C=C, B=B, alpha=alpha, off=off)

    out_slab = pl.pallas_call(
        kernel,
        out_shape=jax.ShapeDtypeStruct((out_rows, 128), jnp.float32),
        in_specs=[
            pl.BlockSpec(memory_space=pltpu.MemorySpace.SMEM),   # aug indices
            pl.BlockSpec(memory_space=pltpu.MemorySpace.VMEM),   # xf
            pl.BlockSpec(memory_space=pltpu.MemorySpace.VMEM),   # xr
            pl.BlockSpec(memory_space=pltpu.MemorySpace.VMEM),   # packed weight/const slab
        ],
        out_specs=pl.BlockSpec(memory_space=pltpu.MemorySpace.VMEM),
        scratch_shapes=[
            pltpu.VMEM((N * V, Fout), jnp.float32),              # GCN features
            pltpu.VMEM((2 * N, selet * Fout), jnp.float32),      # gathered augmentations
        ],
    )(idx, xf, xr, slab)

    pred = out_slab[0:N, 0:C]
    sim_weight = out_slab[0:B, 64:65]
    ajloss = out_slab[0, 96]
    contrastive_loss = out_slab[0, 97]
    L2 = out_slab[0, 98]

    # TODO(synk): adversarial.DomainAdversarialLoss / TripleDomainAdversarialLoss
    # and MultiHeadAttention (Multi_att=1 path) are external modules not provided
    # in the reference source; domain_output omitted (Multi_att=0 identity path
    # is what the kernel implements).
    domain_output = None
    return pred, domain_output, ajloss, contrastive_loss, sim_weight, L2


# ---------------------------------------------------------------------------
# main
# ---------------------------------------------------------------------------

if __name__ == "__main__":
    net_params = {
        "DEVICE": None,
        "num_of_features": 8,
        "num_of_vertices": 16,
        "node_feature_hidden1": 8,
        "K": 3,
        "GLalpha": 1e-3,
        "drop_rate": 0.75,
        "linearsize": 32,
        "category_number": 3,
        "batch_size": 2,        # N = 2 * batch_size (source + target)
        "Multi_att": 0,
    }

    key = jax.random.PRNGKey(0)
    k_param, k_data, k_aug = jax.random.split(key, 3)

    N = 2 * net_params["batch_size"]
    V = net_params["num_of_vertices"]
    F = net_params["num_of_features"]
    x = jax.random.normal(k_data, (N, V, F), dtype=jnp.float32)

    params = init_params(net_params, k_param)
    slab, off = build_tables(params, N, V, F, net_params["K"],
                             net_params["node_feature_hidden1"])

    fwd = jax.jit(lambda slab_, xx, kk: semigcl_forward(slab_, off, xx, net_params, kk))
    (pred, domain_output, ajloss, contrastive_loss,
     sim_weight, L2) = fwd(slab, x, k_aug)

    jax.block_until_ready((pred, ajloss, contrastive_loss, sim_weight, L2))
    assert pred.shape == (N, net_params["category_number"])
    assert sim_weight.shape == (net_params["batch_size"], 1)
    print("KERNEL_OK")
</pallas_src>

<mosaic_0001>
module attributes {stable_mosaic.version = 11 : i64} {
  func.func @semigcl_kernel(%arg0: memref<8x12xi32, #tpu.memory_space<smem>>, %arg1: memref<64x8xf32, #tpu.memory_space<vmem>>, %arg2: memref<4x128xf32, #tpu.memory_space<vmem>>, %arg3: memref<1148x128xf32, #tpu.memory_space<vmem>>, %arg4: memref<8x128xf32, #tpu.memory_space<vmem>>, %arg5: memref<64x8xf32, #tpu.memory_space<vmem>>, %arg6: memref<8x96xf32, #tpu.memory_space<vmem>>) attributes {dimension_semantics = [], scalar_prefetch = 0 : i64, scratch_operands = 2 : i64, tpu.core_type = #tpu.core_type<tc>} {
    %c0 = arith.constant 0 : index
    %c0_0 = arith.constant 0 : index
    %0 = vector.load %arg1[%c0, %c0_0] : memref<64x8xf32, #tpu.memory_space<vmem>>, vector<64x8xf32>
    %c0_1 = arith.constant 0 : index
    %c0_2 = arith.constant 0 : index
    %1 = vector.load %arg2[%c0_1, %c0_2] : memref<4x128xf32, #tpu.memory_space<vmem>>, vector<4x128xf32>
    %c0_3 = arith.constant 0 : index
    %c0_4 = arith.constant 0 : index
    %2 = vector.load %arg3[%c0_3, %c0_4] : memref<1148x128xf32, #tpu.memory_space<vmem>>, vector<64x4xf32>
    %c64 = arith.constant 64 : index
    %c0_5 = arith.constant 0 : index
    %3 = vector.load %arg3[%c64, %c0_5] : memref<1148x128xf32, #tpu.memory_space<vmem>>, vector<4x64xf32>
    %c68 = arith.constant 68 : index
    %c0_6 = arith.constant 0 : index
    %4 = vector.load %arg3[%c68, %c0_6] : memref<1148x128xf32, #tpu.memory_space<vmem>>, vector<128x16xf32>
    %c196 = arith.constant 196 : index
    %c0_7 = arith.constant 0 : index
    %5 = vector.load %arg3[%c196, %c0_7] : memref<1148x128xf32, #tpu.memory_space<vmem>>, vector<128x16xf32>
    %c324 = arith.constant 324 : index
    %c0_8 = arith.constant 0 : index
    %6 = vector.load %arg3[%c324, %c0_8] : memref<1148x128xf32, #tpu.memory_space<vmem>>, vector<8x128xf32>
    %c332 = arith.constant 332 : index
    %c0_9 = arith.constant 0 : index
    %7 = vector.load %arg3[%c332, %c0_9] : memref<1148x128xf32, #tpu.memory_space<vmem>>, vector<16x64xf32>
    %c348 = arith.constant 348 : index
    %c0_10 = arith.constant 0 : index
    %8 = vector.load %arg3[%c348, %c0_10] : memref<1148x128xf32, #tpu.memory_space<vmem>>, vector<64x16xf32>
    %c412 = arith.constant 412 : index
    %c0_11 = arith.constant 0 : index
    %9 = vector.load %arg3[%c412, %c0_11] : memref<1148x128xf32, #tpu.memory_space<vmem>>, vector<64x64xf32>
    %cst = arith.constant dense<0.000000e+00> : vector<64x128xf32>
    %10 = tpu.matmul %0, %6, %cst {dimension_numbers = #tpu.dot_dimension_numbers<[1], [0], [0], [1], [0, 0, 1, 1], [], []>} : vector<64x8xf32>, vector<8x128xf32>, vector<64x128xf32> -> vector<64x128xf32>
    %cst_12 = arith.constant dense<0.000000e+00> : vector<64x128xf32>
    %11 = tpu.matmul %2, %1, %cst_12 {dimension_numbers = #tpu.dot_dimension_numbers<[1], [0], [0], [1], [0, 0, 1, 1], [], []>} : vector<64x4xf32>, vector<4x128xf32>, vector<64x128xf32> -> vector<64x128xf32>
    %12 = arith.subf %10, %11 : vector<64x128xf32>
    %13 = math.absf %12 : vector<64x128xf32>
    %cst_13 = arith.constant dense<0.000000e+00> : vector<64x16xf32>
    %14 = tpu.matmul %13, %5, %cst_13 {dimension_numbers = #tpu.dot_dimension_numbers<[1], [0], [0], [1], [0, 0, 1, 1], [], []>} : vector<64x128xf32>, vector<128x16xf32>, vector<64x16xf32> -> vector<64x16xf32>
    %15 = arith.mulf %12, %12 : vector<64x128xf32>
    %cst_14 = arith.constant dense<0.000000e+00> : vector<64x16xf32>
    %16 = tpu.matmul %15, %4, %cst_14 {dimension_numbers = #tpu.dot_dimension_numbers<[1], [0], [0], [1], [0, 0, 1, 1], [], []>} : vector<64x128xf32>, vector<128x16xf32>, vector<64x16xf32> -> vector<64x16xf32>
    %cst_15 = arith.constant 0.000000e+00 : f32
    %17 = vector.broadcast %cst_15 : f32 to vector<64x16xf32>
    %18 = arith.maximumf %14, %17 : vector<64x16xf32>
    %cst_16 = arith.constant 0.000000e+00 : f32
    %19 = vector.broadcast %cst_16 : f32 to vector<64x16xf32>
    %20 = arith.subf %19, %18 : vector<64x16xf32>
    %21 = math.exp %20 : vector<64x16xf32>
    %cst_17 = arith.constant dense<0.000000e+00> : vector<4x16xf32>
    %22 = tpu.matmul %3, %21, %cst_17 {dimension_numbers = #tpu.dot_dimension_numbers<[1], [0], [0], [1], [0, 0, 1, 1], [], []>} : vector<4x64xf32>, vector<64x16xf32>, vector<4x16xf32> -> vector<4x16xf32>
    %cst_18 = arith.constant dense<0.000000e+00> : vector<64x16xf32>
    %23 = tpu.matmul %2, %22, %cst_18 {dimension_numbers = #tpu.dot_dimension_numbers<[1], [0], [0], [1], [0, 0, 1, 1], [], []>} : vector<64x4xf32>, vector<4x16xf32>, vector<64x16xf32> -> vector<64x16xf32>
    %24 = tpu.reciprocal %23 {approx = true} : vector<64x16xf32> -> vector<64x16xf32>
    %25 = arith.mulf %21, %24 : vector<64x16xf32>
    %26 = arith.mulf %25, %25 : vector<64x16xf32>
    %27 = vector.shape_cast %26 : vector<64x16xf32> to vector<1x64x16xf32>
    %cst_19 = arith.constant dense<0.000000e+00> : vector<1xf32>
    %28 = vector.multi_reduction <add>, %27, %cst_19 [1, 2] : vector<1x64x16xf32> to vector<1xf32>
    %29 = vector.shape_cast %28 : vector<1xf32> to vector<1x1x1xf32>
    %30 = vector.extract %29[0, 0, 0] : f32 from vector<1x1x1xf32>
    %cst_20 = arith.constant 4.000000e+00 : f32
    %31 = arith.divf %30, %cst_20 : f32
    %cst_21 = arith.constant dense<0.000000e+00> : vector<4x16xf32>
    %32 = tpu.matmul %3, %25, %cst_21 {dimension_numbers = #tpu.dot_dimension_numbers<[1], [0], [0], [1], [0, 0, 1, 1], [], []>} : vector<4x64xf32>, vector<64x16xf32>, vector<4x16xf32> -> vector<4x16xf32>
    %cst_22 = arith.constant dense<0.000000e+00> : vector<4x16xf32>
    %33 = tpu.matmul %3, %16, %cst_22 {dimension_numbers = #tpu.dot_dimension_numbers<[1], [0], [0], [1], [0, 0, 1, 1], [], []>} : vector<4x64xf32>, vector<64x16xf32>, vector<4x16xf32> -> vector<4x16xf32>
    %34 = arith.mulf %32, %33 : vector<4x16xf32>
    %35 = vector.shape_cast %34 : vector<4x16xf32> to vector<1x4x16xf32>
    %cst_23 = arith.constant dense<0.000000e+00> : vector<1xf32>
    %36 = vector.multi_reduction <add>, %35, %cst_23 [1, 2] : vector<1x4x16xf32> to vector<1xf32>
    %37 = vector.shape_cast %36 : vector<1xf32> to vector<1x1x1xf32>
    %38 = vector.extract %37[0, 0, 0] : f32 from vector<1x1x1xf32>
    %cst_24 = arith.constant 1.000000e-03 : f32
    %39 = arith.mulf %cst_24, %38 : f32
    %40 = arith.addf %31, %39 : f32
    %cst_25 = arith.constant dense<0.000000e+00> : vector<64x16xf32>
    %41 = tpu.matmul %2, %32, %cst_25 {dimension_numbers = #tpu.dot_dimension_numbers<[1], [0], [0], [1], [0, 0, 1, 1], [], []>} : vector<64x4xf32>, vector<4x16xf32>, vector<64x16xf32> -> vector<64x16xf32>
    %42 = arith.mulf %8, %41 : vector<64x16xf32>
    %43 = arith.subf %42, %25 : vector<64x16xf32>
    %44 = arith.subf %43, %8 : vector<64x16xf32>
    %cst_26 = arith.constant 2.000000e+00 : f32
    %45 = vector.broadcast %cst_26 : f32 to vector<64x16xf32>
    %46 = arith.mulf %45, %44 : vector<64x16xf32>
    %47 = arith.mulf %46, %44 : vector<64x16xf32>
    %48 = arith.subf %47, %8 : vector<64x16xf32>
    %c476 = arith.constant 476 : index
    %c0_27 = arith.constant 0 : index
    %49 = vector.load %arg3[%c476, %c0_27] : memref<1148x128xf32, #tpu.memory_space<vmem>>, vector<8x8xf32>
    %cst_28 = arith.constant dense<0.000000e+00> : vector<64x8xf32>
    %50 = tpu.matmul %0, %49, %cst_28 {dimension_numbers = #tpu.dot_dimension_numbers<[1], [0], [0], [1], [0, 0, 1, 1], [], []>} : vector<64x8xf32>, vector<8x8xf32>, vector<64x8xf32> -> vector<64x8xf32>
    %cst_29 = arith.constant dense<0.000000e+00> : vector<64x64xf32>
    %51 = tpu.matmul %44, %7, %cst_29 {dimension_numbers = #tpu.dot_dimension_numbers<[1], [0], [0], [1], [0, 0, 1, 1], [], []>} : vector<64x16xf32>, vector<16x64xf32>, vector<64x64xf32> -> vector<64x64xf32>
    %52 = arith.mulf %51, %9 : vector<64x64xf32>
    %cst_30 = arith.constant dense<0.000000e+00> : vector<64x8xf32>
    %53 = tpu.matmul %52, %0, %cst_30 {dimension_numbers = #tpu.dot_dimension_numbers<[1], [0], [0], [1], [0, 0, 1, 1], [], []>} : vector<64x64xf32>, vector<64x8xf32>, vector<64x8xf32> -> vector<64x8xf32>
    %c484 = arith.constant 484 : index
    %c0_31 = arith.constant 0 : index
    %54 = vector.load %arg3[%c484, %c0_31] : memref<1148x128xf32, #tpu.memory_space<vmem>>, vector<8x8xf32>
    %cst_32 = arith.constant dense<0.000000e+00> : vector<64x8xf32>
    %55 = tpu.matmul %53, %54, %cst_32 {dimension_numbers = #tpu.dot_dimension_numbers<[1], [0], [0], [1], [0, 0, 1, 1], [], []>} : vector<64x8xf32>, vector<8x8xf32>, vector<64x8xf32> -> vector<64x8xf32>
    %56 = arith.addf %50, %55 : vector<64x8xf32>
    %cst_33 = arith.constant dense<0.000000e+00> : vector<64x64xf32>
    %57 = tpu.matmul %48, %7, %cst_33 {dimension_numbers = #tpu.dot_dimension_numbers<[1], [0], [0], [1], [0, 0, 1, 1], [], []>} : vector<64x16xf32>, vector<16x64xf32>, vector<64x64xf32> -> vector<64x64xf32>
    %58 = arith.mulf %57, %9 : vector<64x64xf32>
    %cst_34 = arith.constant dense<0.000000e+00> : vector<64x8xf32>
    %59 = tpu.matmul %58, %0, %cst_34 {dimension_numbers = #tpu.dot_dimension_numbers<[1], [0], [0], [1], [0, 0, 1, 1], [], []>} : vector<64x64xf32>, vector<64x8xf32>, vector<64x8xf32> -> vector<64x8xf32>
    %c492 = arith.constant 492 : index
    %c0_35 = arith.constant 0 : index
    %60 = vector.load %arg3[%c492, %c0_35] : memref<1148x128xf32, #tpu.memory_space<vmem>>, vector<8x8xf32>
    %cst_36 = arith.constant dense<0.000000e+00> : vector<64x8xf32>
    %61 = tpu.matmul %59, %60, %cst_36 {dimension_numbers = #tpu.dot_dimension_numbers<[1], [0], [0], [1], [0, 0, 1, 1], [], []>} : vector<64x8xf32>, vector<8x8xf32>, vector<64x8xf32> -> vector<64x8xf32>
    %62 = arith.addf %56, %61 : vector<64x8xf32>
    %cst_37 = arith.constant 0.000000e+00 : f32
    %63 = vector.broadcast %cst_37 : f32 to vector<64x8xf32>
    %64 = arith.maximumf %62, %63 : vector<64x8xf32>
    %c0_38 = arith.constant 0 : index
    %c0_39 = arith.constant 0 : index
    %65 = vector.load %arg5[%c0_38, %c0_39] : memref<64x8xf32, #tpu.memory_space<vmem>>, vector<64x8xf32>
    tpu.vector_store %arg5[%c0_38, %c0_39], %64 {strides = array<i32>} : memref<64x8xf32, #tpu.memory_space<vmem>>, vector<64x8xf32>,
    %c0_40 = arith.constant 0 : index
    %c0_41 = arith.constant 0 : index
    %66 = memref.load %arg0[%c0_40, %c0_41] : memref<8x12xi32, #tpu.memory_space<smem>>
    %c0_i32 = arith.constant 0 : i32
    %67 = arith.addi %c0_i32, %66 : i32
    %68 = arith.index_cast %67 : i32 to index
    %c0_42 = arith.constant 0 : index
    %69 = vector.load %arg5[%68, %c0_42] : memref<64x8xf32, #tpu.memory_space<vmem>>, vector<1x8xf32>
    %c0_43 = arith.constant 0 : index
    %c0_44 = arith.constant 0 : index
    %70 = vector.load %arg6[%c0_43, %c0_44] : memref<8x96xf32, #tpu.memory_space<vmem>>, vector<1x8xf32>
    tpu.vector_store %arg6[%c0_43, %c0_44], %69 {strides = array<i32>} : memref<8x96xf32, #tpu.memory_space<vmem>>, vector<1x8xf32>,
    %c0_45 = arith.constant 0 : index
    %c1 = arith.constant 1 : index
    %71 = memref.load %arg0[%c0_45, %c1] : memref<8x12xi32, #tpu.memory_space<smem>>
    %c0_i32_46 = arith.constant 0 : i32
    %72 = arith.addi %c0_i32_46, %71 : i32
    %73 = arith.index_cast %72 : i32 to index
    %c0_47 = arith.constant 0 : index
    %74 = vector.load %arg5[%73, %c0_47] : memref<64x8xf32, #tpu.memory_space<vmem>>, vector<1x8xf32>
    %c0_48 = arith.constant 0 : index
    %c8 = arith.constant 8 : index
    %75 = vector.load %arg6[%c0_48, %c8] : memref<8x96xf32, #tpu.memory_space<vmem>>, vector<1x8xf32>
    tpu.vector_store %arg6[%c0_48, %c8], %74 {strides = array<i32>} : memref<8x96xf32, #tpu.memory_space<vmem>>, vector<1x8xf32>,
    %c0_49 = arith.constant 0 : index
    %c2 = arith.constant 2 : index
    %76 = memref.load %arg0[%c0_49, %c2] : memref<8x12xi32, #tpu.memory_space<smem>>
    %c0_i32_50 = arith.constant 0 : i32
    %77 = arith.addi %c0_i32_50, %76 : i32
    %78 = arith.index_cast %77 : i32 to index
    %c0_51 = arith.constant 0 : index
    %79 = vector.load %arg5[%78, %c0_51] : memref<64x8xf32, #tpu.memory_space<vmem>>, vector<1x8xf32>
    %c0_52 = arith.constant 0 : index
    %c16 = arith.constant 16 : index
    %80 = vector.load %arg6[%c0_52, %c16] : memref<8x96xf32, #tpu.memory_space<vmem>>, vector<1x8xf32>
    tpu.vector_store %arg6[%c0_52, %c16], %79 {strides = array<i32>} : memref<8x96xf32, #tpu.memory_space<vmem>>, vector<1x8xf32>,
    %c0_53 = arith.constant 0 : index
    %c3 = arith.constant 3 : index
    %81 = memref.load %arg0[%c0_53, %c3] : memref<8x12xi32, #tpu.memory_space<smem>>
    %c0_i32_54 = arith.constant 0 : i32
    %82 = arith.addi %c0_i32_54, %81 : i32
    %83 = arith.index_cast %82 : i32 to index
    %c0_55 = arith.constant 0 : index
    %84 = vector.load %arg5[%83, %c0_55] : memref<64x8xf32, #tpu.memory_space<vmem>>, vector<1x8xf32>
    %c0_56 = arith.constant 0 : index
    %c24 = arith.constant 24 : index
    %85 = vector.load %arg6[%c0_56, %c24] : memref<8x96xf32, #tpu.memory_space<vmem>>, vector<1x8xf32>
    tpu.vector_store %arg6[%c0_56, %c24], %84 {strides = array<i32>} : memref<8x96xf32, #tpu.memory_space<vmem>>, vector<1x8xf32>,
    %c0_57 = arith.constant 0 : index
    %c4 = arith.constant 4 : index
    %86 = memref.load %arg0[%c0_57, %c4] : memref<8x12xi32, #tpu.memory_space<smem>>
    %c0_i32_58 = arith.constant 0 : i32
    %87 = arith.addi %c0_i32_58, %86 : i32
    %88 = arith.index_cast %87 : i32 to index
    %c0_59 = arith.constant 0 : index
    %89 = vector.load %arg5[%88, %c0_59] : memref<64x8xf32, #tpu.memory_space<vmem>>, vector<1x8xf32>
    %c0_60 = arith.constant 0 : index
    %c32 = arith.constant 32 : index
    %90 = vector.load %arg6[%c0_60, %c32] : memref<8x96xf32, #tpu.memory_space<vmem>>, vector<1x8xf32>
    tpu.vector_store %arg6[%c0_60, %c32], %89 {strides = array<i32>} : memref<8x96xf32, #tpu.memory_space<vmem>>, vector<1x8xf32>,
    %c0_61 = arith.constant 0 : index
    %c5 = arith.constant 5 : index
    %91 = memref.load %arg0[%c0_61, %c5] : memref<8x12xi32, #tpu.memory_space<smem>>
    %c0_i32_62 = arith.constant 0 : i32
    %92 = arith.addi %c0_i32_62, %91 : i32
    %93 = arith.index_cast %92 : i32 to index
    %c0_63 = arith.constant 0 : index
    %94 = vector.load %arg5[%93, %c0_63] : memref<64x8xf32, #tpu.memory_space<vmem>>, vector<1x8xf32>
    %c0_64 = arith.constant 0 : index
    %c40 = arith.constant 40 : index
    %95 = vector.load %arg6[%c0_64, %c40] : memref<8x96xf32, #tpu.memory_space<vmem>>, vector<1x8xf32>
    tpu.vector_store %arg6[%c0_64, %c40], %94 {strides = array<i32>} : memref<8x96xf32, #tpu.memory_space<vmem>>, vector<1x8xf32>,
    %c0_65 = arith.constant 0 : index
    %c6 = arith.constant 6 : index
    %96 = memref.load %arg0[%c0_65, %c6] : memref<8x12xi32, #tpu.memory_space<smem>>
    %c0_i32_66 = arith.constant 0 : i32
    %97 = arith.addi %c0_i32_66, %96 : i32
    %98 = arith.index_cast %97 : i32 to index
    %c0_67 = arith.constant 0 : index
    %99 = vector.load %arg5[%98, %c0_67] : memref<64x8xf32, #tpu.memory_space<vmem>>, vector<1x8xf32>
    %c0_68 = arith.constant 0 : index
    %c48 = arith.constant 48 : index
    %100 = vector.load %arg6[%c0_68, %c48] : memref<8x96xf32, #tpu.memory_space<vmem>>, vector<1x8xf32>
    tpu.vector_store %arg6[%c0_68, %c48], %99 {strides = array<i32>} : memref<8x96xf32, #tpu.memory_space<vmem>>, vector<1x8xf32>,
    %c0_69 = arith.constant 0 : index
    %c7 = arith.constant 7 : index
    %101 = memref.load %arg0[%c0_69, %c7] : memref<8x12xi32, #tpu.memory_space<smem>>
    %c0_i32_70 = arith.constant 0 : i32
    %102 = arith.addi %c0_i32_70, %101 : i32
    %103 = arith.index_cast %102 : i32 to index
    %c0_71 = arith.constant 0 : index
    %104 = vector.load %arg5[%103, %c0_71] : memref<64x8xf32, #tpu.memory_space<vmem>>, vector<1x8xf32>
    %c0_72 = arith.constant 0 : index
    %c56 = arith.constant 56 : index
    %105 = vector.load %arg6[%c0_72, %c56] : memref<8x96xf32, #tpu.memory_space<vmem>>, vector<1x8xf32>
    tpu.vector_store %arg6[%c0_72, %c56], %104 {strides = array<i32>} : memref<8x96xf32, #tpu.memory_space<vmem>>, vector<1x8xf32>,
    %c0_73 = arith.constant 0 : index
    %c8_74 = arith.constant 8 : index
    %106 = memref.load %arg0[%c0_73, %c8_74] : memref<8x12xi32, #tpu.memory_space<smem>>
    %c0_i32_75 = arith.constant 0 : i32
    %107 = arith.addi %c0_i32_75, %106 : i32
    %108 = arith.index_cast %107 : i32 to index
    %c0_76 = arith.constant 0 : index
    %109 = vector.load %arg5[%108, %c0_76] : memref<64x8xf32, #tpu.memory_space<vmem>>, vector<1x8xf32>
    %c0_77 = arith.constant 0 : index
    %c64_78 = arith.constant 64 : index
    %110 = vector.load %arg6[%c0_77, %c64_78] : memref<8x96xf32, #tpu.memory_space<vmem>>, vector<1x8xf32>
    tpu.vector_store %arg6[%c0_77, %c64_78], %109 {strides = array<i32>} : memref<8x96xf32, #tpu.memory_space<vmem>>, vector<1x8xf32>,
    %c0_79 = arith.constant 0 : index
    %c9 = arith.constant 9 : index
    %111 = memref.load %arg0[%c0_79, %c9] : memref<8x12xi32, #tpu.memory_space<smem>>
    %c0_i32_80 = arith.constant 0 : i32
    %112 = arith.addi %c0_i32_80, %111 : i32
    %113 = arith.index_cast %112 : i32 to index
    %c0_81 = arith.constant 0 : index
    %114 = vector.load %arg5[%113, %c0_81] : memref<64x8xf32, #tpu.memory_space<vmem>>, vector<1x8xf32>
    %c0_82 = arith.constant 0 : index
    %c72 = arith.constant 72 : index
    %115 = vector.load %arg6[%c0_82, %c72] : memref<8x96xf32, #tpu.memory_space<vmem>>, vector<1x8xf32>
    tpu.vector_store %arg6[%c0_82, %c72], %114 {strides = array<i32>} : memref<8x96xf32, #tpu.memory_space<vmem>>, vector<1x8xf32>,
    %c0_83 = arith.constant 0 : index
    %c10 = arith.constant 10 : index
    %116 = memref.load %arg0[%c0_83, %c10] : memref<8x12xi32, #tpu.memory_space<smem>>
    %c0_i32_84 = arith.constant 0 : i32
    %117 = arith.addi %c0_i32_84, %116 : i32
    %118 = arith.index_cast %117 : i32 to index
    %c0_85 = arith.constant 0 : index
    %119 = vector.load %arg5[%118, %c0_85] : memref<64x8xf32, #tpu.memory_space<vmem>>, vector<1x8xf32>
    %c0_86 = arith.constant 0 : index
    %c80 = arith.constant 80 : index
    %120 = vector.load %arg6[%c0_86, %c80] : memref<8x96xf32, #tpu.memory_space<vmem>>, vector<1x8xf32>
    tpu.vector_store %arg6[%c0_86, %c80], %119 {strides = array<i32>} : memref<8x96xf32, #tpu.memory_space<vmem>>, vector<1x8xf32>,
    %c0_87 = arith.constant 0 : index
    %c11 = arith.constant 11 : index
    %121 = memref.load %arg0[%c0_87, %c11] : memref<8x12xi32, #tpu.memory_space<smem>>
    %c0_i32_88 = arith.constant 0 : i32
    %122 = arith.addi %c0_i32_88, %121 : i32
    %123 = arith.index_cast %122 : i32 to index
    %c0_89 = arith.constant 0 : index
    %124 = vector.load %arg5[%123, %c0_89] : memref<64x8xf32, #tpu.memory_space<vmem>>, vector<1x8xf32>
    %c0_90 = arith.constant 0 : index
    %c88 = arith.constant 88 : index
    %125 = vector.load %arg6[%c0_90, %c88] : memref<8x96xf32, #tpu.memory_space<vmem>>, vector<1x8xf32>
    tpu.vector_store %arg6[%c0_90, %c88], %124 {strides = array<i32>} : memref<8x96xf32, #tpu.memory_space<vmem>>, vector<1x8xf32>,
    %c1_91 = arith.constant 1 : index
    %c0_92 = arith.constant 0 : index
    %126 = memref.load %arg0[%c1_91, %c0_92] : memref<8x12xi32, #tpu.memory_space<smem>>
    %c16_i32 = arith.constant 16 : i32
    %127 = arith.addi %c16_i32, %126 : i32
    %128 = arith.index_cast %127 : i32 to index
    %c0_93 = arith.constant 0 : index
    %129 = vector.load %arg5[%128, %c0_93] : memref<64x8xf32, #tpu.memory_space<vmem>>, vector<1x8xf32>
    %c1_94 = arith.constant 1 : index
    %c0_95 = arith.constant 0 : index
    %130 = vector.load %arg6[%c1_94, %c0_95] : memref<8x96xf32, #tpu.memory_space<vmem>>, vector<1x8xf32>
    tpu.vector_store %arg6[%c1_94, %c0_95], %129 {strides = array<i32>} : memref<8x96xf32, #tpu.memory_space<vmem>>, vector<1x8xf32>,
    %c1_96 = arith.constant 1 : index
    %c1_97 = arith.constant 1 : index
    %131 = memref.load %arg0[%c1_96, %c1_97] : memref<8x12xi32, #tpu.memory_space<smem>>
    %c16_i32_98 = arith.constant 16 : i32
    %132 = arith.addi %c16_i32_98, %131 : i32
    %133 = arith.index_cast %132 : i32 to index
    %c0_99 = arith.constant 0 : index
    %134 = vector.load %arg5[%133, %c0_99] : memref<64x8xf32, #tpu.memory_space<vmem>>, vector<1x8xf32>
    %c1_100 = arith.constant 1 : index
    %c8_101 = arith.constant 8 : index
    %135 = vector.load %arg6[%c1_100, %c8_101] : memref<8x96xf32, #tpu.memory_space<vmem>>, vector<1x8xf32>
    tpu.vector_store %arg6[%c1_100, %c8_101], %134 {strides = array<i32>} : memref<8x96xf32, #tpu.memory_space<vmem>>, vector<1x8xf32>,
    %c1_102 = arith.constant 1 : index
    %c2_103 = arith.constant 2 : index
    %136 = memref.load %arg0[%c1_102, %c2_103] : memref<8x12xi32, #tpu.memory_space<smem>>
    %c16_i32_104 = arith.constant 16 : i32
    %137 = arith.addi %c16_i32_104, %136 : i32
    %138 = arith.index_cast %137 : i32 to index
    %c0_105 = arith.constant 0 : index
    %139 = vector.load %arg5[%138, %c0_105] : memref<64x8xf32, #tpu.memory_space<vmem>>, vector<1x8xf32>
    %c1_106 = arith.constant 1 : index
    %c16_107 = arith.constant 16 : index
    %140 = vector.load %arg6[%c1_106, %c16_107] : memref<8x96xf32, #tpu.memory_space<vmem>>, vector<1x8xf32>
    tpu.vector_store %arg6[%c1_106, %c16_107], %139 {strides = array<i32>} : memref<8x96xf32, #tpu.memory_space<vmem>>, vector<1x8xf32>,
    %c1_108 = arith.constant 1 : index
    %c3_109 = arith.constant 3 : index
    %141 = memref.load %arg0[%c1_108, %c3_109] : memref<8x12xi32, #tpu.memory_space<smem>>
    %c16_i32_110 = arith.constant 16 : i32
    %142 = arith.addi %c16_i32_110, %141 : i32
    %143 = arith.index_cast %142 : i32 to index
    %c0_111 = arith.constant 0 : index
    %144 = vector.load %arg5[%143, %c0_111] : memref<64x8xf32, #tpu.memory_space<vmem>>, vector<1x8xf32>
    %c1_112 = arith.constant 1 : index
    %c24_113 = arith.constant 24 : index
    %145 = vector.load %arg6[%c1_112, %c24_113] : memref<8x96xf32, #tpu.memory_space<vmem>>, vector<1x8xf32>
    tpu.vector_store %arg6[%c1_112, %c24_113], %144 {strides = array<i32>} : memref<8x96xf32, #tpu.memory_space<vmem>>, vector<1x8xf32>,
    %c1_114 = arith.constant 1 : index
    %c4_115 = arith.constant 4 : index
    %146 = memref.load %arg0[%c1_114, %c4_115] : memref<8x12xi32, #tpu.memory_space<smem>>
    %c16_i32_116 = arith.constant 16 : i32
    %147 = arith.addi %c16_i32_116, %146 : i32
    %148 = arith.index_cast %147 : i32 to index
    %c0_117 = arith.constant 0 : index
    %149 = vector.load %arg5[%148, %c0_117] : memref<64x8xf32, #tpu.memory_space<vmem>>, vector<1x8xf32>
    %c1_118 = arith.constant 1 : index
    %c32_119 = arith.constant 32 : index
    %150 = vector.load %arg6[%c1_118, %c32_119] : memref<8x96xf32, #tpu.memory_space<vmem>>, vector<1x8xf32>
    tpu.vector_store %arg6[%c1_118, %c32_119], %149 {strides = array<i32>} : memref<8x96xf32, #tpu.memory_space<vmem>>, vector<1x8xf32>,
    %c1_120 = arith.constant 1 : index
    %c5_121 = arith.constant 5 : index
    %151 = memref.load %arg0[%c1_120, %c5_121] : memref<8x12xi32, #tpu.memory_space<smem>>
    %c16_i32_122 = arith.constant 16 : i32
    %152 = arith.addi %c16_i32_122, %151 : i32
    %153 = arith.index_cast %152 : i32 to index
    %c0_123 = arith.constant 0 : index
    %154 = vector.load %arg5[%153, %c0_123] : memref<64x8xf32, #tpu.memory_space<vmem>>, vector<1x8xf32>
    %c1_124 = arith.constant 1 : index
    %c40_125 = arith.constant 40 : index
    %155 = vector.load %arg6[%c1_124, %c40_125] : memref<8x96xf32, #tpu.memory_space<vmem>>, vector<1x8xf32>
    tpu.vector_store %arg6[%c1_124, %c40_125], %154 {strides = array<i32>} : memref<8x96xf32, #tpu.memory_space<vmem>>, vector<1x8xf32>,
    %c1_126 = arith.constant 1 : index
    %c6_127 = arith.constant 6 : index
    %156 = memref.load %arg0[%c1_126, %c6_127] : memref<8x12xi32, #tpu.memory_space<smem>>
    %c16_i32_128 = arith.constant 16 : i32
    %157 = arith.addi %c16_i32_128, %156 : i32
    %158 = arith.index_cast %157 : i32 to index
    %c0_129 = arith.constant 0 : index
    %159 = vector.load %arg5[%158, %c0_129] : memref<64x8xf32, #tpu.memory_space<vmem>>, vector<1x8xf32>
    %c1_130 = arith.constant 1 : index
    %c48_131 = arith.constant 48 : index
    %160 = vector.load %arg6[%c1_130, %c48_131] : memref<8x96xf32, #tpu.memory_space<vmem>>, vector<1x8xf32>
    tpu.vector_store %arg6[%c1_130, %c48_131], %159 {strides = array<i32>} : memref<8x96xf32, #tpu.memory_space<vmem>>, vector<1x8xf32>,
    %c1_132 = arith.constant 1 : index
    %c7_133 = arith.constant 7 : index
    %161 = memref.load %arg0[%c1_132, %c7_133] : memref<8x12xi32, #tpu.memory_space<smem>>
    %c16_i32_134 = arith.constant 16 : i32
    %162 = arith.addi %c16_i32_134, %161 : i32
    %163 = arith.index_cast %162 : i32 to index
    %c0_135 = arith.constant 0 : index
    %164 = vector.load %arg5[%163, %c0_135] : memref<64x8xf32, #tpu.memory_space<vmem>>, vector<1x8xf32>
    %c1_136 = arith.constant 1 : index
    %c56_137 = arith.constant 56 : index
    %165 = vector.load %arg6[%c1_136, %c56_137] : memref<8x96xf32, #tpu.memory_space<vmem>>, vector<1x8xf32>
    tpu.vector_store %arg6[%c1_136, %c56_137], %164 {strides = array<i32>} : memref<8x96xf32, #tpu.memory_space<vmem>>, vector<1x8xf32>,
    %c1_138 = arith.constant 1 : index
    %c8_139 = arith.constant 8 : index
    %166 = memref.load %arg0[%c1_138, %c8_139] : memref<8x12xi32, #tpu.memory_space<smem>>
    %c16_i32_140 = arith.constant 16 : i32
    %167 = arith.addi %c16_i32_140, %166 : i32
    %168 = arith.index_cast %167 : i32 to index
    %c0_141 = arith.constant 0 : index
    %169 = vector.load %arg5[%168, %c0_141] : memref<64x8xf32, #tpu.memory_space<vmem>>, vector<1x8xf32>
    %c1_142 = arith.constant 1 : index
    %c64_143 = arith.constant 64 : index
    %170 = vector.load %arg6[%c1_142, %c64_143] : memref<8x96xf32, #tpu.memory_space<vmem>>, vector<1x8xf32>
    tpu.vector_store %arg6[%c1_142, %c64_143], %169 {strides = array<i32>} : memref<8x96xf32, #tpu.memory_space<vmem>>, vector<1x8xf32>,
    %c1_144 = arith.constant 1 : index
    %c9_145 = arith.constant 9 : index
    %171 = memref.load %arg0[%c1_144, %c9_145] : memref<8x12xi32, #tpu.memory_space<smem>>
    %c16_i32_146 = arith.constant 16 : i32
    %172 = arith.addi %c16_i32_146, %171 : i32
    %173 = arith.index_cast %172 : i32 to index
    %c0_147 = arith.constant 0 : index
    %174 = vector.load %arg5[%173, %c0_147] : memref<64x8xf32, #tpu.memory_space<vmem>>, vector<1x8xf32>
    %c1_148 = arith.constant 1 : index
    %c72_149 = arith.constant 72 : index
    %175 = vector.load %arg6[%c1_148, %c72_149] : memref<8x96xf32, #tpu.memory_space<vmem>>, vector<1x8xf32>
    tpu.vector_store %arg6[%c1_148, %c72_149], %174 {strides = array<i32>} : memref<8x96xf32, #tpu.memory_space<vmem>>, vector<1x8xf32>,
    %c1_150 = arith.constant 1 : index
    %c10_151 = arith.constant 10 : index
    %176 = memref.load %arg0[%c1_150, %c10_151] : memref<8x12xi32, #tpu.memory_space<smem>>
    %c16_i32_152 = arith.constant 16 : i32
    %177 = arith.addi %c16_i32_152, %176 : i32
    %178 = arith.index_cast %177 : i32 to index
    %c0_153 = arith.constant 0 : index
    %179 = vector.load %arg5[%178, %c0_153] : memref<64x8xf32, #tpu.memory_space<vmem>>, vector<1x8xf32>
    %c1_154 = arith.constant 1 : index
    %c80_155 = arith.constant 80 : index
    %180 = vector.load %arg6[%c1_154, %c80_155] : memref<8x96xf32, #tpu.memory_space<vmem>>, vector<1x8xf32>
    tpu.vector_store %arg6[%c1_154, %c80_155], %179 {strides = array<i32>} : memref<8x96xf32, #tpu.memory_space<vmem>>, vector<1x8xf32>,
    %c1_156 = arith.constant 1 : index
    %c11_157 = arith.constant 11 : index
    %181 = memref.load %arg0[%c1_156, %c11_157] : memref<8x12xi32, #tpu.memory_space<smem>>
    %c16_i32_158 = arith.constant 16 : i32
    %182 = arith.addi %c16_i32_158, %181 : i32
    %183 = arith.index_cast %182 : i32 to index
    %c0_159 = arith.constant 0 : index
    %184 = vector.load %arg5[%183, %c0_159] : memref<64x8xf32, #tpu.memory_space<vmem>>, vector<1x8xf32>
    %c1_160 = arith.constant 1 : index
    %c88_161 = arith.constant 88 : index
    %185 = vector.load %arg6[%c1_160, %c88_161] : memref<8x96xf32, #tpu.memory_space<vmem>>, vector<1x8xf32>
    tpu.vector_store %arg6[%c1_160, %c88_161], %184 {strides = array<i32>} : memref<8x96xf32, #tpu.memory_space<vmem>>, vector<1x8xf32>,
    %c2_162 = arith.constant 2 : index
    %c0_163 = arith.constant 0 : index
    %186 = memref.load %arg0[%c2_162, %c0_163] : memref<8x12xi32, #tpu.memory_space<smem>>
    %c32_i32 = arith.constant 32 : i32
    %187 = arith.addi %c32_i32, %186 : i32
    %188 = arith.index_cast %187 : i32 to index
    %c0_164 = arith.constant 0 : index
    %189 = vector.load %arg5[%188, %c0_164] : memref<64x8xf32, #tpu.memory_space<vmem>>, vector<1x8xf32>
    %c2_165 = arith.constant 2 : index
    %c0_166 = arith.constant 0 : index
    %190 = vector.load %arg6[%c2_165, %c0_166] : memref<8x96xf32, #tpu.memory_space<vmem>>, vector<1x8xf32>
    tpu.vector_store %arg6[%c2_165, %c0_166], %189 {strides = array<i32>} : memref<8x96xf32, #tpu.memory_space<vmem>>, vector<1x8xf32>,
    %c2_167 = arith.constant 2 : index
    %c1_168 = arith.constant 1 : index
    %191 = memref.load %arg0[%c2_167, %c1_168] : memref<8x12xi32, #tpu.memory_space<smem>>
    %c32_i32_169 = arith.constant 32 : i32
    %192 = arith.addi %c32_i32_169, %191 : i32
    %193 = arith.index_cast %192 : i32 to index
    %c0_170 = arith.constant 0 : index
    %194 = vector.load %arg5[%193, %c0_170] : memref<64x8xf32, #tpu.memory_space<vmem>>, vector<1x8xf32>
    %c2_171 = arith.constant 2 : index
    %c8_172 = arith.constant 8 : index
    %195 = vector.load %arg6[%c2_171, %c8_172] : memref<8x96xf32, #tpu.memory_space<vmem>>, vector<1x8xf32>
    tpu.vector_store %arg6[%c2_171, %c8_172], %194 {strides = array<i32>} : memref<8x96xf32, #tpu.memory_space<vmem>>, vector<1x8xf32>,
    %c2_173 = arith.constant 2 : index
    %c2_174 = arith.constant 2 : index
    %196 = memref.load %arg0[%c2_173, %c2_174] : memref<8x12xi32, #tpu.memory_space<smem>>
    %c32_i32_175 = arith.constant 32 : i32
    %197 = arith.addi %c32_i32_175, %196 : i32
    %198 = arith.index_cast %197 : i32 to index
    %c0_176 = arith.constant 0 : index
    %199 = vector.load %arg5[%198, %c0_176] : memref<64x8xf32, #tpu.memory_space<vmem>>, vector<1x8xf32>
    %c2_177 = arith.constant 2 : index
    %c16_178 = arith.constant 16 : index
    %200 = vector.load %arg6[%c2_177, %c16_178] : memref<8x96xf32, #tpu.memory_space<vmem>>, vector<1x8xf32>
    tpu.vector_store %arg6[%c2_177, %c16_178], %199 {strides = array<i32>} : memref<8x96xf32, #tpu.memory_space<vmem>>, vector<1x8xf32>,
    %c2_179 = arith.constant 2 : index
    %c3_180 = arith.constant 3 : index
    %201 = memref.load %arg0[%c2_179, %c3_180] : memref<8x12xi32, #tpu.memory_space<smem>>
    %c32_i32_181 = arith.constant 32 : i32
    %202 = arith.addi %c32_i32_181, %201 : i32
    %203 = arith.index_cast %202 : i32 to index
    %c0_182 = arith.constant 0 : index
    %204 = vector.load %arg5[%203, %c0_182] : memref<64x8xf32, #tpu.memory_space<vmem>>, vector<1x8xf32>
    %c2_183 = arith.constant 2 : index
    %c24_184 = arith.constant 24 : index
    %205 = vector.load %arg6[%c2_183, %c24_184] : memref<8x96xf32, #tpu.memory_space<vmem>>, vector<1x8xf32>
    tpu.vector_store %arg6[%c2_183, %c24_184], %204 {strides = array<i32>} : memref<8x96xf32, #tpu.memory_space<vmem>>, vector<1x8xf32>,
    %c2_185 = arith.constant 2 : index
    %c4_186 = arith.constant 4 : index
    %206 = memref.load %arg0[%c2_185, %c4_186] : memref<8x12xi32, #tpu.memory_space<smem>>
    %c32_i32_187 = arith.constant 32 : i32
    %207 = arith.addi %c32_i32_187, %206 : i32
    %208 = arith.index_cast %207 : i32 to index
    %c0_188 = arith.constant 0 : index
    %209 = vector.load %arg5[%208, %c0_188] : memref<64x8xf32, #tpu.memory_space<vmem>>, vector<1x8xf32>
    %c2_189 = arith.constant 2 : index
    %c32_190 = arith.constant 32 : index
    %210 = vector.load %arg6[%c2_189, %c32_190] : memref<8x96xf32, #tpu.memory_space<vmem>>, vector<1x8xf32>
    tpu.vector_store %arg6[%c2_189, %c32_190], %209 {strides = array<i32>} : memref<8x96xf32, #tpu.memory_space<vmem>>, vector<1x8xf32>,
    %c2_191 = arith.constant 2 : index
    %c5_192 = arith.constant 5 : index
    %211 = memref.load %arg0[%c2_191, %c5_192] : memref<8x12xi32, #tpu.memory_space<smem>>
    %c32_i32_193 = arith.constant 32 : i32
    %212 = arith.addi %c32_i32_193, %211 : i32
    %213 = arith.index_cast %212 : i32 to index
    %c0_194 = arith.constant 0 : index
    %214 = vector.load %arg5[%213, %c0_194] : memref<64x8xf32, #tpu.memory_space<vmem>>, vector<1x8xf32>
    %c2_195 = arith.constant 2 : index
    %c40_196 = arith.constant 40 : index
    %215 = vector.load %arg6[%c2_195, %c40_196] : memref<8x96xf32, #tpu.memory_space<vmem>>, vector<1x8xf32>
    tpu.vector_store %arg6[%c2_195, %c40_196], %214 {strides = array<i32>} : memref<8x96xf32, #tpu.memory_space<vmem>>, vector<1x8xf32>,
    %c2_197 = arith.constant 2 : index
    %c6_198 = arith.constant 6 : index
    %216 = memref.load %arg0[%c2_197, %c6_198] : memref<8x12xi32, #tpu.memory_space<smem>>
    %c32_i32_199 = arith.constant 32 : i32
    %217 = arith.addi %c32_i32_199, %216 : i32
    %218 = arith.index_cast %217 : i32 to index
    %c0_200 = arith.constant 0 : index
    %219 = vector.load %arg5[%218, %c0_200] : memref<64x8xf32, #tpu.memory_space<vmem>>, vector<1x8xf32>
    %c2_201 = arith.constant 2 : index
    %c48_202 = arith.constant 48 : index
    %220 = vector.load %arg6[%c2_201, %c48_202] : memref<8x96xf32, #tpu.memory_space<vmem>>, vector<1x8xf32>
    tpu.vector_store %arg6[%c2_201, %c48_202], %219 {strides = array<i32>} : memref<8x96xf32, #tpu.memory_space<vmem>>, vector<1x8xf32>,
    %c2_203 = arith.constant 2 : index
    %c7_204 = arith.constant 7 : index
    %221 = memref.load %arg0[%c2_203, %c7_204] : memref<8x12xi32, #tpu.memory_space<smem>>
    %c32_i32_205 = arith.constant 32 : i32
    %222 = arith.addi %c32_i32_205, %221 : i32
    %223 = arith.index_cast %222 : i32 to index
    %c0_206 = arith.constant 0 : index
    %224 = vector.load %arg5[%223, %c0_206] : memref<64x8xf32, #tpu.memory_space<vmem>>, vector<1x8xf32>
    %c2_207 = arith.constant 2 : index
    %c56_208 = arith.constant 56 : index
    %225 = vector.load %arg6[%c2_207, %c56_208] : memref<8x96xf32, #tpu.memory_space<vmem>>, vector<1x8xf32>
    tpu.vector_store %arg6[%c2_207, %c56_208], %224 {strides = array<i32>} : memref<8x96xf32, #tpu.memory_space<vmem>>, vector<1x8xf32>,
    %c2_209 = arith.constant 2 : index
    %c8_210 = arith.constant 8 : index
    %226 = memref.load %arg0[%c2_209, %c8_210] : memref<8x12xi32, #tpu.memory_space<smem>>
    %c32_i32_211 = arith.constant 32 : i32
    %227 = arith.addi %c32_i32_211, %226 : i32
    %228 = arith.index_cast %227 : i32 to index
    %c0_212 = arith.constant 0 : index
    %229 = vector.load %arg5[%228, %c0_212] : memref<64x8xf32, #tpu.memory_space<vmem>>, vector<1x8xf32>
    %c2_213 = arith.constant 2 : index
    %c64_214 = arith.constant 64 : index
    %230 = vector.load %arg6[%c2_213, %c64_214] : memref<8x96xf32, #tpu.memory_space<vmem>>, vector<1x8xf32>
    tpu.vector_store %arg6[%c2_213, %c64_214], %229 {strides = array<i32>} : memref<8x96xf32, #tpu.memory_space<vmem>>, vector<1x8xf32>,
    %c2_215 = arith.constant 2 : index
    %c9_216 = arith.constant 9 : index
    %231 = memref.load %arg0[%c2_215, %c9_216] : memref<8x12xi32, #tpu.memory_space<smem>>
    %c32_i32_217 = arith.constant 32 : i32
    %232 = arith.addi %c32_i32_217, %231 : i32
    %233 = arith.index_cast %232 : i32 to index
    %c0_218 = arith.constant 0 : index
    %234 = vector.load %arg5[%233, %c0_218] : memref<64x8xf32, #tpu.memory_space<vmem>>, vector<1x8xf32>
    %c2_219 = arith.constant 2 : index
    %c72_220 = arith.constant 72 : index
    %235 = vector.load %arg6[%c2_219, %c72_220] : memref<8x96xf32, #tpu.memory_space<vmem>>, vector<1x8xf32>
    tpu.vector_store %arg6[%c2_219, %c72_220], %234 {strides = array<i32>} : memref<8x96xf32, #tpu.memory_space<vmem>>, vector<1x8xf32>,
    %c2_221 = arith.constant 2 : index
    %c10_222 = arith.constant 10 : index
    %236 = memref.load %arg0[%c2_221, %c10_222] : memref<8x12xi32, #tpu.memory_space<smem>>
    %c32_i32_223 = arith.constant 32 : i32
    %237 = arith.addi %c32_i32_223, %236 : i32
    %238 = arith.index_cast %237 : i32 to index
    %c0_224 = arith.constant 0 : index
    %239 = vector.load %arg5[%238, %c0_224] : memref<64x8xf32, #tpu.memory_space<vmem>>, vector<1x8xf32>
    %c2_225 = arith.constant 2 : index
    %c80_226 = arith.constant 80 : index
    %240 = vector.load %arg6[%c2_225, %c80_226] : memref<8x96xf32, #tpu.memory_space<vmem>>, vector<1x8xf32>
    tpu.vector_store %arg6[%c2_225, %c80_226], %239 {strides = array<i32>} : memref<8x96xf32, #tpu.memory_space<vmem>>, vector<1x8xf32>,
    %c2_227 = arith.constant 2 : index
    %c11_228 = arith.constant 11 : index
    %241 = memref.load %arg0[%c2_227, %c11_228] : memref<8x12xi32, #tpu.memory_space<smem>>
    %c32_i32_229 = arith.constant 32 : i32
    %242 = arith.addi %c32_i32_229, %241 : i32
    %243 = arith.index_cast %242 : i32 to index
    %c0_230 = arith.constant 0 : index
    %244 = vector.load %arg5[%243, %c0_230] : memref<64x8xf32, #tpu.memory_space<vmem>>, vector<1x8xf32>
    %c2_231 = arith.constant 2 : index
    %c88_232 = arith.constant 88 : index
    %245 = vector.load %arg6[%c2_231, %c88_232] : memref<8x96xf32, #tpu.memory_space<vmem>>, vector<1x8xf32>
    tpu.vector_store %arg6[%c2_231, %c88_232], %244 {strides = array<i32>} : memref<8x96xf32, #tpu.memory_space<vmem>>, vector<1x8xf32>,
    %c3_233 = arith.constant 3 : index
    %c0_234 = arith.constant 0 : index
    %246 = memref.load %arg0[%c3_233, %c0_234] : memref<8x12xi32, #tpu.memory_space<smem>>
    %c48_i32 = arith.constant 48 : i32
    %247 = arith.addi %c48_i32, %246 : i32
    %248 = arith.index_cast %247 : i32 to index
    %c0_235 = arith.constant 0 : index
    %249 = vector.load %arg5[%248, %c0_235] : memref<64x8xf32, #tpu.memory_space<vmem>>, vector<1x8xf32>
    %c3_236 = arith.constant 3 : index
    %c0_237 = arith.constant 0 : index
    %250 = vector.load %arg6[%c3_236, %c0_237] : memref<8x96xf32, #tpu.memory_space<vmem>>, vector<1x8xf32>
    tpu.vector_store %arg6[%c3_236, %c0_237], %249 {strides = array<i32>} : memref<8x96xf32, #tpu.memory_space<vmem>>, vector<1x8xf32>,
    %c3_238 = arith.constant 3 : index
    %c1_239 = arith.constant 1 : index
    %251 = memref.load %arg0[%c3_238, %c1_239] : memref<8x12xi32, #tpu.memory_space<smem>>
    %c48_i32_240 = arith.constant 48 : i32
    %252 = arith.addi %c48_i32_240, %251 : i32
    %253 = arith.index_cast %252 : i32 to index
    %c0_241 = arith.constant 0 : index
    %254 = vector.load %arg5[%253, %c0_241] : memref<64x8xf32, #tpu.memory_space<vmem>>, vector<1x8xf32>
    %c3_242 = arith.constant 3 : index
    %c8_243 = arith.constant 8 : index
    %255 = vector.load %arg6[%c3_242, %c8_243] : memref<8x96xf32, #tpu.memory_space<vmem>>, vector<1x8xf32>
    tpu.vector_store %arg6[%c3_242, %c8_243], %254 {strides = array<i32>} : memref<8x96xf32, #tpu.memory_space<vmem>>, vector<1x8xf32>,
    %c3_244 = arith.constant 3 : index
    %c2_245 = arith.constant 2 : index
    %256 = memref.load %arg0[%c3_244, %c2_245] : memref<8x12xi32, #tpu.memory_space<smem>>
    %c48_i32_246 = arith.constant 48 : i32
    %257 = arith.addi %c48_i32_246, %256 : i32
    %258 = arith.index_cast %257 : i32 to index
    %c0_247 = arith.constant 0 : index
    %259 = vector.load %arg5[%258, %c0_247] : memref<64x8xf32, #tpu.memory_space<vmem>>, vector<1x8xf32>
    %c3_248 = arith.constant 3 : index
    %c16_249 = arith.constant 16 : index
    %260 = vector.load %arg6[%c3_248, %c16_249] : memref<8x96xf32, #tpu.memory_space<vmem>>, vector<1x8xf32>
    tpu.vector_store %arg6[%c3_248, %c16_249], %259 {strides = array<i32>} : memref<8x96xf32, #tpu.memory_space<vmem>>, vector<1x8xf32>,
    %c3_250 = arith.constant 3 : index
    %c3_251 = arith.constant 3 : index
    %261 = memref.load %arg0[%c3_250, %c3_251] : memref<8x12xi32, #tpu.memory_space<smem>>
    %c48_i32_252 = arith.constant 48 : i32
    %262 = arith.addi %c48_i32_252, %261 : i32
    %263 = arith.index_cast %262 : i32 to index
    %c0_253 = arith.constant 0 : index
    %264 = vector.load %arg5[%263, %c0_253] : memref<64x8xf32, #tpu.memory_space<vmem>>, vector<1x8xf32>
    %c3_254 = arith.constant 3 : index
    %c24_255 = arith.constant 24 : index
    %265 = vector.load %arg6[%c3_254, %c24_255] : memref<8x96xf32, #tpu.memory_space<vmem>>, vector<1x8xf32>
    tpu.vector_store %arg6[%c3_254, %c24_255], %264 {strides = array<i32>} : memref<8x96xf32, #tpu.memory_space<vmem>>, vector<1x8xf32>,
    %c3_256 = arith.constant 3 : index
    %c4_257 = arith.constant 4 : index
    %266 = memref.load %arg0[%c3_256, %c4_257] : memref<8x12xi32, #tpu.memory_space<smem>>
    %c48_i32_258 = arith.constant 48 : i32
    %267 = arith.addi %c48_i32_258, %266 : i32
    %268 = arith.index_cast %267 : i32 to index
    %c0_259 = arith.constant 0 : index
    %269 = vector.load %arg5[%268, %c0_259] : memref<64x8xf32, #tpu.memory_space<vmem>>, vector<1x8xf32>
    %c3_260 = arith.constant 3 : index
    %c32_261 = arith.constant 32 : index
    %270 = vector.load %arg6[%c3_260, %c32_261] : memref<8x96xf32, #tpu.memory_space<vmem>>, vector<1x8xf32>
    tpu.vector_store %arg6[%c3_260, %c32_261], %269 {strides = array<i32>} : memref<8x96xf32, #tpu.memory_space<vmem>>, vector<1x8xf32>,
    %c3_262 = arith.constant 3 : index
    %c5_263 = arith.constant 5 : index
    %271 = memref.load %arg0[%c3_262, %c5_263] : memref<8x12xi32, #tpu.memory_space<smem>>
    %c48_i32_264 = arith.constant 48 : i32
    %272 = arith.addi %c48_i32_264, %271 : i32
    %273 = arith.index_cast %272 : i32 to index
    %c0_265 = arith.constant 0 : index
    %274 = vector.load %arg5[%273, %c0_265] : memref<64x8xf32, #tpu.memory_space<vmem>>, vector<1x8xf32>
    %c3_266 = arith.constant 3 : index
    %c40_267 = arith.constant 40 : index
    %275 = vector.load %arg6[%c3_266, %c40_267] : memref<8x96xf32, #tpu.memory_space<vmem>>, vector<1x8xf32>
    tpu.vector_store %arg6[%c3_266, %c40_267], %274 {strides = array<i32>} : memref<8x96xf32, #tpu.memory_space<vmem>>, vector<1x8xf32>,
    %c3_268 = arith.constant 3 : index
    %c6_269 = arith.constant 6 : index
    %276 = memref.load %arg0[%c3_268, %c6_269] : memref<8x12xi32, #tpu.memory_space<smem>>
    %c48_i32_270 = arith.constant 48 : i32
    %277 = arith.addi %c48_i32_270, %276 : i32
    %278 = arith.index_cast %277 : i32 to index
    %c0_271 = arith.constant 0 : index
    %279 = vector.load %arg5[%278, %c0_271] : memref<64x8xf32, #tpu.memory_space<vmem>>, vector<1x8xf32>
    %c3_272 = arith.constant 3 : index
    %c48_273 = arith.constant 48 : index
    %280 = vector.load %arg6[%c3_272, %c48_273] : memref<8x96xf32, #tpu.memory_space<vmem>>, vector<1x8xf32>
    tpu.vector_store %arg6[%c3_272, %c48_273], %279 {strides = array<i32>} : memref<8x96xf32, #tpu.memory_space<vmem>>, vector<1x8xf32>,
    %c3_274 = arith.constant 3 : index
    %c7_275 = arith.constant 7 : index
    %281 = memref.load %arg0[%c3_274, %c7_275] : memref<8x12xi32, #tpu.memory_space<smem>>
    %c48_i32_276 = arith.constant 48 : i32
    %282 = arith.addi %c48_i32_276, %281 : i32
    %283 = arith.index_cast %282 : i32 to index
    %c0_277 = arith.constant 0 : index
    %284 = vector.load %arg5[%283, %c0_277] : memref<64x8xf32, #tpu.memory_space<vmem>>, vector<1x8xf32>
    %c3_278 = arith.constant 3 : index
    %c56_279 = arith.constant 56 : index
    %285 = vector.load %arg6[%c3_278, %c56_279] : memref<8x96xf32, #tpu.memory_space<vmem>>, vector<1x8xf32>
    tpu.vector_store %arg6[%c3_278, %c56_279], %284 {strides = array<i32>} : memref<8x96xf32, #tpu.memory_space<vmem>>, vector<1x8xf32>,
    %c3_280 = arith.constant 3 : index
    %c8_281 = arith.constant 8 : index
    %286 = memref.load %arg0[%c3_280, %c8_281] : memref<8x12xi32, #tpu.memory_space<smem>>
    %c48_i32_282 = arith.constant 48 : i32
    %287 = arith.addi %c48_i32_282, %286 : i32
    %288 = arith.index_cast %287 : i32 to index
    %c0_283 = arith.constant 0 : index
    %289 = vector.load %arg5[%288, %c0_283] : memref<64x8xf32, #tpu.memory_space<vmem>>, vector<1x8xf32>
    %c3_284 = arith.constant 3 : index
    %c64_285 = arith.constant 64 : index
    %290 = vector.load %arg6[%c3_284, %c64_285] : memref<8x96xf32, #tpu.memory_space<vmem>>, vector<1x8xf32>
    tpu.vector_store %arg6[%c3_284, %c64_285], %289 {strides = array<i32>} : memref<8x96xf32, #tpu.memory_space<vmem>>, vector<1x8xf32>,
    %c3_286 = arith.constant 3 : index
    %c9_287 = arith.constant 9 : index
    %291 = memref.load %arg0[%c3_286, %c9_287] : memref<8x12xi32, #tpu.memory_space<smem>>
    %c48_i32_288 = arith.constant 48 : i32
    %292 = arith.addi %c48_i32_288, %291 : i32
    %293 = arith.index_cast %292 : i32 to index
    %c0_289 = arith.constant 0 : index
    %294 = vector.load %arg5[%293, %c0_289] : memref<64x8xf32, #tpu.memory_space<vmem>>, vector<1x8xf32>
    %c3_290 = arith.constant 3 : index
    %c72_291 = arith.constant 72 : index
    %295 = vector.load %arg6[%c3_290, %c72_291] : memref<8x96xf32, #tpu.memory_space<vmem>>, vector<1x8xf32>
    tpu.vector_store %arg6[%c3_290, %c72_291], %294 {strides = array<i32>} : memref<8x96xf32, #tpu.memory_space<vmem>>, vector<1x8xf32>,
    %c3_292 = arith.constant 3 : index
    %c10_293 = arith.constant 10 : index
    %296 = memref.load %arg0[%c3_292, %c10_293] : memref<8x12xi32, #tpu.memory_space<smem>>
    %c48_i32_294 = arith.constant 48 : i32
    %297 = arith.addi %c48_i32_294, %296 : i32
    %298 = arith.index_cast %297 : i32 to index
    %c0_295 = arith.constant 0 : index
    %299 = vector.load %arg5[%298, %c0_295] : memref<64x8xf32, #tpu.memory_space<vmem>>, vector<1x8xf32>
    %c3_296 = arith.constant 3 : index
    %c80_297 = arith.constant 80 : index
    %300 = vector.load %arg6[%c3_296, %c80_297] : memref<8x96xf32, #tpu.memory_space<vmem>>, vector<1x8xf32>
    tpu.vector_store %arg6[%c3_296, %c80_297], %299 {strides = array<i32>} : memref<8x96xf32, #tpu.memory_space<vmem>>, vector<1x8xf32>,
    %c3_298 = arith.constant 3 : index
    %c11_299 = arith.constant 11 : index
    %301 = memref.load %arg0[%c3_298, %c11_299] : memref<8x12xi32, #tpu.memory_space<smem>>
    %c48_i32_300 = arith.constant 48 : i32
    %302 = arith.addi %c48_i32_300, %301 : i32
    %303 = arith.index_cast %302 : i32 to index
    %c0_301 = arith.constant 0 : index
    %304 = vector.load %arg5[%303, %c0_301] : memref<64x8xf32, #tpu.memory_space<vmem>>, vector<1x8xf32>
    %c3_302 = arith.constant 3 : index
    %c88_303 = arith.constant 88 : index
    %305 = vector.load %arg6[%c3_302, %c88_303] : memref<8x96xf32, #tpu.memory_space<vmem>>, vector<1x8xf32>
    tpu.vector_store %arg6[%c3_302, %c88_303], %304 {strides = array<i32>} : memref<8x96xf32, #tpu.memory_space<vmem>>, vector<1x8xf32>,
    %c4_304 = arith.constant 4 : index
    %c0_305 = arith.constant 0 : index
    %306 = memref.load %arg0[%c4_304, %c0_305] : memref<8x12xi32, #tpu.memory_space<smem>>
    %c0_i32_306 = arith.constant 0 : i32
    %307 = arith.addi %c0_i32_306, %306 : i32
    %308 = arith.index_cast %307 : i32 to index
    %c0_307 = arith.constant 0 : index
    %309 = vector.load %arg5[%308, %c0_307] : memref<64x8xf32, #tpu.memory_space<vmem>>, vector<1x8xf32>
    %c4_308 = arith.constant 4 : index
    %c0_309 = arith.constant 0 : index
    %310 = vector.load %arg6[%c4_308, %c0_309] : memref<8x96xf32, #tpu.memory_space<vmem>>, vector<1x8xf32>
    tpu.vector_store %arg6[%c4_308, %c0_309], %309 {strides = array<i32>} : memref<8x96xf32, #tpu.memory_space<vmem>>, vector<1x8xf32>,
    %c4_310 = arith.constant 4 : index
    %c1_311 = arith.constant 1 : index
    %311 = memref.load %arg0[%c4_310, %c1_311] : memref<8x12xi32, #tpu.memory_space<smem>>
    %c0_i32_312 = arith.constant 0 : i32
    %312 = arith.addi %c0_i32_312, %311 : i32
    %313 = arith.index_cast %312 : i32 to index
    %c0_313 = arith.constant 0 : index
    %314 = vector.load %arg5[%313, %c0_313] : memref<64x8xf32, #tpu.memory_space<vmem>>, vector<1x8xf32>
    %c4_314 = arith.constant 4 : index
    %c8_315 = arith.constant 8 : index
    %315 = vector.load %arg6[%c4_314, %c8_315] : memref<8x96xf32, #tpu.memory_space<vmem>>, vector<1x8xf32>
    tpu.vector_store %arg6[%c4_314, %c8_315], %314 {strides = array<i32>} : memref<8x96xf32, #tpu.memory_space<vmem>>, vector<1x8xf32>,
    %c4_316 = arith.constant 4 : index
    %c2_317 = arith.constant 2 : index
    %316 = memref.load %arg0[%c4_316, %c2_317] : memref<8x12xi32, #tpu.memory_space<smem>>
    %c0_i32_318 = arith.constant 0 : i32
    %317 = arith.addi %c0_i32_318, %316 : i32
    %318 = arith.index_cast %317 : i32 to index
    %c0_319 = arith.constant 0 : index
    %319 = vector.load %arg5[%318, %c0_319] : memref<64x8xf32, #tpu.memory_space<vmem>>, vector<1x8xf32>
    %c4_320 = arith.constant 4 : index
    %c16_321 = arith.constant 16 : index
    %320 = vector.load %arg6[%c4_320, %c16_321] : memref<8x96xf32, #tpu.memory_space<vmem>>, vector<1x8xf32>
    tpu.vector_store %arg6[%c4_320, %c16_321], %319 {strides = array<i32>} : memref<8x96xf32, #tpu.memory_space<vmem>>, vector<1x8xf32>,
    %c4_322 = arith.constant 4 : index
    %c3_323 = arith.constant 3 : index
    %321 = memref.load %arg0[%c4_322, %c3_323] : memref<8x12xi32, #tpu.memory_space<smem>>
    %c0_i32_324 = arith.constant 0 : i32
    %322 = arith.addi %c0_i32_324, %321 : i32
    %323 = arith.index_cast %322 : i32 to index
    %c0_325 = arith.constant 0 : index
    %324 = vector.load %arg5[%323, %c0_325] : memref<64x8xf32, #tpu.memory_space<vmem>>, vector<1x8xf32>
    %c4_326 = arith.constant 4 : index
    %c24_327 = arith.constant 24 : index
    %325 = vector.load %arg6[%c4_326, %c24_327] : memref<8x96xf32, #tpu.memory_space<vmem>>, vector<1x8xf32>
    tpu.vector_store %arg6[%c4_326, %c24_327], %324 {strides = array<i32>} : memref<8x96xf32, #tpu.memory_space<vmem>>, vector<1x8xf32>,
    %c4_328 = arith.constant 4 : index
    %c4_329 = arith.constant 4 : index
    %326 = memref.load %arg0[%c4_328, %c4_329] : memref<8x12xi32, #tpu.memory_space<smem>>
    %c0_i32_330 = arith.constant 0 : i32
    %327 = arith.addi %c0_i32_330, %326 : i32
    %328 = arith.index_cast %327 : i32 to index
    %c0_331 = arith.constant 0 : index
    %329 = vector.load %arg5[%328, %c0_331] : memref<64x8xf32, #tpu.memory_space<vmem>>, vector<1x8xf32>
    %c4_332 = arith.constant 4 : index
    %c32_333 = arith.constant 32 : index
    %330 = vector.load %arg6[%c4_332, %c32_333] : memref<8x96xf32, #tpu.memory_space<vmem>>, vector<1x8xf32>
    tpu.vector_store %arg6[%c4_332, %c32_333], %329 {strides = array<i32>} : memref<8x96xf32, #tpu.memory_space<vmem>>, vector<1x8xf32>,
    %c4_334 = arith.constant 4 : index
    %c5_335 = arith.constant 5 : index
    %331 = memref.load %arg0[%c4_334, %c5_335] : memref<8x12xi32, #tpu.memory_space<smem>>
    %c0_i32_336 = arith.constant 0 : i32
    %332 = arith.addi %c0_i32_336, %331 : i32
    %333 = arith.index_cast %332 : i32 to index
    %c0_337 = arith.constant 0 : index
    %334 = vector.load %arg5[%333, %c0_337] : memref<64x8xf32, #tpu.memory_space<vmem>>, vector<1x8xf32>
    %c4_338 = arith.constant 4 : index
    %c40_339 = arith.constant 40 : index
    %335 = vector.load %arg6[%c4_338, %c40_339] : memref<8x96xf32, #tpu.memory_space<vmem>>, vector<1x8xf32>
    tpu.vector_store %arg6[%c4_338, %c40_339], %334 {strides = array<i32>} : memref<8x96xf32, #tpu.memory_space<vmem>>, vector<1x8xf32>,
    %c4_340 = arith.constant 4 : index
    %c6_341 = arith.constant 6 : index
    %336 = memref.load %arg0[%c4_340, %c6_341] : memref<8x12xi32, #tpu.memory_space<smem>>
    %c0_i32_342 = arith.constant 0 : i32
    %337 = arith.addi %c0_i32_342, %336 : i32
    %338 = arith.index_cast %337 : i32 to index
    %c0_343 = arith.constant 0 : index
    %339 = vector.load %arg5[%338, %c0_343] : memref<64x8xf32, #tpu.memory_space<vmem>>, vector<1x8xf32>
    %c4_344 = arith.constant 4 : index
    %c48_345 = arith.constant 48 : index
    %340 = vector.load %arg6[%c4_344, %c48_345] : memref<8x96xf32, #tpu.memory_space<vmem>>, vector<1x8xf32>
    tpu.vector_store %arg6[%c4_344, %c48_345], %339 {strides = array<i32>} : memref<8x96xf32, #tpu.memory_space<vmem>>, vector<1x8xf32>,
    %c4_346 = arith.constant 4 : index
    %c7_347 = arith.constant 7 : index
    %341 = memref.load %arg0[%c4_346, %c7_347] : memref<8x12xi32, #tpu.memory_space<smem>>
    %c0_i32_348 = arith.constant 0 : i32
    %342 = arith.addi %c0_i32_348, %341 : i32
    %343 = arith.index_cast %342 : i32 to index
    %c0_349 = arith.constant 0 : index
    %344 = vector.load %arg5[%343, %c0_349] : memref<64x8xf32, #tpu.memory_space<vmem>>, vector<1x8xf32>
    %c4_350 = arith.constant 4 : index
    %c56_351 = arith.constant 56 : index
    %345 = vector.load %arg6[%c4_350, %c56_351] : memref<8x96xf32, #tpu.memory_space<vmem>>, vector<1x8xf32>
    tpu.vector_store %arg6[%c4_350, %c56_351], %344 {strides = array<i32>} : memref<8x96xf32, #tpu.memory_space<vmem>>, vector<1x8xf32>,
    %c4_352 = arith.constant 4 : index
    %c8_353 = arith.constant 8 : index
    %346 = memref.load %arg0[%c4_352, %c8_353] : memref<8x12xi32, #tpu.memory_space<smem>>
    %c0_i32_354 = arith.constant 0 : i32
    %347 = arith.addi %c0_i32_354, %346 : i32
    %348 = arith.index_cast %347 : i32 to index
    %c0_355 = arith.constant 0 : index
    %349 = vector.load %arg5[%348, %c0_355] : memref<64x8xf32, #tpu.memory_space<vmem>>, vector<1x8xf32>
    %c4_356 = arith.constant 4 : index
    %c64_357 = arith.constant 64 : index
    %350 = vector.load %arg6[%c4_356, %c64_357] : memref<8x96xf32, #tpu.memory_space<vmem>>, vector<1x8xf32>
    tpu.vector_store %arg6[%c4_356, %c64_357], %349 {strides = array<i32>} : memref<8x96xf32, #tpu.memory_space<vmem>>, vector<1x8xf32>,
    %c4_358 = arith.constant 4 : index
    %c9_359 = arith.constant 9 : index
    %351 = memref.load %arg0[%c4_358, %c9_359] : memref<8x12xi32, #tpu.memory_space<smem>>
    %c0_i32_360 = arith.constant 0 : i32
    %352 = arith.addi %c0_i32_360, %351 : i32
    %353 = arith.index_cast %352 : i32 to index
    %c0_361 = arith.constant 0 : index
    %354 = vector.load %arg5[%353, %c0_361] : memref<64x8xf32, #tpu.memory_space<vmem>>, vector<1x8xf32>
    %c4_362 = arith.constant 4 : index
    %c72_363 = arith.constant 72 : index
    %355 = vector.load %arg6[%c4_362, %c72_363] : memref<8x96xf32, #tpu.memory_space<vmem>>, vector<1x8xf32>
    tpu.vector_store %arg6[%c4_362, %c72_363], %354 {strides = array<i32>} : memref<8x96xf32, #tpu.memory_space<vmem>>, vector<1x8xf32>,
    %c4_364 = arith.constant 4 : index
    %c10_365 = arith.constant 10 : index
    %356 = memref.load %arg0[%c4_364, %c10_365] : memref<8x12xi32, #tpu.memory_space<smem>>
    %c0_i32_366 = arith.constant 0 : i32
    %357 = arith.addi %c0_i32_366, %356 : i32
    %358 = arith.index_cast %357 : i32 to index
    %c0_367 = arith.constant 0 : index
    %359 = vector.load %arg5[%358, %c0_367] : memref<64x8xf32, #tpu.memory_space<vmem>>, vector<1x8xf32>
    %c4_368 = arith.constant 4 : index
    %c80_369 = arith.constant 80 : index
    %360 = vector.load %arg6[%c4_368, %c80_369] : memref<8x96xf32, #tpu.memory_space<vmem>>, vector<1x8xf32>
    tpu.vector_store %arg6[%c4_368, %c80_369], %359 {strides = array<i32>} : memref<8x96xf32, #tpu.memory_space<vmem>>, vector<1x8xf32>,
    %c4_370 = arith.constant 4 : index
    %c11_371 = arith.constant 11 : index
    %361 = memref.load %arg0[%c4_370, %c11_371] : memref<8x12xi32, #tpu.memory_space<smem>>
    %c0_i32_372 = arith.constant 0 : i32
    %362 = arith.addi %c0_i32_372, %361 : i32
    %363 = arith.index_cast %362 : i32 to index
    %c0_373 = arith.constant 0 : index
    %364 = vector.load %arg5[%363, %c0_373] : memref<64x8xf32, #tpu.memory_space<vmem>>, vector<1x8xf32>
    %c4_374 = arith.constant 4 : index
    %c88_375 = arith.constant 88 : index
    %365 = vector.load %arg6[%c4_374, %c88_375] : memref<8x96xf32, #tpu.memory_space<vmem>>, vector<1x8xf32>
    tpu.vector_store %arg6[%c4_374, %c88_375], %364 {strides = array<i32>} : memref<8x96xf32, #tpu.memory_space<vmem>>, vector<1x8xf32>,
    %c5_376 = arith.constant 5 : index
    %c0_377 = arith.constant 0 : index
    %366 = memref.load %arg0[%c5_376, %c0_377] : memref<8x12xi32, #tpu.memory_space<smem>>
    %c16_i32_378 = arith.constant 16 : i32
    %367 = arith.addi %c16_i32_378, %366 : i32
    %368 = arith.index_cast %367 : i32 to index
    %c0_379 = arith.constant 0 : index
    %369 = vector.load %arg5[%368, %c0_379] : memref<64x8xf32, #tpu.memory_space<vmem>>, vector<1x8xf32>
    %c5_380 = arith.constant 5 : index
    %c0_381 = arith.constant 0 : index
    %370 = vector.load %arg6[%c5_380, %c0_381] : memref<8x96xf32, #tpu.memory_space<vmem>>, vector<1x8xf32>
    tpu.vector_store %arg6[%c5_380, %c0_381], %369 {strides = array<i32>} : memref<8x96xf32, #tpu.memory_space<vmem>>, vector<1x8xf32>,
    %c5_382 = arith.constant 5 : index
    %c1_383 = arith.constant 1 : index
    %371 = memref.load %arg0[%c5_382, %c1_383] : memref<8x12xi32, #tpu.memory_space<smem>>
    %c16_i32_384 = arith.constant 16 : i32
    %372 = arith.addi %c16_i32_384, %371 : i32
    %373 = arith.index_cast %372 : i32 to index
    %c0_385 = arith.constant 0 : index
    %374 = vector.load %arg5[%373, %c0_385] : memref<64x8xf32, #tpu.memory_space<vmem>>, vector<1x8xf32>
    %c5_386 = arith.constant 5 : index
    %c8_387 = arith.constant 8 : index
    %375 = vector.load %arg6[%c5_386, %c8_387] : memref<8x96xf32, #tpu.memory_space<vmem>>, vector<1x8xf32>
    tpu.vector_store %arg6[%c5_386, %c8_387], %374 {strides = array<i32>} : memref<8x96xf32, #tpu.memory_space<vmem>>, vector<1x8xf32>,
    %c5_388 = arith.constant 5 : index
    %c2_389 = arith.constant 2 : index
    %376 = memref.load %arg0[%c5_388, %c2_389] : memref<8x12xi32, #tpu.memory_space<smem>>
    %c16_i32_390 = arith.constant 16 : i32
    %377 = arith.addi %c16_i32_390, %376 : i32
    %378 = arith.index_cast %377 : i32 to index
    %c0_391 = arith.constant 0 : index
    %379 = vector.load %arg5[%378, %c0_391] : memref<64x8xf32, #tpu.memory_space<vmem>>, vector<1x8xf32>
    %c5_392 = arith.constant 5 : index
    %c16_393 = arith.constant 16 : index
    %380 = vector.load %arg6[%c5_392, %c16_393] : memref<8x96xf32, #tpu.memory_space<vmem>>, vector<1x8xf32>
    tpu.vector_store %arg6[%c5_392, %c16_393], %379 {strides = array<i32>} : memref<8x96xf32, #tpu.memory_space<vmem>>, vector<1x8xf32>,
    %c5_394 = arith.constant 5 : index
    %c3_395 = arith.constant 3 : index
    %381 = memref.load %arg0[%c5_394, %c3_395] : memref<8x12xi32, #tpu.memory_space<smem>>
    %c16_i32_396 = arith.constant 16 : i32
    %382 = arith.addi %c16_i32_396, %381 : i32
    %383 = arith.index_cast %382 : i32 to index
    %c0_397 = arith.constant 0 : index
    %384 = vector.load %arg5[%383, %c0_397] : memref<64x8xf32, #tpu.memory_space<vmem>>, vector<1x8xf32>
    %c5_398 = arith.constant 5 : index
    %c24_399 = arith.constant 24 : index
    %385 = vector.load %arg6[%c5_398, %c24_399] : memref<8x96xf32, #tpu.memory_space<vmem>>, vector<1x8xf32>
    tpu.vector_store %arg6[%c5_398, %c24_399], %384 {strides = array<i32>} : memref<8x96xf32, #tpu.memory_space<vmem>>, vector<1x8xf32>,
    %c5_400 = arith.constant 5 : index
    %c4_401 = arith.constant 4 : index
    %386 = memref.load %arg0[%c5_400, %c4_401] : memref<8x12xi32, #tpu.memory_space<smem>>
    %c16_i32_402 = arith.constant 16 : i32
    %387 = arith.addi %c16_i32_402, %386 : i32
    %388 = arith.index_cast %387 : i32 to index
    %c0_403 = arith.constant 0 : index
    %389 = vector.load %arg5[%388, %c0_403] : memref<64x8xf32, #tpu.memory_space<vmem>>, vector<1x8xf32>
    %c5_404 = arith.constant 5 : index
    %c32_405 = arith.constant 32 : index
    %390 = vector.load %arg6[%c5_404, %c32_405] : memref<8x96xf32, #tpu.memory_space<vmem>>, vector<1x8xf32>
    tpu.vector_store %arg6[%c5_404, %c32_405], %389 {strides = array<i32>} : memref<8x96xf32, #tpu.memory_space<vmem>>, vector<1x8xf32>,
    %c5_406 = arith.constant 5 : index
    %c5_407 = arith.constant 5 : index
    %391 = memref.load %arg0[%c5_406, %c5_407] : memref<8x12xi32, #tpu.memory_space<smem>>
    %c16_i32_408 = arith.constant 16 : i32
    %392 = arith.addi %c16_i32_408, %391 : i32
    %393 = arith.index_cast %392 : i32 to index
    %c0_409 = arith.constant 0 : index
    %394 = vector.load %arg5[%393, %c0_409] : memref<64x8xf32, #tpu.memory_space<vmem>>, vector<1x8xf32>
    %c5_410 = arith.constant 5 : index
    %c40_411 = arith.constant 40 : index
    %395 = vector.load %arg6[%c5_410, %c40_411] : memref<8x96xf32, #tpu.memory_space<vmem>>, vector<1x8xf32>
    tpu.vector_store %arg6[%c5_410, %c40_411], %394 {strides = array<i32>} : memref<8x96xf32, #tpu.memory_space<vmem>>, vector<1x8xf32>,
    %c5_412 = arith.constant 5 : index
    %c6_413 = arith.constant 6 : index
    %396 = memref.load %arg0[%c5_412, %c6_413] : memref<8x12xi32, #tpu.memory_space<smem>>
    %c16_i32_414 = arith.constant 16 : i32
    %397 = arith.addi %c16_i32_414, %396 : i32
    %398 = arith.index_cast %397 : i32 to index
    %c0_415 = arith.constant 0 : index
    %399 = vector.load %arg5[%398, %c0_415] : memref<64x8xf32, #tpu.memory_space<vmem>>, vector<1x8xf32>
    %c5_416 = arith.constant 5 : index
    %c48_417 = arith.constant 48 : index
    %400 = vector.load %arg6[%c5_416, %c48_417] : memref<8x96xf32, #tpu.memory_space<vmem>>, vector<1x8xf32>
    tpu.vector_store %arg6[%c5_416, %c48_417], %399 {strides = array<i32>} : memref<8x96xf32, #tpu.memory_space<vmem>>, vector<1x8xf32>,
    %c5_418 = arith.constant 5 : index
    %c7_419 = arith.constant 7 : index
    %401 = memref.load %arg0[%c5_418, %c7_419] : memref<8x12xi32, #tpu.memory_space<smem>>
    %c16_i32_420 = arith.constant 16 : i32
    %402 = arith.addi %c16_i32_420, %401 : i32
    %403 = arith.index_cast %402 : i32 to index
    %c0_421 = arith.constant 0 : index
    %404 = vector.load %arg5[%403, %c0_421] : memref<64x8xf32, #tpu.memory_space<vmem>>, vector<1x8xf32>
    %c5_422 = arith.constant 5 : index
    %c56_423 = arith.constant 56 : index
    %405 = vector.load %arg6[%c5_422, %c56_423] : memref<8x96xf32, #tpu.memory_space<vmem>>, vector<1x8xf32>
    tpu.vector_store %arg6[%c5_422, %c56_423], %404 {strides = array<i32>} : memref<8x96xf32, #tpu.memory_space<vmem>>, vector<1x8xf32>,
    %c5_424 = arith.constant 5 : index
    %c8_425 = arith.constant 8 : index
    %406 = memref.load %arg0[%c5_424, %c8_425] : memref<8x12xi32, #tpu.memory_space<smem>>
    %c16_i32_426 = arith.constant 16 : i32
    %407 = arith.addi %c16_i32_426, %406 : i32
    %408 = arith.index_cast %407 : i32 to index
    %c0_427 = arith.constant 0 : index
    %409 = vector.load %arg5[%408, %c0_427] : memref<64x8xf32, #tpu.memory_space<vmem>>, vector<1x8xf32>
    %c5_428 = arith.constant 5 : index
    %c64_429 = arith.constant 64 : index
    %410 = vector.load %arg6[%c5_428, %c64_429] : memref<8x96xf32, #tpu.memory_space<vmem>>, vector<1x8xf32>
    tpu.vector_store %arg6[%c5_428, %c64_429], %409 {strides = array<i32>} : memref<8x96xf32, #tpu.memory_space<vmem>>, vector<1x8xf32>,
    %c5_430 = arith.constant 5 : index
    %c9_431 = arith.constant 9 : index
    %411 = memref.load %arg0[%c5_430, %c9_431] : memref<8x12xi32, #tpu.memory_space<smem>>
    %c16_i32_432 = arith.constant 16 : i32
    %412 = arith.addi %c16_i32_432, %411 : i32
    %413 = arith.index_cast %412 : i32 to index
    %c0_433 = arith.constant 0 : index
    %414 = vector.load %arg5[%413, %c0_433] : memref<64x8xf32, #tpu.memory_space<vmem>>, vector<1x8xf32>
    %c5_434 = arith.constant 5 : index
    %c72_435 = arith.constant 72 : index
    %415 = vector.load %arg6[%c5_434, %c72_435] : memref<8x96xf32, #tpu.memory_space<vmem>>, vector<1x8xf32>
    tpu.vector_store %arg6[%c5_434, %c72_435], %414 {strides = array<i32>} : memref<8x96xf32, #tpu.memory_space<vmem>>, vector<1x8xf32>,
    %c5_436 = arith.constant 5 : index
    %c10_437 = arith.constant 10 : index
    %416 = memref.load %arg0[%c5_436, %c10_437] : memref<8x12xi32, #tpu.memory_space<smem>>
    %c16_i32_438 = arith.constant 16 : i32
    %417 = arith.addi %c16_i32_438, %416 : i32
    %418 = arith.index_cast %417 : i32 to index
    %c0_439 = arith.constant 0 : index
    %419 = vector.load %arg5[%418, %c0_439] : memref<64x8xf32, #tpu.memory_space<vmem>>, vector<1x8xf32>
    %c5_440 = arith.constant 5 : index
    %c80_441 = arith.constant 80 : index
    %420 = vector.load %arg6[%c5_440, %c80_441] : memref<8x96xf32, #tpu.memory_space<vmem>>, vector<1x8xf32>
    tpu.vector_store %arg6[%c5_440, %c80_441], %419 {strides = array<i32>} : memref<8x96xf32, #tpu.memory_space<vmem>>, vector<1x8xf32>,
    %c5_442 = arith.constant 5 : index
    %c11_443 = arith.constant 11 : index
    %421 = memref.load %arg0[%c5_442, %c11_443] : memref<8x12xi32, #tpu.memory_space<smem>>
    %c16_i32_444 = arith.constant 16 : i32
    %422 = arith.addi %c16_i32_444, %421 : i32
    %423 = arith.index_cast %422 : i32 to index
    %c0_445 = arith.constant 0 : index
    %424 = vector.load %arg5[%423, %c0_445] : memref<64x8xf32, #tpu.memory_space<vmem>>, vector<1x8xf32>
    %c5_446 = arith.constant 5 : index
    %c88_447 = arith.constant 88 : index
    %425 = vector.load %arg6[%c5_446, %c88_447] : memref<8x96xf32, #tpu.memory_space<vmem>>, vector<1x8xf32>
    tpu.vector_store %arg6[%c5_446, %c88_447], %424 {strides = array<i32>} : memref<8x96xf32, #tpu.memory_space<vmem>>, vector<1x8xf32>,
    %c6_448 = arith.constant 6 : index
    %c0_449 = arith.constant 0 : index
    %426 = memref.load %arg0[%c6_448, %c0_449] : memref<8x12xi32, #tpu.memory_space<smem>>
    %c32_i32_450 = arith.constant 32 : i32
    %427 = arith.addi %c32_i32_450, %426 : i32
    %428 = arith.index_cast %427 : i32 to index
    %c0_451 = arith.constant 0 : index
    %429 = vector.load %arg5[%428, %c0_451] : memref<64x8xf32, #tpu.memory_space<vmem>>, vector<1x8xf32>
    %c6_452 = arith.constant 6 : index
    %c0_453 = arith.constant 0 : index
    %430 = vector.load %arg6[%c6_452, %c0_453] : memref<8x96xf32, #tpu.memory_space<vmem>>, vector<1x8xf32>
    tpu.vector_store %arg6[%c6_452, %c0_453], %429 {strides = array<i32>} : memref<8x96xf32, #tpu.memory_space<vmem>>, vector<1x8xf32>,
    %c6_454 = arith.constant 6 : index
    %c1_455 = arith.constant 1 : index
    %431 = memref.load %arg0[%c6_454, %c1_455] : memref<8x12xi32, #tpu.memory_space<smem>>
    %c32_i32_456 = arith.constant 32 : i32
    %432 = arith.addi %c32_i32_456, %431 : i32
    %433 = arith.index_cast %432 : i32 to index
    %c0_457 = arith.constant 0 : index
    %434 = vector.load %arg5[%433, %c0_457] : memref<64x8xf32, #tpu.memory_space<vmem>>, vector<1x8xf32>
    %c6_458 = arith.constant 6 : index
    %c8_459 = arith.constant 8 : index
    %435 = vector.load %arg6[%c6_458, %c8_459] : memref<8x96xf32, #tpu.memory_space<vmem>>, vector<1x8xf32>
    tpu.vector_store %arg6[%c6_458, %c8_459], %434 {strides = array<i32>} : memref<8x96xf32, #tpu.memory_space<vmem>>, vector<1x8xf32>,
    %c6_460 = arith.constant 6 : index
    %c2_461 = arith.constant 2 : index
    %436 = memref.load %arg0[%c6_460, %c2_461] : memref<8x12xi32, #tpu.memory_space<smem>>
    %c32_i32_462 = arith.constant 32 : i32
    %437 = arith.addi %c32_i32_462, %436 : i32
    %438 = arith.index_cast %437 : i32 to index
    %c0_463 = arith.constant 0 : index
    %439 = vector.load %arg5[%438, %c0_463] : memref<64x8xf32, #tpu.memory_space<vmem>>, vector<1x8xf32>
    %c6_464 = arith.constant 6 : index
    %c16_465 = arith.constant 16 : index
    %440 = vector.load %arg6[%c6_464, %c16_465] : memref<8x96xf32, #tpu.memory_space<vmem>>, vector<1x8xf32>
    tpu.vector_store %arg6[%c6_464, %c16_465], %439 {strides = array<i32>} : memref<8x96xf32, #tpu.memory_space<vmem>>, vector<1x8xf32>,
    %c6_466 = arith.constant 6 : index
    %c3_467 = arith.constant 3 : index
    %441 = memref.load %arg0[%c6_466, %c3_467] : memref<8x12xi32, #tpu.memory_space<smem>>
    %c32_i32_468 = arith.constant 32 : i32
    %442 = arith.addi %c32_i32_468, %441 : i32
    %443 = arith.index_cast %442 : i32 to index
    %c0_469 = arith.constant 0 : index
    %444 = vector.load %arg5[%443, %c0_469] : memref<64x8xf32, #tpu.memory_space<vmem>>, vector<1x8xf32>
    %c6_470 = arith.constant 6 : index
    %c24_471 = arith.constant 24 : index
    %445 = vector.load %arg6[%c6_470, %c24_471] : memref<8x96xf32, #tpu.memory_space<vmem>>, vector<1x8xf32>
    tpu.vector_store %arg6[%c6_470, %c24_471], %444 {strides = array<i32>} : memref<8x96xf32, #tpu.memory_space<vmem>>, vector<1x8xf32>,
    %c6_472 = arith.constant 6 : index
    %c4_473 = arith.constant 4 : index
    %446 = memref.load %arg0[%c6_472, %c4_473] : memref<8x12xi32, #tpu.memory_space<smem>>
    %c32_i32_474 = arith.constant 32 : i32
    %447 = arith.addi %c32_i32_474, %446 : i32
    %448 = arith.index_cast %447 : i32 to index
    %c0_475 = arith.constant 0 : index
    %449 = vector.load %arg5[%448, %c0_475] : memref<64x8xf32, #tpu.memory_space<vmem>>, vector<1x8xf32>
    %c6_476 = arith.constant 6 : index
    %c32_477 = arith.constant 32 : index
    %450 = vector.load %arg6[%c6_476, %c32_477] : memref<8x96xf32, #tpu.memory_space<vmem>>, vector<1x8xf32>
    tpu.vector_store %arg6[%c6_476, %c32_477], %449 {strides = array<i32>} : memref<8x96xf32, #tpu.memory_space<vmem>>, vector<1x8xf32>,
    %c6_478 = arith.constant 6 : index
    %c5_479 = arith.constant 5 : index
    %451 = memref.load %arg0[%c6_478, %c5_479] : memref<8x12xi32, #tpu.memory_space<smem>>
    %c32_i32_480 = arith.constant 32 : i32
    %452 = arith.addi %c32_i32_480, %451 : i32
    %453 = arith.index_cast %452 : i32 to index
    %c0_481 = arith.constant 0 : index
    %454 = vector.load %arg5[%453, %c0_481] : memref<64x8xf32, #tpu.memory_space<vmem>>, vector<1x8xf32>
    %c6_482 = arith.constant 6 : index
    %c40_483 = arith.constant 40 : index
    %455 = vector.load %arg6[%c6_482, %c40_483] : memref<8x96xf32, #tpu.memory_space<vmem>>, vector<1x8xf32>
    tpu.vector_store %arg6[%c6_482, %c40_483], %454 {strides = array<i32>} : memref<8x96xf32, #tpu.memory_space<vmem>>, vector<1x8xf32>,
    %c6_484 = arith.constant 6 : index
    %c6_485 = arith.constant 6 : index
    %456 = memref.load %arg0[%c6_484, %c6_485] : memref<8x12xi32, #tpu.memory_space<smem>>
    %c32_i32_486 = arith.constant 32 : i32
    %457 = arith.addi %c32_i32_486, %456 : i32
    %458 = arith.index_cast %457 : i32 to index
    %c0_487 = arith.constant 0 : index
    %459 = vector.load %arg5[%458, %c0_487] : memref<64x8xf32, #tpu.memory_space<vmem>>, vector<1x8xf32>
    %c6_488 = arith.constant 6 : index
    %c48_489 = arith.constant 48 : index
    %460 = vector.load %arg6[%c6_488, %c48_489] : memref<8x96xf32, #tpu.memory_space<vmem>>, vector<1x8xf32>
    tpu.vector_store %arg6[%c6_488, %c48_489], %459 {strides = array<i32>} : memref<8x96xf32, #tpu.memory_space<vmem>>, vector<1x8xf32>,
    %c6_490 = arith.constant 6 : index
    %c7_491 = arith.constant 7 : index
    %461 = memref.load %arg0[%c6_490, %c7_491] : memref<8x12xi32, #tpu.memory_space<smem>>
    %c32_i32_492 = arith.constant 32 : i32
    %462 = arith.addi %c32_i32_492, %461 : i32
    %463 = arith.index_cast %462 : i32 to index
    %c0_493 = arith.constant 0 : index
    %464 = vector.load %arg5[%463, %c0_493] : memref<64x8xf32, #tpu.memory_space<vmem>>, vector<1x8xf32>
    %c6_494 = arith.constant 6 : index
    %c56_495 = arith.constant 56 : index
    %465 = vector.load %arg6[%c6_494, %c56_495] : memref<8x96xf32, #tpu.memory_space<vmem>>, vector<1x8xf32>
    tpu.vector_store %arg6[%c6_494, %c56_495], %464 {strides = array<i32>} : memref<8x96xf32, #tpu.memory_space<vmem>>, vector<1x8xf32>,
    %c6_496 = arith.constant 6 : index
    %c8_497 = arith.constant 8 : index
    %466 = memref.load %arg0[%c6_496, %c8_497] : memref<8x12xi32, #tpu.memory_space<smem>>
    %c32_i32_498 = arith.constant 32 : i32
    %467 = arith.addi %c32_i32_498, %466 : i32
    %468 = arith.index_cast %467 : i32 to index
    %c0_499 = arith.constant 0 : index
    %469 = vector.load %arg5[%468, %c0_499] : memref<64x8xf32, #tpu.memory_space<vmem>>, vector<1x8xf32>
    %c6_500 = arith.constant 6 : index
    %c64_501 = arith.constant 64 : index
    %470 = vector.load %arg6[%c6_500, %c64_501] : memref<8x96xf32, #tpu.memory_space<vmem>>, vector<1x8xf32>
    tpu.vector_store %arg6[%c6_500, %c64_501], %469 {strides = array<i32>} : memref<8x96xf32, #tpu.memory_space<vmem>>, vector<1x8xf32>,
    %c6_502 = arith.constant 6 : index
    %c9_503 = arith.constant 9 : index
    %471 = memref.load %arg0[%c6_502, %c9_503] : memref<8x12xi32, #tpu.memory_space<smem>>
    %c32_i32_504 = arith.constant 32 : i32
    %472 = arith.addi %c32_i32_504, %471 : i32
    %473 = arith.index_cast %472 : i32 to index
    %c0_505 = arith.constant 0 : index
    %474 = vector.load %arg5[%473, %c0_505] : memref<64x8xf32, #tpu.memory_space<vmem>>, vector<1x8xf32>
    %c6_506 = arith.constant 6 : index
    %c72_507 = arith.constant 72 : index
    %475 = vector.load %arg6[%c6_506, %c72_507] : memref<8x96xf32, #tpu.memory_space<vmem>>, vector<1x8xf32>
    tpu.vector_store %arg6[%c6_506, %c72_507], %474 {strides = array<i32>} : memref<8x96xf32, #tpu.memory_space<vmem>>, vector<1x8xf32>,
    %c6_508 = arith.constant 6 : index
    %c10_509 = arith.constant 10 : index
    %476 = memref.load %arg0[%c6_508, %c10_509] : memref<8x12xi32, #tpu.memory_space<smem>>
    %c32_i32_510 = arith.constant 32 : i32
    %477 = arith.addi %c32_i32_510, %476 : i32
    %478 = arith.index_cast %477 : i32 to index
    %c0_511 = arith.constant 0 : index
    %479 = vector.load %arg5[%478, %c0_511] : memref<64x8xf32, #tpu.memory_space<vmem>>, vector<1x8xf32>
    %c6_512 = arith.constant 6 : index
    %c80_513 = arith.constant 80 : index
    %480 = vector.load %arg6[%c6_512, %c80_513] : memref<8x96xf32, #tpu.memory_space<vmem>>, vector<1x8xf32>
    tpu.vector_store %arg6[%c6_512, %c80_513], %479 {strides = array<i32>} : memref<8x96xf32, #tpu.memory_space<vmem>>, vector<1x8xf32>,
    %c6_514 = arith.constant 6 : index
    %c11_515 = arith.constant 11 : index
    %481 = memref.load %arg0[%c6_514, %c11_515] : memref<8x12xi32, #tpu.memory_space<smem>>
    %c32_i32_516 = arith.constant 32 : i32
    %482 = arith.addi %c32_i32_516, %481 : i32
    %483 = arith.index_cast %482 : i32 to index
    %c0_517 = arith.constant 0 : index
    %484 = vector.load %arg5[%483, %c0_517] : memref<64x8xf32, #tpu.memory_space<vmem>>, vector<1x8xf32>
    %c6_518 = arith.constant 6 : index
    %c88_519 = arith.constant 88 : index
    %485 = vector.load %arg6[%c6_518, %c88_519] : memref<8x96xf32, #tpu.memory_space<vmem>>, vector<1x8xf32>
    tpu.vector_store %arg6[%c6_518, %c88_519], %484 {strides = array<i32>} : memref<8x96xf32, #tpu.memory_space<vmem>>, vector<1x8xf32>,
    %c7_520 = arith.constant 7 : index
    %c0_521 = arith.constant 0 : index
    %486 = memref.load %arg0[%c7_520, %c0_521] : memref<8x12xi32, #tpu.memory_space<smem>>
    %c48_i32_522 = arith.constant 48 : i32
    %487 = arith.addi %c48_i32_522, %486 : i32
    %488 = arith.index_cast %487 : i32 to index
    %c0_523 = arith.constant 0 : index
    %489 = vector.load %arg5[%488, %c0_523] : memref<64x8xf32, #tpu.memory_space<vmem>>, vector<1x8xf32>
    %c7_524 = arith.constant 7 : index
    %c0_525 = arith.constant 0 : index
    %490 = vector.load %arg6[%c7_524, %c0_525] : memref<8x96xf32, #tpu.memory_space<vmem>>, vector<1x8xf32>
    tpu.vector_store %arg6[%c7_524, %c0_525], %489 {strides = array<i32>} : memref<8x96xf32, #tpu.memory_space<vmem>>, vector<1x8xf32>,
    %c7_526 = arith.constant 7 : index
    %c1_527 = arith.constant 1 : index
    %491 = memref.load %arg0[%c7_526, %c1_527] : memref<8x12xi32, #tpu.memory_space<smem>>
    %c48_i32_528 = arith.constant 48 : i32
    %492 = arith.addi %c48_i32_528, %491 : i32
    %493 = arith.index_cast %492 : i32 to index
    %c0_529 = arith.constant 0 : index
    %494 = vector.load %arg5[%493, %c0_529] : memref<64x8xf32, #tpu.memory_space<vmem>>, vector<1x8xf32>
    %c7_530 = arith.constant 7 : index
    %c8_531 = arith.constant 8 : index
    %495 = vector.load %arg6[%c7_530, %c8_531] : memref<8x96xf32, #tpu.memory_space<vmem>>, vector<1x8xf32>
    tpu.vector_store %arg6[%c7_530, %c8_531], %494 {strides = array<i32>} : memref<8x96xf32, #tpu.memory_space<vmem>>, vector<1x8xf32>,
    %c7_532 = arith.constant 7 : index
    %c2_533 = arith.constant 2 : index
    %496 = memref.load %arg0[%c7_532, %c2_533] : memref<8x12xi32, #tpu.memory_space<smem>>
    %c48_i32_534 = arith.constant 48 : i32
    %497 = arith.addi %c48_i32_534, %496 : i32
    %498 = arith.index_cast %497 : i32 to index
    %c0_535 = arith.constant 0 : index
    %499 = vector.load %arg5[%498, %c0_535] : memref<64x8xf32, #tpu.memory_space<vmem>>, vector<1x8xf32>
    %c7_536 = arith.constant 7 : index
    %c16_537 = arith.constant 16 : index
    %500 = vector.load %arg6[%c7_536, %c16_537] : memref<8x96xf32, #tpu.memory_space<vmem>>, vector<1x8xf32>
    tpu.vector_store %arg6[%c7_536, %c16_537], %499 {strides = array<i32>} : memref<8x96xf32, #tpu.memory_space<vmem>>, vector<1x8xf32>,
    %c7_538 = arith.constant 7 : index
    %c3_539 = arith.constant 3 : index
    %501 = memref.load %arg0[%c7_538, %c3_539] : memref<8x12xi32, #tpu.memory_space<smem>>
    %c48_i32_540 = arith.constant 48 : i32
    %502 = arith.addi %c48_i32_540, %501 : i32
    %503 = arith.index_cast %502 : i32 to index
    %c0_541 = arith.constant 0 : index
    %504 = vector.load %arg5[%503, %c0_541] : memref<64x8xf32, #tpu.memory_space<vmem>>, vector<1x8xf32>
    %c7_542 = arith.constant 7 : index
    %c24_543 = arith.constant 24 : index
    %505 = vector.load %arg6[%c7_542, %c24_543] : memref<8x96xf32, #tpu.memory_space<vmem>>, vector<1x8xf32>
    tpu.vector_store %arg6[%c7_542, %c24_543], %504 {strides = array<i32>} : memref<8x96xf32, #tpu.memory_space<vmem>>, vector<1x8xf32>,
    %c7_544 = arith.constant 7 : index
    %c4_545 = arith.constant 4 : index
    %506 = memref.load %arg0[%c7_544, %c4_545] : memref<8x12xi32, #tpu.memory_space<smem>>
    %c48_i32_546 = arith.constant 48 : i32
    %507 = arith.addi %c48_i32_546, %506 : i32
    %508 = arith.index_cast %507 : i32 to index
    %c0_547 = arith.constant 0 : index
    %509 = vector.load %arg5[%508, %c0_547] : memref<64x8xf32, #tpu.memory_space<vmem>>, vector<1x8xf32>
    %c7_548 = arith.constant 7 : index
    %c32_549 = arith.constant 32 : index
    %510 = vector.load %arg6[%c7_548, %c32_549] : memref<8x96xf32, #tpu.memory_space<vmem>>, vector<1x8xf32>
    tpu.vector_store %arg6[%c7_548, %c32_549], %509 {strides = array<i32>} : memref<8x96xf32, #tpu.memory_space<vmem>>, vector<1x8xf32>,
    %c7_550 = arith.constant 7 : index
    %c5_551 = arith.constant 5 : index
    %511 = memref.load %arg0[%c7_550, %c5_551] : memref<8x12xi32, #tpu.memory_space<smem>>
    %c48_i32_552 = arith.constant 48 : i32
    %512 = arith.addi %c48_i32_552, %511 : i32
    %513 = arith.index_cast %512 : i32 to index
    %c0_553 = arith.constant 0 : index
    %514 = vector.load %arg5[%513, %c0_553] : memref<64x8xf32, #tpu.memory_space<vmem>>, vector<1x8xf32>
    %c7_554 = arith.constant 7 : index
    %c40_555 = arith.constant 40 : index
    %515 = vector.load %arg6[%c7_554, %c40_555] : memref<8x96xf32, #tpu.memory_space<vmem>>, vector<1x8xf32>
    tpu.vector_store %arg6[%c7_554, %c40_555], %514 {strides = array<i32>} : memref<8x96xf32, #tpu.memory_space<vmem>>, vector<1x8xf32>,
    %c7_556 = arith.constant 7 : index
    %c6_557 = arith.constant 6 : index
    %516 = memref.load %arg0[%c7_556, %c6_557] : memref<8x12xi32, #tpu.memory_space<smem>>
    %c48_i32_558 = arith.constant 48 : i32
    %517 = arith.addi %c48_i32_558, %516 : i32
    %518 = arith.index_cast %517 : i32 to index
    %c0_559 = arith.constant 0 : index
    %519 = vector.load %arg5[%518, %c0_559] : memref<64x8xf32, #tpu.memory_space<vmem>>, vector<1x8xf32>
    %c7_560 = arith.constant 7 : index
    %c48_561 = arith.constant 48 : index
    %520 = vector.load %arg6[%c7_560, %c48_561] : memref<8x96xf32, #tpu.memory_space<vmem>>, vector<1x8xf32>
    tpu.vector_store %arg6[%c7_560, %c48_561], %519 {strides = array<i32>} : memref<8x96xf32, #tpu.memory_space<vmem>>, vector<1x8xf32>,
    %c7_562 = arith.constant 7 : index
    %c7_563 = arith.constant 7 : index
    %521 = memref.load %arg0[%c7_562, %c7_563] : memref<8x12xi32, #tpu.memory_space<smem>>
    %c48_i32_564 = arith.constant 48 : i32
    %522 = arith.addi %c48_i32_564, %521 : i32
    %523 = arith.index_cast %522 : i32 to index
    %c0_565 = arith.constant 0 : index
    %524 = vector.load %arg5[%523, %c0_565] : memref<64x8xf32, #tpu.memory_space<vmem>>, vector<1x8xf32>
    %c7_566 = arith.constant 7 : index
    %c56_567 = arith.constant 56 : index
    %525 = vector.load %arg6[%c7_566, %c56_567] : memref<8x96xf32, #tpu.memory_space<vmem>>, vector<1x8xf32>
    tpu.vector_store %arg6[%c7_566, %c56_567], %524 {strides = array<i32>} : memref<8x96xf32, #tpu.memory_space<vmem>>, vector<1x8xf32>,
    %c7_568 = arith.constant 7 : index
    %c8_569 = arith.constant 8 : index
    %526 = memref.load %arg0[%c7_568, %c8_569] : memref<8x12xi32, #tpu.memory_space<smem>>
    %c48_i32_570 = arith.constant 48 : i32
    %527 = arith.addi %c48_i32_570, %526 : i32
    %528 = arith.index_cast %527 : i32 to index
    %c0_571 = arith.constant 0 : index
    %529 = vector.load %arg5[%528, %c0_571] : memref<64x8xf32, #tpu.memory_space<vmem>>, vector<1x8xf32>
    %c7_572 = arith.constant 7 : index
    %c64_573 = arith.constant 64 : index
    %530 = vector.load %arg6[%c7_572, %c64_573] : memref<8x96xf32, #tpu.memory_space<vmem>>, vector<1x8xf32>
    tpu.vector_store %arg6[%c7_572, %c64_573], %529 {strides = array<i32>} : memref<8x96xf32, #tpu.memory_space<vmem>>, vector<1x8xf32>,
    %c7_574 = arith.constant 7 : index
    %c9_575 = arith.constant 9 : index
    %531 = memref.load %arg0[%c7_574, %c9_575] : memref<8x12xi32, #tpu.memory_space<smem>>
    %c48_i32_576 = arith.constant 48 : i32
    %532 = arith.addi %c48_i32_576, %531 : i32
    %533 = arith.index_cast %532 : i32 to index
    %c0_577 = arith.constant 0 : index
    %534 = vector.load %arg5[%533, %c0_577] : memref<64x8xf32, #tpu.memory_space<vmem>>, vector<1x8xf32>
    %c7_578 = arith.constant 7 : index
    %c72_579 = arith.constant 72 : index
    %535 = vector.load %arg6[%c7_578, %c72_579] : memref<8x96xf32, #tpu.memory_space<vmem>>, vector<1x8xf32>
    tpu.vector_store %arg6[%c7_578, %c72_579], %534 {strides = array<i32>} : memref<8x96xf32, #tpu.memory_space<vmem>>, vector<1x8xf32>,
    %c7_580 = arith.constant 7 : index
    %c10_581 = arith.constant 10 : index
    %536 = memref.load %arg0[%c7_580, %c10_581] : memref<8x12xi32, #tpu.memory_space<smem>>
    %c48_i32_582 = arith.constant 48 : i32
    %537 = arith.addi %c48_i32_582, %536 : i32
    %538 = arith.index_cast %537 : i32 to index
    %c0_583 = arith.constant 0 : index
    %539 = vector.load %arg5[%538, %c0_583] : memref<64x8xf32, #tpu.memory_space<vmem>>, vector<1x8xf32>
    %c7_584 = arith.constant 7 : index
    %c80_585 = arith.constant 80 : index
    %540 = vector.load %arg6[%c7_584, %c80_585] : memref<8x96xf32, #tpu.memory_space<vmem>>, vector<1x8xf32>
    tpu.vector_store %arg6[%c7_584, %c80_585], %539 {strides = array<i32>} : memref<8x96xf32, #tpu.memory_space<vmem>>, vector<1x8xf32>,
    %c7_586 = arith.constant 7 : index
    %c11_587 = arith.constant 11 : index
    %541 = memref.load %arg0[%c7_586, %c11_587] : memref<8x12xi32, #tpu.memory_space<smem>>
    %c48_i32_588 = arith.constant 48 : i32
    %542 = arith.addi %c48_i32_588, %541 : i32
    %543 = arith.index_cast %542 : i32 to index
    %c0_589 = arith.constant 0 : index
    %544 = vector.load %arg5[%543, %c0_589] : memref<64x8xf32, #tpu.memory_space<vmem>>, vector<1x8xf32>
    %c7_590 = arith.constant 7 : index
    %c88_591 = arith.constant 88 : index
    %545 = vector.load %arg6[%c7_590, %c88_591] : memref<8x96xf32, #tpu.memory_space<vmem>>, vector<1x8xf32>
    tpu.vector_store %arg6[%c7_590, %c88_591], %544 {strides = array<i32>} : memref<8x96xf32, #tpu.memory_space<vmem>>, vector<1x8xf32>,
    %c0_592 = arith.constant 0 : index
    %c0_593 = arith.constant 0 : index
    %546 = vector.load %arg6[%c0_592, %c0_593] : memref<8x96xf32, #tpu.memory_space<vmem>>, vector<8x96xf32>
    %c500 = arith.constant 500 : index
    %c0_594 = arith.constant 0 : index
    %547 = vector.load %arg3[%c500, %c0_594] : memref<1148x128xf32, #tpu.memory_space<vmem>>, vector<128x64xf32>
    %cst_595 = arith.constant dense<0.000000e+00> : vector<4x64xf32>
    %548 = tpu.matmul %1, %547, %cst_595 {dimension_numbers = #tpu.dot_dimension_numbers<[1], [0], [0], [1], [0, 0, 1, 1], [], []>} : vector<4x128xf32>, vector<128x64xf32>, vector<4x64xf32> -> vector<4x64xf32>
    %c628 = arith.constant 628 : index
    %c0_596 = arith.constant 0 : index
    %549 = vector.load %arg3[%c628, %c0_596] : memref<1148x128xf32, #tpu.memory_space<vmem>>, vector<1x64xf32>
    %550 = vector.broadcast %549 : vector<1x64xf32> to vector<4x64xf32>
    %551 = arith.addf %548, %550 : vector<4x64xf32>
    %cst_597 = arith.constant 0.000000e+00 : f32
    %552 = vector.broadcast %cst_597 : f32 to vector<4x64xf32>
    %553 = arith.maximumf %551, %552 : vector<4x64xf32>
    %c629 = arith.constant 629 : index
    %c0_598 = arith.constant 0 : index
    %554 = vector.load %arg3[%c629, %c0_598] : memref<1148x128xf32, #tpu.memory_space<vmem>>, vector<64x64xf32>
    %cst_599 = arith.constant dense<0.000000e+00> : vector<4x64xf32>
    %555 = tpu.matmul %553, %554, %cst_599 {dimension_numbers = #tpu.dot_dimension_numbers<[1], [0], [0], [1], [0, 0, 1, 1], [], []>} : vector<4x64xf32>, vector<64x64xf32>, vector<4x64xf32> -> vector<4x64xf32>
    %c693 = arith.constant 693 : index
    %c0_600 = arith.constant 0 : index
    %556 = vector.load %arg3[%c693, %c0_600] : memref<1148x128xf32, #tpu.memory_space<vmem>>, vector<1x64xf32>
    %557 = vector.broadcast %556 : vector<1x64xf32> to vector<4x64xf32>
    %558 = arith.addf %555, %557 : vector<4x64xf32>
    %cst_601 = arith.constant 0.000000e+00 : f32
    %559 = vector.broadcast %cst_601 : f32 to vector<4x64xf32>
    %560 = arith.maximumf %558, %559 : vector<4x64xf32>
    %c694 = arith.constant 694 : index
    %c0_602 = arith.constant 0 : index
    %561 = vector.load %arg3[%c694, %c0_602] : memref<1148x128xf32, #tpu.memory_space<vmem>>, vector<96x32xf32>
    %cst_603 = arith.constant dense<0.000000e+00> : vector<8x32xf32>
    %562 = tpu.matmul %546, %561, %cst_603 {dimension_numbers = #tpu.dot_dimension_numbers<[1], [0], [0], [1], [0, 0, 1, 1], [], []>} : vector<8x96xf32>, vector<96x32xf32>, vector<8x32xf32> -> vector<8x32xf32>
    %c790 = arith.constant 790 : index
    %c0_604 = arith.constant 0 : index
    %563 = vector.load %arg3[%c790, %c0_604] : memref<1148x128xf32, #tpu.memory_space<vmem>>, vector<1x32xf32>
    %564 = vector.broadcast %563 : vector<1x32xf32> to vector<8x32xf32>
    %565 = arith.addf %562, %564 : vector<8x32xf32>
    %cst_605 = arith.constant 0.000000e+00 : f32
    %566 = vector.broadcast %cst_605 : f32 to vector<8x32xf32>
    %567 = arith.maximumf %565, %566 : vector<8x32xf32>
    %c791 = arith.constant 791 : index
    %c0_606 = arith.constant 0 : index
    %568 = vector.load %arg3[%c791, %c0_606] : memref<1148x128xf32, #tpu.memory_space<vmem>>, vector<32x64xf32>
    %cst_607 = arith.constant dense<0.000000e+00> : vector<8x64xf32>
    %569 = tpu.matmul %567, %568, %cst_607 {dimension_numbers = #tpu.dot_dimension_numbers<[1], [0], [0], [1], [0, 0, 1, 1], [], []>} : vector<8x32xf32>, vector<32x64xf32>, vector<8x64xf32> -> vector<8x64xf32>
    %c823 = arith.constant 823 : index
    %c0_608 = arith.constant 0 : index
    %570 = vector.load %arg3[%c823, %c0_608] : memref<1148x128xf32, #tpu.memory_space<vmem>>, vector<1x64xf32>
    %571 = vector.broadcast %570 : vector<1x64xf32> to vector<8x64xf32>
    %572 = arith.addf %569, %571 : vector<8x64xf32>
    %cst_609 = arith.constant 0.000000e+00 : f32
    %573 = vector.broadcast %cst_609 : f32 to vector<8x64xf32>
    %574 = arith.maximumf %572, %573 : vector<8x64xf32>
    %c824 = arith.constant 824 : index
    %c0_610 = arith.constant 0 : index
    %575 = vector.load %arg3[%c824, %c0_610] : memref<1148x128xf32, #tpu.memory_space<vmem>>, vector<64x64xf32>
    %cst_611 = arith.constant dense<0.000000e+00> : vector<8x64xf32>
    %576 = tpu.matmul %574, %575, %cst_611 {dimension_numbers = #tpu.dot_dimension_numbers<[1], [0], [0], [1], [0, 0, 1, 1], [], []>} : vector<8x64xf32>, vector<64x64xf32>, vector<8x64xf32> -> vector<8x64xf32>
    %c888 = arith.constant 888 : index
    %c0_612 = arith.constant 0 : index
    %577 = vector.load %arg3[%c888, %c0_612] : memref<1148x128xf32, #tpu.memory_space<vmem>>, vector<1x64xf32>
    %578 = vector.broadcast %577 : vector<1x64xf32> to vector<8x64xf32>
    %579 = arith.addf %576, %578 : vector<8x64xf32>
    %cst_613 = arith.constant 0.000000e+00 : f32
    %580 = vector.broadcast %cst_613 : f32 to vector<8x64xf32>
    %581 = arith.maximumf %579, %580 : vector<8x64xf32>
    %c889 = arith.constant 889 : index
    %c0_614 = arith.constant 0 : index
    %582 = vector.load %arg3[%c889, %c0_614] : memref<1148x128xf32, #tpu.memory_space<vmem>>, vector<64x16xf32>
    %cst_615 = arith.constant dense<0.000000e+00> : vector<8x16xf32>
    %583 = tpu.matmul %581, %582, %cst_615 {dimension_numbers = #tpu.dot_dimension_numbers<[1], [0], [0], [1], [0, 0, 1, 1], [], []>} : vector<8x64xf32>, vector<64x16xf32>, vector<8x16xf32> -> vector<8x16xf32>
    %c953 = arith.constant 953 : index
    %c0_616 = arith.constant 0 : index
    %584 = vector.load %arg3[%c953, %c0_616] : memref<1148x128xf32, #tpu.memory_space<vmem>>, vector<1x16xf32>
    %585 = vector.broadcast %584 : vector<1x16xf32> to vector<8x16xf32>
    %586 = arith.addf %583, %585 : vector<8x16xf32>
    %587 = vector.extract_strided_slice %574 {offsets = [0, 0], sizes = [4, 64], strides = [1, 1]} : vector<8x64xf32> to vector<4x64xf32>
    %588 = vector.extract_strided_slice %574 {offsets = [4, 0], sizes = [4, 64], strides = [1, 1]} : vector<8x64xf32> to vector<4x64xf32>
    %589 = arith.subf %587, %588 : vector<4x64xf32>
    %590 = arith.mulf %589, %589 : vector<4x64xf32>
    %591 = vector.shape_cast %590 : vector<4x64xf32> to vector<1x4x64xf32>
    %cst_617 = arith.constant dense<0.000000e+00> : vector<1xf32>
    %592 = vector.multi_reduction <add>, %591, %cst_617 [1, 2] : vector<1x4x64xf32> to vector<1xf32>
    %593 = vector.shape_cast %592 : vector<1xf32> to vector<1x1x1xf32>
    %594 = vector.extract %593[0, 0, 0] : f32 from vector<1x1x1xf32>
    %cst_618 = arith.constant 2.560000e+02 : f32
    %595 = arith.divf %594, %cst_618 : f32
    %596 = vector.extract_strided_slice %586 {offsets = [0, 0], sizes = [4, 16], strides = [1, 1]} : vector<8x16xf32> to vector<4x16xf32>
    %597 = vector.extract_strided_slice %586 {offsets = [4, 0], sizes = [4, 16], strides = [1, 1]} : vector<8x16xf32> to vector<4x16xf32>
    %598 = arith.mulf %596, %596 : vector<4x16xf32>
    %cst_619 = arith.constant dense<0.000000e+00> : vector<4xf32>
    %599 = vector.multi_reduction <add>, %598, %cst_619 [1] : vector<4x16xf32> to vector<4xf32>
    %600 = vector.shape_cast %599 : vector<4xf32> to vector<4x1xf32>
    %cst_620 = arith.constant 1.000000e-16 : f32
    %601 = vector.broadcast %cst_620 : f32 to vector<4x1xf32>
    %602 = arith.maximumf %600, %601 : vector<4x1xf32>
    %603 = math.rsqrt %602 : vector<4x1xf32>
    %604 = arith.mulf %597, %597 : vector<4x16xf32>
    %cst_621 = arith.constant dense<0.000000e+00> : vector<4xf32>
    %605 = vector.multi_reduction <add>, %604, %cst_621 [1] : vector<4x16xf32> to vector<4xf32>
    %606 = vector.shape_cast %605 : vector<4xf32> to vector<4x1xf32>
    %cst_622 = arith.constant 1.000000e-16 : f32
    %607 = vector.broadcast %cst_622 : f32 to vector<4x1xf32>
    %608 = arith.maximumf %606, %607 : vector<4x1xf32>
    %609 = math.rsqrt %608 : vector<4x1xf32>
    %610 = vector.broadcast %603 : vector<4x1xf32> to vector<4x16xf32>
    %611 = arith.mulf %596, %610 : vector<4x16xf32>
    %612 = vector.broadcast %609 : vector<4x1xf32> to vector<4x16xf32>
    %613 = arith.mulf %597, %612 : vector<4x16xf32>
    %cst_623 = arith.constant dense<0.000000e+00> : vector<4x4xf32>
    %614 = tpu.matmul %611, %613, %cst_623 {dimension_numbers = #tpu.dot_dimension_numbers<[1], [1], [0], [0], [0, 0, 1, 0], [], []>} : vector<4x16xf32>, vector<4x16xf32>, vector<4x4xf32> -> vector<4x4xf32>
    %615 = tpu.iota {dimensions = array<i32: 0>} : vector<4x4xi32>
    %616 = tpu.iota {dimensions = array<i32: 1>} : vector<4x4xi32>
    %617 = arith.cmpi eq, %615, %616 : vector<4x4xi32>
    %cst_624 = arith.constant 0.000000e+00 : f32
    %618 = vector.broadcast %cst_624 : f32 to vector<4x4xf32>
    %619 = arith.select %617, %614, %618 : vector<4x4xi1>, vector<4x4xf32>
    %620 = vector.shape_cast %619 : vector<4x4xf32> to vector<1x4x4xf32>
    %cst_625 = arith.constant dense<0.000000e+00> : vector<1xf32>
    %621 = vector.multi_reduction <add>, %620, %cst_625 [1, 2] : vector<1x4x4xf32> to vector<1xf32>
    %622 = vector.shape_cast %621 : vector<1xf32> to vector<1x1x1xf32>
    %623 = vector.extract %622[0, 0, 0] : f32 from vector<1x1x1xf32>
    %cst_626 = arith.constant dense<0xFF800000> : vector<4xf32>
    %624 = vector.multi_reduction <maximumf>, %614, %cst_626 [1] : vector<4x4xf32> to vector<4xf32>
    %625 = vector.shape_cast %624 : vector<4xf32> to vector<4x1xf32>
    %626 = vector.broadcast %625 : vector<4x1xf32> to vector<4x4xf32>
    %627 = arith.subf %614, %626 : vector<4x4xf32>
    %628 = math.exp %627 : vector<4x4xf32>
    %cst_627 = arith.constant dense<0.000000e+00> : vector<4xf32>
    %629 = vector.multi_reduction <add>, %628, %cst_627 [1] : vector<4x4xf32> to vector<4xf32>
    %630 = vector.shape_cast %629 : vector<4xf32> to vector<4x1xf32>
    %631 = math.log %630 : vector<4x1xf32>
    %632 = arith.addf %625, %631 : vector<4x1xf32>
    %cst_628 = arith.constant dense<0xFF800000> : vector<4xf32>
    %633 = vector.multi_reduction <maximumf>, %614, %cst_628 [0] : vector<4x4xf32> to vector<4xf32>
    %634 = vector.shape_cast %633 : vector<4xf32> to vector<1x4xf32>
    %635 = vector.broadcast %634 : vector<1x4xf32> to vector<4x4xf32>
    %636 = arith.subf %614, %635 : vector<4x4xf32>
    %637 = math.exp %636 : vector<4x4xf32>
    %cst_629 = arith.constant dense<0.000000e+00> : vector<4xf32>
    %638 = vector.multi_reduction <add>, %637, %cst_629 [0] : vector<4x4xf32> to vector<4xf32>
    %639 = vector.shape_cast %638 : vector<4xf32> to vector<1x4xf32>
    %640 = math.log %639 : vector<1x4xf32>
    %641 = arith.addf %634, %640 : vector<1x4xf32>
    %642 = vector.shape_cast %632 : vector<4x1xf32> to vector<1x4x1xf32>
    %cst_630 = arith.constant dense<0.000000e+00> : vector<1xf32>
    %643 = vector.multi_reduction <add>, %642, %cst_630 [1, 2] : vector<1x4x1xf32> to vector<1xf32>
    %644 = vector.shape_cast %643 : vector<1xf32> to vector<1x1x1xf32>
    %645 = vector.extract %644[0, 0, 0] : f32 from vector<1x1x1xf32>
    %646 = vector.shape_cast %641 : vector<1x4xf32> to vector<1x1x4xf32>
    %cst_631 = arith.constant dense<0.000000e+00> : vector<1xf32>
    %647 = vector.multi_reduction <add>, %646, %cst_631 [1, 2] : vector<1x1x4xf32> to vector<1xf32>
    %648 = vector.shape_cast %647 : vector<1xf32> to vector<1x1x1xf32>
    %649 = vector.extract %648[0, 0, 0] : f32 from vector<1x1x1xf32>
    %650 = arith.addf %645, %649 : f32
    %cst_632 = arith.constant 2.000000e+00 : f32
    %651 = arith.mulf %cst_632, %623 : f32
    %652 = arith.subf %650, %651 : f32
    %cst_633 = arith.constant 8.000000e+00 : f32
    %653 = arith.divf %652, %cst_633 : f32
    %c954 = arith.constant 954 : index
    %c0_634 = arith.constant 0 : index
    %654 = vector.load %arg3[%c954, %c0_634] : memref<1148x128xf32, #tpu.memory_space<vmem>>, vector<64x64xf32>
    %cst_635 = arith.constant dense<0.000000e+00> : vector<4x64xf32>
    %655 = tpu.matmul %560, %654, %cst_635 {dimension_numbers = #tpu.dot_dimension_numbers<[1], [0], [0], [1], [0, 0, 1, 1], [], []>} : vector<4x64xf32>, vector<64x64xf32>, vector<4x64xf32> -> vector<4x64xf32>
    %c1018 = arith.constant 1018 : index
    %c0_636 = arith.constant 0 : index
    %656 = vector.load %arg3[%c1018, %c0_636] : memref<1148x128xf32, #tpu.memory_space<vmem>>, vector<64x64xf32>
    %cst_637 = arith.constant dense<0.000000e+00> : vector<4x64xf32>
    %657 = tpu.matmul %587, %656, %cst_637 {dimension_numbers = #tpu.dot_dimension_numbers<[1], [0], [0], [1], [0, 0, 1, 1], [], []>} : vector<4x64xf32>, vector<64x64xf32>, vector<4x64xf32> -> vector<4x64xf32>
    %658 = arith.addf %655, %657 : vector<4x64xf32>
    %c1082 = arith.constant 1082 : index
    %c0_638 = arith.constant 0 : index
    %659 = vector.load %arg3[%c1082, %c0_638] : memref<1148x128xf32, #tpu.memory_space<vmem>>, vector<1x64xf32>
    %660 = vector.broadcast %659 : vector<1x64xf32> to vector<4x64xf32>
    %661 = arith.addf %658, %660 : vector<4x64xf32>
    %cst_639 = arith.constant 0.000000e+00 : f32
    %662 = vector.broadcast %cst_639 : f32 to vector<4x64xf32>
    %663 = arith.maximumf %661, %662 : vector<4x64xf32>
    %c1083 = arith.constant 1083 : index
    %c0_640 = arith.constant 0 : index
    %664 = vector.load %arg3[%c1083, %c0_640] : memref<1148x128xf32, #tpu.memory_space<vmem>>, vector<64x3xf32>
    %cst_641 = arith.constant dense<0.000000e+00> : vector<4x3xf32>
    %665 = tpu.matmul %663, %664, %cst_641 {dimension_numbers = #tpu.dot_dimension_numbers<[1], [0], [0], [1], [0, 0, 1, 1], [], []>} : vector<4x64xf32>, vector<64x3xf32>, vector<4x3xf32> -> vector<4x3xf32>
    %c1147 = arith.constant 1147 : index
    %c0_642 = arith.constant 0 : index
    %666 = vector.load %arg3[%c1147, %c0_642] : memref<1148x128xf32, #tpu.memory_space<vmem>>, vector<1x3xf32>
    %667 = vector.broadcast %666 : vector<1x3xf32> to vector<4x3xf32>
    %668 = arith.addf %665, %667 : vector<4x3xf32>
    %669 = vector.extract_strided_slice %663 {offsets = [0, 0], sizes = [2, 64], strides = [1, 1]} : vector<4x64xf32> to vector<2x64xf32>
    %670 = vector.extract_strided_slice %663 {offsets = [2, 0], sizes = [2, 64], strides = [1, 1]} : vector<4x64xf32> to vector<2x64xf32>
    %671 = arith.mulf %669, %669 : vector<2x64xf32>
    %cst_643 = arith.constant dense<0.000000e+00> : vector<2xf32>
    %672 = vector.multi_reduction <add>, %671, %cst_643 [1] : vector<2x64xf32> to vector<2xf32>
    %673 = vector.shape_cast %672 : vector<2xf32> to vector<2x1xf32>
    %cst_644 = arith.constant 1.000000e-16 : f32
    %674 = vector.broadcast %cst_644 : f32 to vector<2x1xf32>
    %675 = arith.maximumf %673, %674 : vector<2x1xf32>
    %676 = math.rsqrt %675 : vector<2x1xf32>
    %677 = arith.mulf %670, %670 : vector<2x64xf32>
    %cst_645 = arith.constant dense<0.000000e+00> : vector<2xf32>
    %678 = vector.multi_reduction <add>, %677, %cst_645 [1] : vector<2x64xf32> to vector<2xf32>
    %679 = vector.shape_cast %678 : vector<2xf32> to vector<2x1xf32>
    %cst_646 = arith.constant 1.000000e-16 : f32
    %680 = vector.broadcast %cst_646 : f32 to vector<2x1xf32>
    %681 = arith.maximumf %679, %680 : vector<2x1xf32>
    %682 = math.rsqrt %681 : vector<2x1xf32>
    %683 = vector.broadcast %676 : vector<2x1xf32> to vector<2x64xf32>
    %684 = arith.mulf %669, %683 : vector<2x64xf32>
    %685 = vector.broadcast %682 : vector<2x1xf32> to vector<2x64xf32>
    %686 = arith.mulf %670, %685 : vector<2x64xf32>
    %cst_647 = arith.constant dense<0.000000e+00> : vector<2x2xf32>
    %687 = tpu.matmul %684, %686, %cst_647 {dimension_numbers = #tpu.dot_dimension_numbers<[1], [1], [0], [0], [0, 0, 1, 0], [], []>} : vector<2x64xf32>, vector<2x64xf32>, vector<2x2xf32> -> vector<2x2xf32>
    %cst_648 = arith.constant dense<0.000000e+00> : vector<2xf32>
    %688 = vector.multi_reduction <add>, %687, %cst_648 [1] : vector<2x2xf32> to vector<2xf32>
    %689 = vector.shape_cast %688 : vector<2xf32> to vector<2x1xf32>
    %cst_649 = arith.constant 2.000000e+00 : f32
    %690 = vector.broadcast %cst_649 : f32 to vector<2x1xf32>
    %691 = arith.divf %689, %690 : vector<2x1xf32>
    %cst_650 = arith.constant dense<0xFF800000> : vector<1xf32>
    %692 = vector.multi_reduction <maximumf>, %691, %cst_650 [0] : vector<2x1xf32> to vector<1xf32>
    %693 = vector.shape_cast %692 : vector<1xf32> to vector<1x1xf32>
    %694 = vector.broadcast %693 : vector<1x1xf32> to vector<2x1xf32>
    %695 = arith.subf %691, %694 : vector<2x1xf32>
    %696 = math.exp %695 : vector<2x1xf32>
    %cst_651 = arith.constant dense<0.000000e+00> : vector<1xf32>
    %697 = vector.multi_reduction <add>, %696, %cst_651 [0] : vector<2x1xf32> to vector<1xf32>
    %698 = vector.shape_cast %697 : vector<1xf32> to vector<1x1xf32>
    %699 = tpu.reciprocal %698 {approx = true} : vector<1x1xf32> -> vector<1x1xf32>
    %700 = vector.broadcast %699 : vector<1x1xf32> to vector<2x1xf32>
    %701 = arith.mulf %696, %700 : vector<2x1xf32>
    %cst_652 = arith.constant 0.000000e+00 : f32
    %702 = vector.broadcast %cst_652 : f32 to vector<8x128xf32>
    %c0_653 = arith.constant 0 : index
    %c0_654 = arith.constant 0 : index
    %703 = vector.load %arg4[%c0_653, %c0_654] : memref<8x128xf32, #tpu.memory_space<vmem>>, vector<8x128xf32>
    tpu.vector_store %arg4[%c0_653, %c0_654], %702 {strides = array<i32>} : memref<8x128xf32, #tpu.memory_space<vmem>>, vector<8x128xf32>,
    %c0_655 = arith.constant 0 : index
    %c0_656 = arith.constant 0 : index
    %704 = vector.load %arg4[%c0_655, %c0_656] : memref<8x128xf32, #tpu.memory_space<vmem>>, vector<4x3xf32>
    tpu.vector_store %arg4[%c0_655, %c0_656], %668 {strides = array<i32>} : memref<8x128xf32, #tpu.memory_space<vmem>>, vector<4x3xf32>,
    %c0_657 = arith.constant 0 : index
    %c64_658 = arith.constant 64 : index
    %705 = vector.load %arg4[%c0_657, %c64_658] : memref<8x128xf32, #tpu.memory_space<vmem>>, vector<2x1xf32>
    tpu.vector_store %arg4[%c0_657, %c64_658], %701 {strides = array<i32>} : memref<8x128xf32, #tpu.memory_space<vmem>>, vector<2x1xf32>,
    %706 = vector.broadcast %40 : f32 to vector<1x1xf32>
    %c0_659 = arith.constant 0 : index
    %c96 = arith.constant 96 : index
    %707 = vector.load %arg4[%c0_659, %c96] : memref<8x128xf32, #tpu.memory_space<vmem>>, vector<1x1xf32>
    tpu.vector_store %arg4[%c0_659, %c96], %706 {strides = array<i32>} : memref<8x128xf32, #tpu.memory_space<vmem>>, vector<1x1xf32>,
    %708 = vector.broadcast %653 : f32 to vector<1x1xf32>
    %c0_660 = arith.constant 0 : index
    %c97 = arith.constant 97 : index
    %709 = vector.load %arg4[%c0_660, %c97] : memref<8x128xf32, #tpu.memory_space<vmem>>, vector<1x1xf32>
    tpu.vector_store %arg4[%c0_660, %c97], %708 {strides = array<i32>} : memref<8x128xf32, #tpu.memory_space<vmem>>, vector<1x1xf32>,
    %710 = vector.broadcast %595 : f32 to vector<1x1xf32>
    %c0_661 = arith.constant 0 : index
    %c98 = arith.constant 98 : index
    %711 = vector.load %arg4[%c0_661, %c98] : memref<8x128xf32, #tpu.memory_space<vmem>>, vector<1x1xf32>
    tpu.vector_store %arg4[%c0_661, %c98], %710 {strides = array<i32>} : memref<8x128xf32, #tpu.memory_space<vmem>>, vector<1x1xf32>,
    return
  }
}

</mosaic_0001>

<llo_original>
// kernel: _lambda_.1
$region0: #{_lambda_.1}
  #allocation0 [shape = 'u32[]', space=smem, size = 0x4, offset = 0x4, fixed_abs, tag = 'smem constant byte address 0x4 - core index']
  #allocation1 [shape = 'u32[144,128]{1,0:T(1,128)}', space=vmem, size = 0x12000, scoped, tag = 'internal scratch']
  #allocation2 [shape = 'f32[64,8]{1,0:T(8,128)}', space=vmem, size = 0x8000, scoped, tag = 'scratch operand']
  #allocation3 [shape = 'f32[8,96]{1,0:T(8,128)}', space=vmem, size = 0x1000, scoped, tag = 'scratch operand']
  %s0 = inlined_call_operand.vmem [shape: s32[8,12], index: 0, kind: input, shape index: {}]
  %s1 = inlined_call_operand.vmem [shape: f32[64,8], index: 1, kind: input, shape index: {}]
  %s2 = inlined_call_operand.vmem [shape: f32[4,128], index: 2, kind: input, shape index: {}]
  %s3 = inlined_call_operand.hbm [shape: f32[1148,128], index: 3, kind: input, shape index: {}]
  %s4 = inlined_call_operand.vmem [shape: f32[8,128], index: 4, kind: output, shape index: {}]
  %s5 = sld [smem:[#allocation0]]
  $region34: #{_lambda_.1} parent=0
    _
  %s7 = ssub.s32 1, %s5
  %s8 = scalar_select 0, %s7, %s5
  $region1: #{_lambda_.1} parent=0
    #allocation4 [shape = 'u8[4096]{0}', space=smem, size = 0x1000, scoped, tag = 'input window, operand 0, single buffered']
    #allocation5 [shape = 's32[1]{0}', space=sflag, size = 0x4, scoped, tag = 'scoped memory for _lambda_.1']
    #allocation6 [shape = 's32[1]{0}', space=sflag, size = 0x4, scoped, tag = 'scoped memory for _lambda_.1']
    #allocation7 [shape = 'u8[589824]{0}', space=vmem, size = 0x90000, scoped, tag = 'input window, operand 3, single buffered']
    %9 = vsyncpa [#allocation6], 0
    %10 = vsyncpa [#allocation5], 0
    // Predicated region
    $region2: #{_lambda_.1} parent=1 // pred_check
      _
    $region3: #{_lambda_.1} parent=1 // pred_check_branch
      %12 = sbr.rel (0) target = $region5
    $region4: #{_lambda_.1} parent=1 // pred_region
      %s14 = ssub.s32 128, 128
      %15 = vsyncadd [#allocation6], %s14
      %s17 = sshll.u32 %s0, 4
      %s18 = int_to_ptr.vmem [resolvable:$true] %s17
      %20 = dma.vmem_to_smem %s18, 128, [#allocation4], [#allocation6]
    $region5: #{_lambda_.1} parent=1 // pred_fallthru
      _
    // Predicated region
    $region6: #{_lambda_.1} parent=1 // pred_check
      _
    $region7: #{_lambda_.1} parent=1 // pred_check_branch
      %22 = sbr.rel (0) target = $region9
    $region8: #{_lambda_.1} parent=1 // pred_region
      _
    $region9: #{_lambda_.1} parent=1 // pred_fallthru
      _
    // Predicated region
    $region10: #{_lambda_.1} parent=1 // pred_check
      _
    $region11: #{_lambda_.1} parent=1 // pred_check_branch
      %24 = sbr.rel (0) target = $region13
    $region12: #{_lambda_.1} parent=1 // pred_region
      _
    $region13: #{_lambda_.1} parent=1 // pred_fallthru
      _
    // Predicated region
    $region14: #{_lambda_.1} parent=1 // pred_check
      _
    $region15: #{_lambda_.1} parent=1 // pred_check_branch
      %26 = sbr.rel (0) target = $region17
    $region16: #{_lambda_.1} parent=1 // pred_region
      %s28 = ssub.s32 18432, 18432
      %29 = vsyncadd [#allocation5], %s28
      %s30 = sshll.u32 [#allocation7], 4
      %s31 = int_to_ptr.vmem [resolvable:$true] %s30
      %36 = dma.hbm_to_vmem [thread:$0]  %s3, 18432, %s31, [#allocation5], 128, 128, 8
    $region17: #{_lambda_.1} parent=1 // pred_fallthru
      _
    // Predicated region
    $region18: #{_lambda_.1} parent=1 // pred_check
      _
    $region19: #{_lambda_.1} parent=1 // pred_check_branch
      %38 = sbr.rel (0) target = $region21
    $region20: #{_lambda_.1} parent=1 // pred_region
      %39 = dma.done [#allocation6], 128
    $region21: #{_lambda_.1} parent=1 // pred_fallthru
      _
    // Predicated region
    $region22: #{_lambda_.1} parent=1 // pred_check
      _
    $region23: #{_lambda_.1} parent=1 // pred_check_branch
      %41 = sbr.rel (0) target = $region25
    $region24: #{_lambda_.1} parent=1 // pred_region
      %42 = dma.done [#allocation5], 18432
    $region25: #{_lambda_.1} parent=1 // pred_fallthru
      _
    %43 = sfence
    %v44 = vld [vmem:[%s1] sm:$0xff]
    %v45 = vld [vmem:[%s1 + $0x8] sm:$0xff]
    %v46 = vld [vmem:[%s1 + $0x10] sm:$0xff]
    %v47 = vld [vmem:[%s1 + $0x18] sm:$0xff]
    %v48 = vld [vmem:[%s1 + $0x20] sm:$0xff]
    %v49 = vld [vmem:[%s1 + $0x28] sm:$0xff]
    %v50 = vld [vmem:[%s1 + $0x30] sm:$0xff]
    %v51 = vld [vmem:[%s1 + $0x38] sm:$0xff]
    %v52 = vld [vmem:[%s2] sm:$0xf]
    %v53 = vld [vmem:[#allocation7] sm:$0xff]
    %v54 = vld [vmem:[#allocation7 + $0x8] sm:$0xff]
    %v55 = vld [vmem:[#allocation7 + $0x10] sm:$0xff]
    %v56 = vld [vmem:[#allocation7 + $0x18] sm:$0xff]
    %v57 = vld [vmem:[#allocation7 + $0x20] sm:$0xff]
    %v58 = vld [vmem:[#allocation7 + $0x28] sm:$0xff]
    %v59 = vld [vmem:[#allocation7 + $0x30] sm:$0xff]
    %v60 = vld [vmem:[#allocation7 + $0x38] sm:$0xff]
    %v61 = vld [vmem:[#allocation7 + $0x40] sm:$0xf]
    %v62 = vld [vmem:[#allocation7 + $0x44] sm:$0xff]
    %v63 = vld [vmem:[#allocation7 + $0x4c] sm:$0xff]
    %v64 = vld [vmem:[#allocation7 + $0x54] sm:$0xff]
    %v65 = vld [vmem:[#allocation7 + $0x5c] sm:$0xff]
    %v66 = vld [vmem:[#allocation7 + $0x64] sm:$0xff]
    %v67 = vld [vmem:[#allocation7 + $0x6c] sm:$0xff]
    %v68 = vld [vmem:[#allocation7 + $0x74] sm:$0xff]
    %v69 = vld [vmem:[#allocation7 + $0x7c] sm:$0xff]
    %v70 = vld [vmem:[#allocation7 + $0x84] sm:$0xff]
    %v71 = vld [vmem:[#allocation7 + $0x8c] sm:$0xff]
    %v72 = vld [vmem:[#allocation7 + $0x94] sm:$0xff]
    %v73 = vld [vmem:[#allocation7 + $0x9c] sm:$0xff]
    %v74 = vld [vmem:[#allocation7 + $0xa4] sm:$0xff]
    %v75 = vld [vmem:[#allocation7 + $0xac] sm:$0xff]
    %v76 = vld [vmem:[#allocation7 + $0xb4] sm:$0xff]
    %v77 = vld [vmem:[#allocation7 + $0xbc] sm:$0xff]
    %v78 = vld [vmem:[#allocation7 + $0xc4] sm:$0xff]
    %v79 = vld [vmem:[#allocation7 + $0xcc] sm:$0xff]
    %v80 = vld [vmem:[#allocation7 + $0xd4] sm:$0xff]
    %v81 = vld [vmem:[#allocation7 + $0xdc] sm:$0xff]
    %v82 = vld [vmem:[#allocation7 + $0xe4] sm:$0xff]
    %v83 = vld [vmem:[#allocation7 + $0xec] sm:$0xff]
    %v84 = vld [vmem:[#allocation7 + $0xf4] sm:$0xff]
    %v85 = vld [vmem:[#allocation7 + $0xfc] sm:$0xff]
    %v86 = vld [vmem:[#allocation7 + $0x104] sm:$0xff]
    %v87 = vld [vmem:[#allocation7 + $0x10c] sm:$0xff]
    %v88 = vld [vmem:[#allocation7 + $0x114] sm:$0xff]
    %v89 = vld [vmem:[#allocation7 + $0x11c] sm:$0xff]
    %v90 = vld [vmem:[#allocation7 + $0x124] sm:$0xff]
    %v91 = vld [vmem:[#allocation7 + $0x12c] sm:$0xff]
    %v92 = vld [vmem:[#allocation7 + $0x134] sm:$0xff]
    %v93 = vld [vmem:[#allocation7 + $0x13c] sm:$0xff]
    %v94 = vld [vmem:[#allocation7 + $0x144] sm:$0xff]
    %v95 = vld [vmem:[#allocation7 + $0x14c] sm:$0xff]
    %v96 = vld [vmem:[#allocation7 + $0x154] sm:$0xff]
    %v97 = vld [vmem:[#allocation7 + $0x15c] sm:$0xff]
    %v98 = vld [vmem:[#allocation7 + $0x164] sm:$0xff]
    %v99 = vld [vmem:[#allocation7 + $0x16c] sm:$0xff]
    %v100 = vld [vmem:[#allocation7 + $0x174] sm:$0xff]
    %v101 = vld [vmem:[#allocation7 + $0x17c] sm:$0xff]
    %v102 = vld [vmem:[#allocation7 + $0x184] sm:$0xff]
    %v103 = vld [vmem:[#allocation7 + $0x18c] sm:$0xff]
    %v104 = vld [vmem:[#allocation7 + $0x194] sm:$0xff]
    %v105 = vld [vmem:[#allocation7 + $0x19c] sm:$0xff]
    %v106 = vld [vmem:[#allocation7 + $0x1a4] sm:$0xff]
    %v107 = vld [vmem:[#allocation7 + $0x1ac] sm:$0xff]
    %v108 = vld [vmem:[#allocation7 + $0x1b4] sm:$0xff]
    %v109 = vld [vmem:[#allocation7 + $0x1bc] sm:$0xff]
    %v110 = vld [vmem:[#allocation7 + $0x1c4] sm:$0xff]
    %v111 = vld [vmem:[#allocation7 + $0x1cc] sm:$0xff]
    %v112 = vld [vmem:[#allocation7 + $0x1d4] sm:$0xff]
    %vm113 = vcmask 64512
    %v115 = vsel %vm113, %v44, 0
    %v118 = vsel %vm113, %v45, 0
    %v121 = vsel %vm113, %v46, 0
    %v124 = vsel %vm113, %v47, 0
    %v127 = vsel %vm113, %v48, 0
    %v130 = vsel %vm113, %v49, 0
    %v133 = vsel %vm113, %v50, 0
    %v136 = vsel %vm113, %v51, 0
    %138 = vmatprep.subr.mxu0 0.0
    %139 = vmatpush1.msra.mxu0 0.0
    %140 = vmatprep.subr.mxu0 0.0
    %141 = vmatpush1.msra.mxu0 0.0
    %142 = vmatprep.subr.mxu0 0.0
    %143 = vmatpush1.msra.mxu0 0.0
    %144 = vmatprep.subr.mxu0 0.0
    %145 = vmatpush1.msra.mxu0 0.0
    %146 = vmatprep.subr.mxu0 0.0
    %147 = vmatpush1.msra.mxu0 0.0
    %148 = vmatprep.subr.mxu0 0.0
    %149 = vmatpush1.msra.mxu0 0.0
    %150 = vmatprep.subr.mxu0 0.0
    %151 = vmatpush1.msra.mxu0 0.0
    %152 = vmatprep.subr.mxu0 0.0
    %153 = vmatpush1.msra.mxu0 0.0
    %154 = vmatprep.subr.mxu0 0.0
    %155 = vmatpush1.msra.mxu0 0.0
    %156 = vmatprep.subr.mxu0 0.0
    %157 = vmatpush1.msra.mxu0 0.0
    %158 = vmatprep.subr.mxu0 0.0
    %159 = vmatpush1.msra.mxu0 0.0
    %160 = vmatprep.subr.mxu0 0.0
    %161 = vmatpush1.msra.mxu0 0.0
    %162 = vmatprep.subr.mxu0 0.0
    %163 = vmatpush1.msra.mxu0 0.0
    %164 = vmatprep.subr.mxu0 0.0
    %165 = vmatpush1.msra.mxu0 0.0
    %166 = vmatprep.subr.mxu0 0.0
    %167 = vmatpush1.msra.mxu0 0.0
    %168 = vmatprep.subr.mxu0 0.0
    %169 = vmatpush1.msra.mxu0 %v94
    %170 = vmatprep.subr.mxu0 0.0
    %171 = vmatpush2.msra.mxu0 0.0
    %172 = vmatprep.subr.mxu0 0.0
    %173 = vmatpush2.msra.mxu0 0.0
    %174 = vmatprep.subr.mxu0 0.0
    %175 = vmatpush2.msra.mxu0 0.0
    %176 = vmatprep.subr.mxu0 0.0
    %177 = vmatpush2.msra.mxu0 0.0
    %178 = vmatprep.subr.mxu0 0.0
    %179 = vmatpush2.msra.mxu0 0.0
    %180 = vmatprep.subr.mxu0 0.0
    %181 = vmatpush2.msra.mxu0 0.0
    %182 = vmatprep.subr.mxu0 0.0
    %183 = vmatpush2.msra.mxu0 0.0
    %184 = vmatprep.subr.mxu0 0.0
    %185 = vmatpush2.msra.mxu0 0.0
    %186 = vmatprep.subr.mxu0 0.0
    %187 = vmatpush2.msra.mxu0 0.0
    %188 = vmatprep.subr.mxu0 0.0
    %189 = vmatpush2.msra.mxu0 0.0
    %190 = vmatprep.subr.mxu0 0.0
    %191 = vmatpush2.msra.mxu0 0.0
    %192 = vmatprep.subr.mxu0 0.0
    %193 = vmatpush2.msra.mxu0 0.0
    %194 = vmatprep.subr.mxu0 0.0
    %195 = vmatpush2.msra.mxu0 0.0
    %196 = vmatprep.subr.mxu0 0.0
    %197 = vmatpush2.msra.mxu0 0.0
    %198 = vmatprep.subr.mxu0 0.0
    %199 = vmatpush2.msra.mxu0 0.0
    %200 = vmatprep.subr.mxu0 0.0
    %201 = vmatpush2.msra.mxu0 0.0
    %202 = vmatprep.mubr.f32.mxu0 0.0
    %203 = vmatmul.mubr.f32.gmra.mxu0 %v115
    %v204 = vpop.f32.mrf.mxu0
    %v205 = vadd.f32 0.0, %v204
    %v206 = vpop.f32.mrf.mxu0
    %207 = vmatprep.mubr.f32.mxu0 0.0
    %208 = vmatmul.mubr.f32.gmra.mxu0 %v118
    %v209 = vpop.f32.mrf.mxu0
    %v210 = vadd.f32 0.0, %v209
    %v211 = vpop.f32.mrf.mxu0
    %212 = vmatprep.mubr.f32.mxu0 0.0
    %213 = vmatmul.mubr.f32.gmra.mxu0 %v121
    %v214 = vpop.f32.mrf.mxu0
    %v215 = vadd.f32 0.0, %v214
    %v216 = vpop.f32.mrf.mxu0
    %217 = vmatprep.mubr.f32.mxu0 0.0
    %218 = vmatmul.mubr.f32.gmra.mxu0 %v124
    %v219 = vpop.f32.mrf.mxu0
    %v220 = vadd.f32 0.0, %v219
    %v221 = vpop.f32.mrf.mxu0
    %222 = vmatprep.mubr.f32.mxu0 0.0
    %223 = vmatmul.mubr.f32.gmra.mxu0 %v127
    %v224 = vpop.f32.mrf.mxu0
    %v225 = vadd.f32 0.0, %v224
    %v226 = vpop.f32.mrf.mxu0
    %227 = vmatprep.mubr.f32.mxu0 0.0
    %228 = vmatmul.mubr.f32.gmra.mxu0 %v130
    %v229 = vpop.f32.mrf.mxu0
    %v230 = vadd.f32 0.0, %v229
    %v231 = vpop.f32.mrf.mxu0
    %232 = vmatprep.mubr.f32.mxu0 0.0
    %233 = vmatmul.mubr.f32.gmra.mxu0 %v133
    %v234 = vpop.f32.mrf.mxu0
    %v235 = vadd.f32 0.0, %v234
    %v236 = vpop.f32.mrf.mxu0
    %237 = vmatprep.mubr.f32.mxu0 0.0
    %238 = vmatmul.mubr.f32.gmra.mxu0 %v136
    %v239 = vpop.f32.mrf.mxu0
    %v240 = vadd.f32 0.0, %v239
    %v241 = vpop.f32.mrf.mxu0
    %242 = vdwg.mxu0
    %vm243 = vcmask 31744
    %v245 = vsel %vm243, %v53, 0
    %v248 = vsel %vm243, %v54, 0
    %v251 = vsel %vm243, %v55, 0
    %v254 = vsel %vm243, %v56, 0
    %v257 = vsel %vm243, %v57, 0
    %v260 = vsel %vm243, %v58, 0
    %v263 = vsel %vm243, %v59, 0
    %v266 = vsel %vm243, %v60, 0
    %vm268 = vcmask 1043456
    %v270 = vsel %vm268, %v52, 0
    %272 = vmatprep.subr.mxu0 0.0
    %273 = vmatpush1.msra.mxu0 0.0
    %274 = vmatprep.subr.mxu0 0.0
    %275 = vmatpush1.msra.mxu0 0.0
    %276 = vmatprep.subr.mxu0 0.0
    %277 = vmatpush1.msra.mxu0 0.0
    %278 = vmatprep.subr.mxu0 0.0
    %279 = vmatpush1.msra.mxu0 0.0
    %280 = vmatprep.subr.mxu0 0.0
    %281 = vmatpush1.msra.mxu0 0.0
    %282 = vmatprep.subr.mxu0 0.0
    %283 = vmatpush1.msra.mxu0 0.0
    %284 = vmatprep.subr.mxu0 0.0
    %285 = vmatpush1.msra.mxu0 0.0
    %286 = vmatprep.subr.mxu0 0.0
    %287 = vmatpush1.msra.mxu0 0.0
    %288 = vmatprep.subr.mxu0 0.0
    %289 = vmatpush1.msra.mxu0 0.0
    %290 = vmatprep.subr.mxu0 0.0
    %291 = vmatpush1.msra.mxu0 0.0
    %292 = vmatprep.subr.mxu0 0.0
    %293 = vmatpush1.msra.mxu0 0.0
    %294 = vmatprep.subr.mxu0 0.0
    %295 = vmatpush1.msra.mxu0 0.0
    %296 = vmatprep.subr.mxu0 0.0
    %297 = vmatpush1.msra.mxu0 0.0
    %298 = vmatprep.subr.mxu0 0.0
    %299 = vmatpush1.msra.mxu0 0.0
    %300 = vmatprep.subr.mxu0 0.0
    %301 = vmatpush1.msra.mxu0 0.0
    %302 = vmatprep.subr.mxu0 0.0
    %303 = vmatpush1.msra.mxu0 %v270
    %304 = vmatprep.subr.mxu0 0.0
    %305 = vmatpush2.msra.mxu0 0.0
    %306 = vmatprep.subr.mxu0 0.0
    %307 = vmatpush2.msra.mxu0 0.0
    %308 = vmatprep.subr.mxu0 0.0
    %309 = vmatpush2.msra.mxu0 0.0
    %310 = vmatprep.subr.mxu0 0.0
    %311 = vmatpush2.msra.mxu0 0.0
    %312 = vmatprep.subr.mxu0 0.0
    %313 = vmatpush2.msra.mxu0 0.0
    %314 = vmatprep.subr.mxu0 0.0
    %315 = vmatpush2.msra.mxu0 0.0
    %316 = vmatprep.subr.mxu0 0.0
    %317 = vmatpush2.msra.mxu0 0.0
    %318 = vmatprep.subr.mxu0 0.0
    %319 = vmatpush2.msra.mxu0 0.0
    %320 = vmatprep.subr.mxu0 0.0
    %321 = vmatpush2.msra.mxu0 0.0
    %322 = vmatprep.subr.mxu0 0.0
    %323 = vmatpush2.msra.mxu0 0.0
    %324 = vmatprep.subr.mxu0 0.0
    %325 = vmatpush2.msra.mxu0 0.0
    %326 = vmatprep.subr.mxu0 0.0
    %327 = vmatpush2.msra.mxu0 0.0
    %328 = vmatprep.subr.mxu0 0.0
    %329 = vmatpush2.msra.mxu0 0.0
    %330 = vmatprep.subr.mxu0 0.0
    %331 = vmatpush2.msra.mxu0 0.0
    %332 = vmatprep.subr.mxu0 0.0
    %333 = vmatpush2.msra.mxu0 0.0
    %334 = vmatprep.subr.mxu0 0.0
    %335 = vmatpush2.msra.mxu0 0.0
    %336 = vmatprep.mubr.f32.mxu0 0.0
    %337 = vmatmul.mubr.f32.gmra.mxu0 %v245
    %v338 = vpop.f32.mrf.mxu0
    %v339 = vadd.f32 0.0, %v338
    %v340 = vpop.f32.mrf.mxu0
    %341 = vmatprep.mubr.f32.mxu0 0.0
    %342 = vmatmul.mubr.f32.gmra.mxu0 %v248
    %v343 = vpop.f32.mrf.mxu0
    %v344 = vadd.f32 0.0, %v343
    %v345 = vpop.f32.mrf.mxu0
    %346 = vmatprep.mubr.f32.mxu0 0.0
    %347 = vmatmul.mubr.f32.gmra.mxu0 %v251
    %v348 = vpop.f32.mrf.mxu0
    %v349 = vadd.f32 0.0, %v348
    %v350 = vpop.f32.mrf.mxu0
    %351 = vmatprep.mubr.f32.mxu0 0.0
    %352 = vmatmul.mubr.f32.gmra.mxu0 %v254
    %v353 = vpop.f32.mrf.mxu0
    %v354 = vadd.f32 0.0, %v353
    %v355 = vpop.f32.mrf.mxu0
    %356 = vmatprep.mubr.f32.mxu0 0.0
    %357 = vmatmul.mubr.f32.gmra.mxu0 %v257
    %v358 = vpop.f32.mrf.mxu0
    %v359 = vadd.f32 0.0, %v358
    %v360 = vpop.f32.mrf.mxu0
    %361 = vmatprep.mubr.f32.mxu0 0.0
    %362 = vmatmul.mubr.f32.gmra.mxu0 %v260
    %v363 = vpop.f32.mrf.mxu0
    %v364 = vadd.f32 0.0, %v363
    %v365 = vpop.f32.mrf.mxu0
    %366 = vmatprep.mubr.f32.mxu0 0.0
    %367 = vmatmul.mubr.f32.gmra.mxu0 %v263
    %v368 = vpop.f32.mrf.mxu0
    %v369 = vadd.f32 0.0, %v368
    %v370 = vpop.f32.mrf.mxu0
    %371 = vmatprep.mubr.f32.mxu0 0.0
    %372 = vmatmul.mubr.f32.gmra.mxu0 %v266
    %v373 = vpop.f32.mrf.mxu0
    %v374 = vadd.f32 0.0, %v373
    %v375 = vpop.f32.mrf.mxu0
    %376 = vdwg.mxu0
    %v377 = vsub.f32 %v205, %v339
    %v378 = vsub.f32 %v210, %v344
    %v379 = vsub.f32 %v215, %v349
    %v380 = vsub.f32 %v220, %v354
    %v381 = vsub.f32 %v225, %v359
    %v382 = vsub.f32 %v230, %v364
    %v383 = vsub.f32 %v235, %v369
    %v384 = vsub.f32 %v240, %v374
    %v385 = vand.u32 2147483647, %v377
    %v386 = vand.u32 2147483647, %v378
    %v387 = vand.u32 2147483647, %v379
    %v388 = vand.u32 2147483647, %v380
    %v389 = vand.u32 2147483647, %v381
    %v390 = vand.u32 2147483647, %v382
    %v391 = vand.u32 2147483647, %v383
    %v392 = vand.u32 2147483647, %v384
    %393 = vmatprep.subr.mxu0 0.0
    %394 = vmatpush1.msra.mxu0 %v93
    %395 = vmatprep.subr.mxu0 0.0
    %396 = vmatpush1.msra.mxu0 %v92
    %397 = vmatprep.subr.mxu0 0.0
    %398 = vmatpush1.msra.mxu0 %v91
    %399 = vmatprep.subr.mxu0 0.0
    %400 = vmatpush1.msra.mxu0 %v90
    %401 = vmatprep.subr.mxu0 0.0
    %402 = vmatpush1.msra.mxu0 %v89
    %403 = vmatprep.subr.mxu0 0.0
    %404 = vmatpush1.msra.mxu0 %v88
    %405 = vmatprep.subr.mxu0 0.0
    %406 = vmatpush1.msra.mxu0 %v87
    %407 = vmatprep.subr.mxu0 0.0
    %408 = vmatpush1.msra.mxu0 %v86
    %409 = vmatprep.subr.mxu0 0.0
    %410 = vmatpush1.msra.mxu0 %v85
    %411 = vmatprep.subr.mxu0 0.0
    %412 = vmatpush1.msra.mxu0 %v84
    %413 = vmatprep.subr.mxu0 0.0
    %414 = vmatpush1.msra.mxu0 %v83
    %415 = vmatprep.subr.mxu0 0.0
    %416 = vmatpush1.msra.mxu0 %v82
    %417 = vmatprep.subr.mxu0 0.0
    %418 = vmatpush1.msra.mxu0 %v81
    %419 = vmatprep.subr.mxu0 0.0
    %420 = vmatpush1.msra.mxu0 %v80
    %421 = vmatprep.subr.mxu0 0.0
    %422 = vmatpush1.msra.mxu0 %v79
    %423 = vmatprep.subr.mxu0 0.0
    %424 = vmatpush1.msra.mxu0 %v78
    %425 = vmatprep.subr.mxu0 0.0
    %426 = vmatpush2.msra.mxu0 0.0
    %427 = vmatprep.subr.mxu0 0.0
    %428 = vmatpush2.msra.mxu0 0.0
    %429 = vmatprep.subr.mxu0 0.0
    %430 = vmatpush2.msra.mxu0 0.0
    %431 = vmatprep.subr.mxu0 0.0
    %432 = vmatpush2.msra.mxu0 0.0
    %433 = vmatprep.subr.mxu0 0.0
    %434 = vmatpush2.msra.mxu0 0.0
    %435 = vmatprep.subr.mxu0 0.0
    %436 = vmatpush2.msra.mxu0 0.0
    %437 = vmatprep.subr.mxu0 0.0
    %438 = vmatpush2.msra.mxu0 0.0
    %439 = vmatprep.subr.mxu0 0.0
    %440 = vmatpush2.msra.mxu0 0.0
    %441 = vmatprep.subr.mxu0 0.0
    %442 = vmatpush2.msra.mxu0 0.0
    %443 = vmatprep.subr.mxu0 0.0
    %444 = vmatpush2.msra.mxu0 0.0
    %445 = vmatprep.subr.mxu0 0.0
    %446 = vmatpush2.msra.mxu0 0.0
    %447 = vmatprep.subr.mxu0 0.0
    %448 = vmatpush2.msra.mxu0 0.0
    %449 = vmatprep.subr.mxu0 0.0
    %450 = vmatpush2.msra.mxu0 0.0
    %451 = vmatprep.subr.mxu0 0.0
    %452 = vmatpush2.msra.mxu0 0.0
    %453 = vmatprep.subr.mxu0 0.0
    %454 = vmatpush2.msra.mxu0 0.0
    %455 = vmatprep.subr.mxu0 0.0
    %456 = vmatpush2.msra.mxu0 0.0
    %457 = vmatprep.mubr.f32.mxu0 0.0
    %458 = vmatmul.mubr.f32.gmra.mxu0 %v385
    %v459 = vpop.f32.mrf.mxu0
    %v460 = vadd.f32 0.0, %v459
    %v461 = vpop.f32.mrf.mxu0
    %462 = vmatprep.mubr.f32.mxu0 0.0
    %463 = vmatmul.mubr.f32.gmra.mxu0 %v386
    %v464 = vpop.f32.mrf.mxu0
    %v465 = vadd.f32 0.0, %v464
    %v466 = vpop.f32.mrf.mxu0
    %467 = vmatprep.mubr.f32.mxu0 0.0
    %468 = vmatmul.mubr.f32.gmra.mxu0 %v387
    %v469 = vpop.f32.mrf.mxu0
    %v470 = vadd.f32 0.0, %v469
    %v471 = vpop.f32.mrf.mxu0
    %472 = vmatprep.mubr.f32.mxu0 0.0
    %473 = vmatmul.mubr.f32.gmra.mxu0 %v388
    %v474 = vpop.f32.mrf.mxu0
    %v475 = vadd.f32 0.0, %v474
    %v476 = vpop.f32.mrf.mxu0
    %477 = vmatprep.mubr.f32.mxu0 0.0
    %478 = vmatmul.mubr.f32.gmra.mxu0 %v389
    %v479 = vpop.f32.mrf.mxu0
    %v480 = vadd.f32 0.0, %v479
    %v481 = vpop.f32.mrf.mxu0
    %482 = vmatprep.mubr.f32.mxu0 0.0
    %483 = vmatmul.mubr.f32.gmra.mxu0 %v390
    %v484 = vpop.f32.mrf.mxu0
    %v485 = vadd.f32 0.0, %v484
    %v486 = vpop.f32.mrf.mxu0
    %487 = vmatprep.mubr.f32.mxu0 0.0
    %488 = vmatmul.mubr.f32.gmra.mxu0 %v391
    %v489 = vpop.f32.mrf.mxu0
    %v490 = vadd.f32 0.0, %v489
    %v491 = vpop.f32.mrf.mxu0
    %492 = vmatprep.mubr.f32.mxu0 0.0
    %493 = vmatmul.mubr.f32.gmra.mxu0 %v392
    %v494 = vpop.f32.mrf.mxu0
    %v495 = vadd.f32 0.0, %v494
    %v496 = vpop.f32.mrf.mxu0
    %497 = vdwg.mxu0
    %v498 = vmul.f32 %v377, %v377
    %v499 = vmul.f32 %v378, %v378
    %v500 = vmul.f32 %v379, %v379
    %v501 = vmul.f32 %v380, %v380
    %v502 = vmul.f32 %v381, %v381
    %v503 = vmul.f32 %v382, %v382
    %v504 = vmul.f32 %v383, %v383
    %v505 = vmul.f32 %v384, %v384
    %506 = vmatprep.subr.mxu0 0.0
    %507 = vmatpush1.msra.mxu0 %v77
    %508 = vmatprep.subr.mxu0 0.0
    %509 = vmatpush1.msra.mxu0 %v76
    %510 = vmatprep.subr.mxu0 0.0
    %511 = vmatpush1.msra.mxu0 %v75
    %512 = vmatprep.subr.mxu0 0.0
    %513 = vmatpush1.msra.mxu0 %v74
    %514 = vmatprep.subr.mxu0 0.0
    %515 = vmatpush1.msra.mxu0 %v73
    %516 = vmatprep.subr.mxu0 0.0
    %517 = vmatpush1.msra.mxu0 %v72
    %518 = vmatprep.subr.mxu0 0.0
    %519 = vmatpush1.msra.mxu0 %v71
    %520 = vmatprep.subr.mxu0 0.0
    %521 = vmatpush1.msra.mxu0 %v70
    %522 = vmatprep.subr.mxu0 0.0
    %523 = vmatpush1.msra.mxu0 %v69
    %524 = vmatprep.subr.mxu0 0.0
    %525 = vmatpush1.msra.mxu0 %v68
    %526 = vmatprep.subr.mxu0 0.0
    %527 = vmatpush1.msra.mxu0 %v67
    %528 = vmatprep.subr.mxu0 0.0
    %529 = vmatpush1.msra.mxu0 %v66
    %530 = vmatprep.subr.mxu0 0.0
    %531 = vmatpush1.msra.mxu0 %v65
    %532 = vmatprep.subr.mxu0 0.0
    %533 = vmatpush1.msra.mxu0 %v64
    %534 = vmatprep.subr.mxu0 0.0
    %535 = vmatpush1.msra.mxu0 %v63
    %536 = vmatprep.subr.mxu0 0.0
    %537 = vmatpush1.msra.mxu0 %v62
    %538 = vmatprep.subr.mxu0 0.0
    %539 = vmatpush2.msra.mxu0 0.0
    %540 = vmatprep.subr.mxu0 0.0
    %541 = vmatpush2.msra.mxu0 0.0
    %542 = vmatprep.subr.mxu0 0.0
    %543 = vmatpush2.msra.mxu0 0.0
    %544 = vmatprep.subr.mxu0 0.0
    %545 = vmatpush2.msra.mxu0 0.0
    %546 = vmatprep.subr.mxu0 0.0
    %547 = vmatpush2.msra.mxu0 0.0
    %548 = vmatprep.subr.mxu0 0.0
    %549 = vmatpush2.msra.mxu0 0.0
    %550 = vmatprep.subr.mxu0 0.0
    %551 = vmatpush2.msra.mxu0 0.0
    %552 = vmatprep.subr.mxu0 0.0
    %553 = vmatpush2.msra.mxu0 0.0
    %554 = vmatprep.subr.mxu0 0.0
    %555 = vmatpush2.msra.mxu0 0.0
    %556 = vmatprep.subr.mxu0 0.0
    %557 = vmatpush2.msra.mxu0 0.0
    %558 = vmatprep.subr.mxu0 0.0
    %559 = vmatpush2.msra.mxu0 0.0
    %560 = vmatprep.subr.mxu0 0.0
    %561 = vmatpush2.msra.mxu0 0.0
    %562 = vmatprep.subr.mxu0 0.0
    %563 = vmatpush2.msra.mxu0 0.0
    %564 = vmatprep.subr.mxu0 0.0
    %565 = vmatpush2.msra.mxu0 0.0
    %566 = vmatprep.subr.mxu0 0.0
    %567 = vmatpush2.msra.mxu0 0.0
    %568 = vmatprep.subr.mxu0 0.0
    %569 = vmatpush2.msra.mxu0 0.0
    %570 = vmatprep.mubr.f32.mxu0 0.0
    %571 = vmatmul.mubr.f32.gmra.mxu0 %v498
    %v572 = vpop.f32.mrf.mxu0
    %v573 = vadd.f32 0.0, %v572
    %v574 = vpop.f32.mrf.mxu0
    %575 = vmatprep.mubr.f32.mxu0 0.0
    %576 = vmatmul.mubr.f32.gmra.mxu0 %v499
    %v577 = vpop.f32.mrf.mxu0
    %v578 = vadd.f32 0.0, %v577
    %v579 = vpop.f32.mrf.mxu0
    %580 = vmatprep.mubr.f32.mxu0 0.0
    %581 = vmatmul.mubr.f32.gmra.mxu0 %v500
    %v582 = vpop.f32.mrf.mxu0
    %v583 = vadd.f32 0.0, %v582
    %v584 = vpop.f32.mrf.mxu0
    %585 = vmatprep.mubr.f32.mxu0 0.0
    %586 = vmatmul.mubr.f32.gmra.mxu0 %v501
    %v587 = vpop.f32.mrf.mxu0
    %v588 = vadd.f32 0.0, %v587
    %v589 = vpop.f32.mrf.mxu0
    %590 = vmatprep.mubr.f32.mxu0 0.0
    %591 = vmatmul.mubr.f32.gmra.mxu0 %v502
    %v592 = vpop.f32.mrf.mxu0
    %v593 = vadd.f32 0.0, %v592
    %v594 = vpop.f32.mrf.mxu0
    %595 = vmatprep.mubr.f32.mxu0 0.0
    %596 = vmatmul.mubr.f32.gmra.mxu0 %v503
    %v597 = vpop.f32.mrf.mxu0
    %v598 = vadd.f32 0.0, %v597
    %v599 = vpop.f32.mrf.mxu0
    %600 = vmatprep.mubr.f32.mxu0 0.0
    %601 = vmatmul.mubr.f32.gmra.mxu0 %v504
    %v602 = vpop.f32.mrf.mxu0
    %v603 = vadd.f32 0.0, %v602
    %v604 = vpop.f32.mrf.mxu0
    %605 = vmatprep.mubr.f32.mxu0 0.0
    %606 = vmatmul.mubr.f32.gmra.mxu0 %v505
    %v607 = vpop.f32.mrf.mxu0
    %v608 = vadd.f32 0.0, %v607
    %v609 = vpop.f32.mrf.mxu0
    %610 = vdwg.mxu0
    %v611 = vmax.f32 %v460, 0.0
    %v612 = vmax.f32 %v465, 0.0
    %v613 = vmax.f32 %v470, 0.0
    %v614 = vmax.f32 %v475, 0.0
    %v615 = vmax.f32 %v480, 0.0
    %v616 = vmax.f32 %v485, 0.0
    %v617 = vmax.f32 %v490, 0.0
    %v618 = vmax.f32 %v495, 0.0
    %v619 = vsub.f32 0.0, %v611
    %v620 = vsub.f32 0.0, %v612
    %v621 = vsub.f32 0.0, %v613
    %v622 = vsub.f32 0.0, %v614
    %v623 = vsub.f32 0.0, %v615
    %v624 = vsub.f32 0.0, %v616
    %v625 = vsub.f32 0.0, %v617
    %v626 = vsub.f32 0.0, %v618
    %v627 = vmul.f32 %v619, 1.442695
    %v628 = vpow.pop %v627
    %v629 = vmul.f32 %v620, 1.442695
    %v630 = vpow.pop %v629
    %v631 = vmul.f32 %v621, 1.442695
    %v632 = vpow.pop %v631
    %v633 = vmul.f32 %v622, 1.442695
    %v634 = vpow.pop %v633
    %v635 = vmul.f32 %v623, 1.442695
    %v636 = vpow.pop %v635
    %v637 = vmul.f32 %v624, 1.442695
    %v638 = vpow.pop %v637
    %v639 = vmul.f32 %v625, 1.442695
    %v640 = vpow.pop %v639
    %v641 = vmul.f32 %v626, 1.442695
    %v642 = vpow.pop %v641
    %vm643 = vcmask 523264
    %v645 = vsel %vm643, %v61, 0
    %647 = vmatprep.subr.mxu0 0.0
    %648 = vmatpush1.msra.mxu0 0.0
    %649 = vmatprep.subr.mxu0 0.0
    %650 = vmatpush1.msra.mxu0 0.0
    %651 = vmatprep.subr.mxu0 0.0
    %652 = vmatpush1.msra.mxu0 0.0
    %653 = vmatprep.subr.mxu0 0.0
    %654 = vmatpush1.msra.mxu0 0.0
    %655 = vmatprep.subr.mxu0 0.0
    %656 = vmatpush1.msra.mxu0 0.0
    %657 = vmatprep.subr.mxu0 0.0
    %658 = vmatpush1.msra.mxu0 0.0
    %659 = vmatprep.subr.mxu0 0.0
    %660 = vmatpush1.msra.mxu0 0.0
    %661 = vmatprep.subr.mxu0 0.0
    %662 = vmatpush1.msra.mxu0 0.0
    %663 = vmatprep.subr.mxu0 0.0
    %664 = vmatpush1.msra.mxu0 %v642
    %665 = vmatprep.subr.mxu0 0.0
    %666 = vmatpush1.msra.mxu0 %v640
    %667 = vmatprep.subr.mxu0 0.0
    %668 = vmatpush1.msra.mxu0 %v638
    %669 = vmatprep.subr.mxu0 0.0
    %670 = vmatpush1.msra.mxu0 %v636
    %671 = vmatprep.subr.mxu0 0.0
    %672 = vmatpush1.msra.mxu0 %v634
    %673 = vmatprep.subr.mxu0 0.0
    %674 = vmatpush1.msra.mxu0 %v632
    %675 = vmatprep.subr.mxu0 0.0
    %676 = vmatpush1.msra.mxu0 %v630
    %677 = vmatprep.subr.mxu0 0.0
    %678 = vmatpush1.msra.mxu0 %v628
    %679 = vmatprep.subr.mxu0 0.0
    %680 = vmatpush2.msra.mxu0 0.0
    %681 = vmatprep.subr.mxu0 0.0
    %682 = vmatpush2.msra.mxu0 0.0
    %683 = vmatprep.subr.mxu0 0.0
    %684 = vmatpush2.msra.mxu0 0.0
    %685 = vmatprep.subr.mxu0 0.0
    %686 = vmatpush2.msra.mxu0 0.0
    %687 = vmatprep.subr.mxu0 0.0
    %688 = vmatpush2.msra.mxu0 0.0
    %689 = vmatprep.subr.mxu0 0.0
    %690 = vmatpush2.msra.mxu0 0.0
    %691 = vmatprep.subr.mxu0 0.0
    %692 = vmatpush2.msra.mxu0 0.0
    %693 = vmatprep.subr.mxu0 0.0
    %694 = vmatpush2.msra.mxu0 0.0
    %695 = vmatprep.subr.mxu0 0.0
    %696 = vmatpush2.msra.mxu0 0.0
    %697 = vmatprep.subr.mxu0 0.0
    %698 = vmatpush2.msra.mxu0 0.0
    %699 = vmatprep.subr.mxu0 0.0
    %700 = vmatpush2.msra.mxu0 0.0
    %701 = vmatprep.subr.mxu0 0.0
    %702 = vmatpush2.msra.mxu0 0.0
    %703 = vmatprep.subr.mxu0 0.0
    %704 = vmatpush2.msra.mxu0 0.0
    %705 = vmatprep.subr.mxu0 0.0
    %706 = vmatpush2.msra.mxu0 0.0
    %707 = vmatprep.subr.mxu0 0.0
    %708 = vmatpush2.msra.mxu0 0.0
    %709 = vmatprep.subr.mxu0 0.0
    %710 = vmatpush2.msra.mxu0 0.0
    %711 = vmatprep.mubr.f32.mxu0 0.0
    %712 = vmatmul.mubr.f32.gmra.mxu0 %v645
    %v713 = vpop.f32.mrf.mxu0
    %v714 = vadd.f32 0.0, %v713
    %v715 = vpop.f32.mrf.mxu0
    %716 = vdwg.mxu0
    %v718 = vsel %vm268, %v714, 0
    %720 = vmatprep.subr.mxu0 0.0
    %721 = vmatpush1.msra.mxu0 0.0
    %722 = vmatprep.subr.mxu0 0.0
    %723 = vmatpush1.msra.mxu0 0.0
    %724 = vmatprep.subr.mxu0 0.0
    %725 = vmatpush1.msra.mxu0 0.0
    %726 = vmatprep.subr.mxu0 0.0
    %727 = vmatpush1.msra.mxu0 0.0
    %728 = vmatprep.subr.mxu0 0.0
    %729 = vmatpush1.msra.mxu0 0.0
    %730 = vmatprep.subr.mxu0 0.0
    %731 = vmatpush1.msra.mxu0 0.0
    %732 = vmatprep.subr.mxu0 0.0
    %733 = vmatpush1.msra.mxu0 0.0
    %734 = vmatprep.subr.mxu0 0.0
    %735 = vmatpush1.msra.mxu0 0.0
    %736 = vmatprep.subr.mxu0 0.0
    %737 = vmatpush1.msra.mxu0 0.0
    %738 = vmatprep.subr.mxu0 0.0
    %739 = vmatpush1.msra.mxu0 0.0
    %740 = vmatprep.subr.mxu0 0.0
    %741 = vmatpush1.msra.mxu0 0.0
    %742 = vmatprep.subr.mxu0 0.0
    %743 = vmatpush1.msra.mxu0 0.0
    %744 = vmatprep.subr.mxu0 0.0
    %745 = vmatpush1.msra.mxu0 0.0
    %746 = vmatprep.subr.mxu0 0.0
    %747 = vmatpush1.msra.mxu0 0.0
    %748 = vmatprep.subr.mxu0 0.0
    %749 = vmatpush1.msra.mxu0 0.0
    %750 = vmatprep.subr.mxu0 0.0
    %751 = vmatpush1.msra.mxu0 %v718
    %752 = vmatprep.subr.mxu0 0.0
    %753 = vmatpush2.msra.mxu0 0.0
    %754 = vmatprep.subr.mxu0 0.0
    %755 = vmatpush2.msra.mxu0 0.0
    %756 = vmatprep.subr.mxu0 0.0
    %757 = vmatpush2.msra.mxu0 0.0
    %758 = vmatprep.subr.mxu0 0.0
    %759 = vmatpush2.msra.mxu0 0.0
    %760 = vmatprep.subr.mxu0 0.0
    %761 = vmatpush2.msra.mxu0 0.0
    %762 = vmatprep.subr.mxu0 0.0
    %763 = vmatpush2.msra.mxu0 0.0
    %764 = vmatprep.subr.mxu0 0.0
    %765 = vmatpush2.msra.mxu0 0.0
    %766 = vmatprep.subr.mxu0 0.0
    %767 = vmatpush2.msra.mxu0 0.0
    %768 = vmatprep.subr.mxu0 0.0
    %769 = vmatpush2.msra.mxu0 0.0
    %770 = vmatprep.subr.mxu0 0.0
    %771 = vmatpush2.msra.mxu0 0.0
    %772 = vmatprep.subr.mxu0 0.0
    %773 = vmatpush2.msra.mxu0 0.0
    %774 = vmatprep.subr.mxu0 0.0
    %775 = vmatpush2.msra.mxu0 0.0
    %776 = vmatprep.subr.mxu0 0.0
    %777 = vmatpush2.msra.mxu0 0.0
    %778 = vmatprep.subr.mxu0 0.0
    %779 = vmatpush2.msra.mxu0 0.0
    %780 = vmatprep.subr.mxu0 0.0
    %781 = vmatpush2.msra.mxu0 0.0
    %782 = vmatprep.subr.mxu0 0.0
    %783 = vmatpush2.msra.mxu0 0.0
    %784 = vmatprep.mubr.f32.mxu0 0.0
    %785 = vmatmul.mubr.f32.gmra.mxu0 %v245
    %v786 = vpop.f32.mrf.mxu0
    %v787 = vadd.f32 0.0, %v786
    %v788 = vpop.f32.mrf.mxu0
    %789 = vmatprep.mubr.f32.mxu0 0.0
    %790 = vmatmul.mubr.f32.gmra.mxu0 %v248
    %v791 = vpop.f32.mrf.mxu0
    %v792 = vadd.f32 0.0, %v791
    %v793 = vpop.f32.mrf.mxu0
    %794 = vmatprep.mubr.f32.mxu0 0.0
    %795 = vmatmul.mubr.f32.gmra.mxu0 %v251
    %v796 = vpop.f32.mrf.mxu0
    %v797 = vadd.f32 0.0, %v796
    %v798 = vpop.f32.mrf.mxu0
    %799 = vmatprep.mubr.f32.mxu0 0.0
    %800 = vmatmul.mubr.f32.gmra.mxu0 %v254
    %v801 = vpop.f32.mrf.mxu0
    %v802 = vadd.f32 0.0, %v801
    %v803 = vpop.f32.mrf.mxu0
    %804 = vmatprep.mubr.f32.mxu0 0.0
    %805 = vmatmul.mubr.f32.gmra.mxu0 %v257
    %v806 = vpop.f32.mrf.mxu0
    %v807 = vadd.f32 0.0, %v806
    %v808 = vpop.f32.mrf.mxu0
    %809 = vmatprep.mubr.f32.mxu0 0.0
    %810 = vmatmul.mubr.f32.gmra.mxu0 %v260
    %v811 = vpop.f32.mrf.mxu0
    %v812 = vadd.f32 0.0, %v811
    %v813 = vpop.f32.mrf.mxu0
    %814 = vmatprep.mubr.f32.mxu0 0.0
    %815 = vmatmul.mubr.f32.gmra.mxu0 %v263
    %v816 = vpop.f32.mrf.mxu0
    %v817 = vadd.f32 0.0, %v816
    %v818 = vpop.f32.mrf.mxu0
    %819 = vmatprep.mubr.f32.mxu0 0.0
    %820 = vmatmul.mubr.f32.gmra.mxu0 %v266
    %v821 = vpop.f32.mrf.mxu0
    %v822 = vadd.f32 0.0, %v821
    %v823 = vpop.f32.mrf.mxu0
    %824 = vdwg.mxu0
    %v825 = vrcp.pop %v787
    %v826 = vrcp.pop %v792
    %v827 = vrcp.pop %v797
    %v828 = vrcp.pop %v802
    %v829 = vrcp.pop %v807
    %v830 = vrcp.pop %v812
    %v831 = vrcp.pop %v817
    %v832 = vrcp.pop %v822
    %v833 = vmul.f32 %v628, %v825
    %v834 = vmul.f32 %v630, %v826
    %v835 = vmul.f32 %v632, %v827
    %v836 = vmul.f32 %v634, %v828
    %v837 = vmul.f32 %v636, %v829
    %v838 = vmul.f32 %v638, %v830
    %v839 = vmul.f32 %v640, %v831
    %v840 = vmul.f32 %v642, %v832
    %v841 = vmul.f32 %v833, %v833
    %v842 = vmul.f32 %v834, %v834
    %v843 = vmul.f32 %v835, %v835
    %v844 = vmul.f32 %v836, %v836
    %v845 = vmul.f32 %v837, %v837
    %v846 = vmul.f32 %v838, %v838
    %v847 = vmul.f32 %v839, %v839
    %v848 = vmul.f32 %v840, %v840
    %vm849 = vcmask 130048
    %v850 = vsel %vm849, %v841, 0.0
    %v851 = vsel %vm849, %v842, 0.0
    %v852 = vadd.f32 %v850, %v851
    %v853 = vsel %vm849, %v843, 0.0
    %v854 = vadd.f32 %v852, %v853
    %v855 = vsel %vm849, %v844, 0.0
    %v856 = vadd.f32 %v854, %v855
    %v857 = vsel %vm849, %v845, 0.0
    %v858 = vadd.f32 %v856, %v857
    %v859 = vsel %vm849, %v846, 0.0
    %v860 = vadd.f32 %v858, %v859
    %v861 = vsel %vm849, %v847, 0.0
    %v862 = vadd.f32 %v860, %v861
    %v863 = vsel %vm849, %v848, 0.0
    %v864 = vadd.f32 %v862, %v863
    %865 = vadd.xlane.f32.xlu0 %v864
    %v866 = vpop.xlane.xlu0 %865
    %v867 = vrot.slane %v866, 4
    %v868 = vadd.f32 %v866, %v867
    %v869 = vrot.slane %v868, 2
    %v870 = vadd.f32 %v868, %v869
    %v871 = vrot.slane %v870, 1
    %v872 = vadd.f32 %v870, %v871
    %s873 = vtos %v872
    %v874 = vrcp.pop 4.0
    %s875 = vtos %v874
    %s876 = smul.f32 %s873, %s875
    %877 = vmatprep.subr.mxu0 0.0
    %878 = vmatpush1.msra.mxu0 0.0
    %879 = vmatprep.subr.mxu0 0.0
    %880 = vmatpush1.msra.mxu0 0.0
    %881 = vmatprep.subr.mxu0 0.0
    %882 = vmatpush1.msra.mxu0 0.0
    %883 = vmatprep.subr.mxu0 0.0
    %884 = vmatpush1.msra.mxu0 0.0
    %885 = vmatprep.subr.mxu0 0.0
    %886 = vmatpush1.msra.mxu0 0.0
    %887 = vmatprep.subr.mxu0 0.0
    %888 = vmatpush1.msra.mxu0 0.0
    %889 = vmatprep.subr.mxu0 0.0
    %890 = vmatpush1.msra.mxu0 0.0
    %891 = vmatprep.subr.mxu0 0.0
    %892 = vmatpush1.msra.mxu0 0.0
    %893 = vmatprep.subr.mxu0 0.0
    %894 = vmatpush1.msra.mxu0 %v840
    %895 = vmatprep.subr.mxu0 0.0
    %896 = vmatpush1.msra.mxu0 %v839
    %897 = vmatprep.subr.mxu0 0.0
    %898 = vmatpush1.msra.mxu0 %v838
    %899 = vmatprep.subr.mxu0 0.0
    %900 = vmatpush1.msra.mxu0 %v837
    %901 = vmatprep.subr.mxu0 0.0
    %902 = vmatpush1.msra.mxu0 %v836
    %903 = vmatprep.subr.mxu0 0.0
    %904 = vmatpush1.msra.mxu0 %v835
    %905 = vmatprep.subr.mxu0 0.0
    %906 = vmatpush1.msra.mxu0 %v834
    %907 = vmatprep.subr.mxu0 0.0
    %908 = vmatpush1.msra.mxu0 %v833
    %909 = vmatprep.subr.mxu0 0.0
    %910 = vmatpush2.msra.mxu0 0.0
    %911 = vmatprep.subr.mxu0 0.0
    %912 = vmatpush2.msra.mxu0 0.0
    %913 = vmatprep.subr.mxu0 0.0
    %914 = vmatpush2.msra.mxu0 0.0
    %915 = vmatprep.subr.mxu0 0.0
    %916 = vmatpush2.msra.mxu0 0.0
    %917 = vmatprep.subr.mxu0 0.0
    %918 = vmatpush2.msra.mxu0 0.0
    %919 = vmatprep.subr.mxu0 0.0
    %920 = vmatpush2.msra.mxu0 0.0
    %921 = vmatprep.subr.mxu0 0.0
    %922 = vmatpush2.msra.mxu0 0.0
    %923 = vmatprep.subr.mxu0 0.0
    %924 = vmatpush2.msra.mxu0 0.0
    %925 = vmatprep.subr.mxu0 0.0
    %926 = vmatpush2.msra.mxu0 0.0
    %927 = vmatprep.subr.mxu0 0.0
    %928 = vmatpush2.msra.mxu0 0.0
    %929 = vmatprep.subr.mxu0 0.0
    %930 = vmatpush2.msra.mxu0 0.0
    %931 = vmatprep.subr.mxu0 0.0
    %932 = vmatpush2.msra.mxu0 0.0
    %933 = vmatprep.subr.mxu0 0.0
    %934 = vmatpush2.msra.mxu0 0.0
    %935 = vmatprep.subr.mxu0 0.0
    %936 = vmatpush2.msra.mxu0 0.0
    %937 = vmatprep.subr.mxu0 0.0
    %938 = vmatpush2.msra.mxu0 0.0
    %939 = vmatprep.subr.mxu0 0.0
    %940 = vmatpush2.msra.mxu0 0.0
    %941 = vmatprep.mubr.f32.mxu0 0.0
    %942 = vmatmul.mubr.f32.gmra.mxu0 %v645
    %v943 = vpop.f32.mrf.mxu0
    %v944 = vadd.f32 0.0, %v943
    %v945 = vpop.f32.mrf.mxu0
    %946 = vdwg.mxu0
    %947 = vmatprep.subr.mxu0 0.0
    %948 = vmatpush1.msra.mxu0 0.0
    %949 = vmatprep.subr.mxu0 0.0
    %950 = vmatpush1.msra.mxu0 0.0
    %951 = vmatprep.subr.mxu0 0.0
    %952 = vmatpush1.msra.mxu0 0.0
    %953 = vmatprep.subr.mxu0 0.0
    %954 = vmatpush1.msra.mxu0 0.0
    %955 = vmatprep.subr.mxu0 0.0
    %956 = vmatpush1.msra.mxu0 0.0
    %957 = vmatprep.subr.mxu0 0.0
    %958 = vmatpush1.msra.mxu0 0.0
    %959 = vmatprep.subr.mxu0 0.0
    %960 = vmatpush1.msra.mxu0 0.0
    %961 = vmatprep.subr.mxu0 0.0
    %962 = vmatpush1.msra.mxu0 0.0
    %963 = vmatprep.subr.mxu0 0.0
    %964 = vmatpush1.msra.mxu0 %v608
    %965 = vmatprep.subr.mxu0 0.0
    %966 = vmatpush1.msra.mxu0 %v603
    %967 = vmatprep.subr.mxu0 0.0
    %968 = vmatpush1.msra.mxu0 %v598
    %969 = vmatprep.subr.mxu0 0.0
    %970 = vmatpush1.msra.mxu0 %v593
    %971 = vmatprep.subr.mxu0 0.0
    %972 = vmatpush1.msra.mxu0 %v588
    %973 = vmatprep.subr.mxu0 0.0
    %974 = vmatpush1.msra.mxu0 %v583
    %975 = vmatprep.subr.mxu0 0.0
    %976 = vmatpush1.msra.mxu0 %v578
    %977 = vmatprep.subr.mxu0 0.0
    %978 = vmatpush1.msra.mxu0 %v573
    %979 = vmatprep.subr.mxu0 0.0
    %980 = vmatpush2.msra.mxu0 0.0
    %981 = vmatprep.subr.mxu0 0.0
    %982 = vmatpush2.msra.mxu0 0.0
    %983 = vmatprep.subr.mxu0 0.0
    %984 = vmatpush2.msra.mxu0 0.0
    %985 = vmatprep.subr.mxu0 0.0
    %986 = vmatpush2.msra.mxu0 0.0
    %987 = vmatprep.subr.mxu0 0.0
    %988 = vmatpush2.msra.mxu0 0.0
    %989 = vmatprep.subr.mxu0 0.0
    %990 = vmatpush2.msra.mxu0 0.0
    %991 = vmatprep.subr.mxu0 0.0
    %992 = vmatpush2.msra.mxu0 0.0
    %993 = vmatprep.subr.mxu0 0.0
    %994 = vmatpush2.msra.mxu0 0.0
    %995 = vmatprep.subr.mxu0 0.0
    %996 = vmatpush2.msra.mxu0 0.0
    %997 = vmatprep.subr.mxu0 0.0
    %998 = vmatpush2.msra.mxu0 0.0
    %999 = vmatprep.subr.mxu0 0.0
    %1000 = vmatpush2.msra.mxu0 0.0
    %1001 = vmatprep.subr.mxu0 0.0
    %1002 = vmatpush2.msra.mxu0 0.0
    %1003 = vmatprep.subr.mxu0 0.0
    %1004 = vmatpush2.msra.mxu0 0.0
    %1005 = vmatprep.subr.mxu0 0.0
    %1006 = vmatpush2.msra.mxu0 0.0
    %1007 = vmatprep.subr.mxu0 0.0
    %1008 = vmatpush2.msra.mxu0 0.0
    %1009 = vmatprep.subr.mxu0 0.0
    %1010 = vmatpush2.msra.mxu0 0.0
    %1011 = vmatprep.mubr.f32.mxu0 0.0
    %1012 = vmatmul.mubr.f32.gmra.mxu0 %v645
    %v1013 = vpop.f32.mrf.mxu0
    %v1014 = vadd.f32 0.0, %v1013
    %v1015 = vpop.f32.mrf.mxu0
    %1016 = vdwg.mxu0
    %v1017 = vmul.f32 %v944, %v1014
    %vm1018 = vcmask 125952
    %v1019 = vsel %vm1018, %v1017, 0.0
    %1020 = vadd.xlane.f32.xlu0 %v1019
    %v1021 = vpop.xlane.xlu0 %1020
    %v1022 = vrot.slane %v1021, 4
    %v1023 = vadd.f32 %v1021, %v1022
    %v1024 = vrot.slane %v1023, 2
    %v1025 = vadd.f32 %v1023, %v1024
    %v1026 = vrot.slane %v1025, 1
    %v1027 = vadd.f32 %v1025, %v1026
    %s1028 = vtos %v1027
    %s1029 = smul.f32 %s1028, 0.001
    %s1030 = sadd.f32 %s876, %s1029
    %v1032 = vsel %vm268, %v944, 0
    %1034 = vmatprep.subr.mxu0 0.0
    %1035 = vmatpush1.msra.mxu0 0.0
    %1036 = vmatprep.subr.mxu0 0.0
    %1037 = vmatpush1.msra.mxu0 0.0
    %1038 = vmatprep.subr.mxu0 0.0
    %1039 = vmatpush1.msra.mxu0 0.0
    %1040 = vmatprep.subr.mxu0 0.0
    %1041 = vmatpush1.msra.mxu0 0.0
    %1042 = vmatprep.subr.mxu0 0.0
    %1043 = vmatpush1.msra.mxu0 0.0
    %1044 = vmatprep.subr.mxu0 0.0
    %1045 = vmatpush1.msra.mxu0 0.0
    %1046 = vmatprep.subr.mxu0 0.0
    %1047 = vmatpush1.msra.mxu0 0.0
    %1048 = vmatprep.subr.mxu0 0.0
    %1049 = vmatpush1.msra.mxu0 0.0
    %1050 = vmatprep.subr.mxu0 0.0
    %1051 = vmatpush1.msra.mxu0 0.0
    %1052 = vmatprep.subr.mxu0 0.0
    %1053 = vmatpush1.msra.mxu0 0.0
    %1054 = vmatprep.subr.mxu0 0.0
    %1055 = vmatpush1.msra.mxu0 0.0
    %1056 = vmatprep.subr.mxu0 0.0
    %1057 = vmatpush1.msra.mxu0 0.0
    %1058 = vmatprep.subr.mxu0 0.0
    %1059 = vmatpush1.msra.mxu0 0.0
    %1060 = vmatprep.subr.mxu0 0.0
    %1061 = vmatpush1.msra.mxu0 0.0
    %1062 = vmatprep.subr.mxu0 0.0
    %1063 = vmatpush1.msra.mxu0 0.0
    %1064 = vmatprep.subr.mxu0 0.0
    %1065 = vmatpush1.msra.mxu0 %v1032
    %1066 = vmatprep.subr.mxu0 0.0
    %1067 = vmatpush2.msra.mxu0 0.0
    %1068 = vmatprep.subr.mxu0 0.0
    %1069 = vmatpush2.msra.mxu0 0.0
    %1070 = vmatprep.subr.mxu0 0.0
    %1071 = vmatpush2.msra.mxu0 0.0
    %1072 = vmatprep.subr.mxu0 0.0
    %1073 = vmatpush2.msra.mxu0 0.0
    %1074 = vmatprep.subr.mxu0 0.0
    %1075 = vmatpush2.msra.mxu0 0.0
    %1076 = vmatprep.subr.mxu0 0.0
    %1077 = vmatpush2.msra.mxu0 0.0
    %1078 = vmatprep.subr.mxu0 0.0
    %1079 = vmatpush2.msra.mxu0 0.0
    %1080 = vmatprep.subr.mxu0 0.0
    %1081 = vmatpush2.msra.mxu0 0.0
    %1082 = vmatprep.subr.mxu0 0.0
    %1083 = vmatpush2.msra.mxu0 0.0
    %1084 = vmatprep.subr.mxu0 0.0
    %1085 = vmatpush2.msra.mxu0 0.0
    %1086 = vmatprep.subr.mxu0 0.0
    %1087 = vmatpush2.msra.mxu0 0.0
    %1088 = vmatprep.subr.mxu0 0.0
    %1089 = vmatpush2.msra.mxu0 0.0
    %1090 = vmatprep.subr.mxu0 0.0
    %1091 = vmatpush2.msra.mxu0 0.0
    %1092 = vmatprep.subr.mxu0 0.0
    %1093 = vmatpush2.msra.mxu0 0.0
    %1094 = vmatprep.subr.mxu0 0.0
    %1095 = vmatpush2.msra.mxu0 0.0
    %1096 = vmatprep.subr.mxu0 0.0
    %1097 = vmatpush2.msra.mxu0 0.0
    %1098 = vmatprep.mubr.f32.mxu0 0.0
    %1099 = vmatmul.mubr.f32.gmra.mxu0 %v245
    %v1100 = vpop.f32.mrf.mxu0
    %v1101 = vadd.f32 0.0, %v1100
    %v1102 = vpop.f32.mrf.mxu0
    %1103 = vmatprep.mubr.f32.mxu0 0.0
    %1104 = vmatmul.mubr.f32.gmra.mxu0 %v248
    %v1105 = vpop.f32.mrf.mxu0
    %v1106 = vadd.f32 0.0, %v1105
    %v1107 = vpop.f32.mrf.mxu0
    %1108 = vmatprep.mubr.f32.mxu0 0.0
    %1109 = vmatmul.mubr.f32.gmra.mxu0 %v251
    %v1110 = vpop.f32.mrf.mxu0
    %v1111 = vadd.f32 0.0, %v1110
    %v1112 = vpop.f32.mrf.mxu0
    %1113 = vmatprep.mubr.f32.mxu0 0.0
    %1114 = vmatmul.mubr.f32.gmra.mxu0 %v254
    %v1115 = vpop.f32.mrf.mxu0
    %v1116 = vadd.f32 0.0, %v1115
    %v1117 = vpop.f32.mrf.mxu0
    %1118 = vmatprep.mubr.f32.mxu0 0.0
    %1119 = vmatmul.mubr.f32.gmra.mxu0 %v257
    %v1120 = vpop.f32.mrf.mxu0
    %v1121 = vadd.f32 0.0, %v1120
    %v1122 = vpop.f32.mrf.mxu0
    %1123 = vmatprep.mubr.f32.mxu0 0.0
    %1124 = vmatmul.mubr.f32.gmra.mxu0 %v260
    %v1125 = vpop.f32.mrf.mxu0
    %v1126 = vadd.f32 0.0, %v1125
    %v1127 = vpop.f32.mrf.mxu0
    %1128 = vmatprep.mubr.f32.mxu0 0.0
    %1129 = vmatmul.mubr.f32.gmra.mxu0 %v263
    %v1130 = vpop.f32.mrf.mxu0
    %v1131 = vadd.f32 0.0, %v1130
    %v1132 = vpop.f32.mrf.mxu0
    %1133 = vmatprep.mubr.f32.mxu0 0.0
    %1134 = vmatmul.mubr.f32.gmra.mxu0 %v266
    %v1135 = vpop.f32.mrf.mxu0
    %v1136 = vadd.f32 0.0, %v1135
    %v1137 = vpop.f32.mrf.mxu0
    %1138 = vdwg.mxu0
    %v1139 = vmul.f32 %v97, %v1101
    %v1140 = vmul.f32 %v98, %v1106
    %v1141 = vmul.f32 %v99, %v1111
    %v1142 = vmul.f32 %v100, %v1116
    %v1143 = vmul.f32 %v101, %v1121
    %v1144 = vmul.f32 %v102, %v1126
    %v1145 = vmul.f32 %v103, %v1131
    %v1146 = vmul.f32 %v104, %v1136
    %v1147 = vsub.f32 %v1139, %v833
    %v1148 = vsub.f32 %v1140, %v834
    %v1149 = vsub.f32 %v1141, %v835
    %v1150 = vsub.f32 %v1142, %v836
    %v1151 = vsub.f32 %v1143, %v837
    %v1152 = vsub.f32 %v1144, %v838
    %v1153 = vsub.f32 %v1145, %v839
    %v1154 = vsub.f32 %v1146, %v840
    %v1155 = vsub.f32 %v1147, %v97
    %v1156 = vsub.f32 %v1148, %v98
    %v1157 = vsub.f32 %v1149, %v99
    %v1158 = vsub.f32 %v1150, %v100
    %v1159 = vsub.f32 %v1151, %v101
    %v1160 = vsub.f32 %v1152, %v102
    %v1161 = vsub.f32 %v1153, %v103
    %v1162 = vsub.f32 %v1154, %v104
    %v1163 = vmul.f32 %v1155, 2.0
    %v1164 = vmul.f32 %v1156, 2.0
    %v1165 = vmul.f32 %v1157, 2.0
    %v1166 = vmul.f32 %v1158, 2.0
    %v1167 = vmul.f32 %v1159, 2.0
    %v1168 = vmul.f32 %v1160, 2.0
    %v1169 = vmul.f32 %v1161, 2.0
    %v1170 = vmul.f32 %v1162, 2.0
    %v1171 = vmul.f32 %v1163, %v1155
    %v1172 = vmul.f32 %v1164, %v1156
    %v1173 = vmul.f32 %v1165, %v1157
    %v1174 = vmul.f32 %v1166, %v1158
    %v1175 = vmul.f32 %v1167, %v1159
    %v1176 = vmul.f32 %v1168, %v1160
    %v1177 = vmul.f32 %v1169, %v1161
    %v1178 = vmul.f32 %v1170, %v1162
    %v1179 = vsub.f32 %v1171, %v97
    %v1180 = vsub.f32 %v1172, %v98
    %v1181 = vsub.f32 %v1173, %v99
    %v1182 = vsub.f32 %v1174, %v100
    %v1183 = vsub.f32 %v1175, %v101
    %v1184 = vsub.f32 %v1176, %v102
    %v1185 = vsub.f32 %v1177, %v103
    %v1186 = vsub.f32 %v1178, %v104
    %v1187 = vld [vmem:[#allocation7 + $0x1dc] sm:$0xff]
    %v1189 = vsel %vm849, %v1155, 0
    %v1192 = vsel %vm849, %v1156, 0
    %v1195 = vsel %vm849, %v1157, 0
    %v1198 = vsel %vm849, %v1158, 0
    %v1201 = vsel %vm849, %v1159, 0
    %v1204 = vsel %vm849, %v1160, 0
    %v1207 = vsel %vm849, %v1161, 0
    %v1210 = vsel %vm849, %v1162, 0
    %1212 = vmatprep.subr.mxu0 0.0
    %1213 = vmatpush1.msra.mxu0 0.0
    %1214 = vmatprep.subr.mxu0 0.0
    %1215 = vmatpush1.msra.mxu0 0.0
    %1216 = vmatprep.subr.mxu0 0.0
    %1217 = vmatpush1.msra.mxu0 0.0
    %1218 = vmatprep.subr.mxu0 0.0
    %1219 = vmatpush1.msra.mxu0 0.0
    %1220 = vmatprep.subr.mxu0 0.0
    %1221 = vmatpush1.msra.mxu0 0.0
    %1222 = vmatprep.subr.mxu0 0.0
    %1223 = vmatpush1.msra.mxu0 0.0
    %1224 = vmatprep.subr.mxu0 0.0
    %1225 = vmatpush1.msra.mxu0 0.0
    %1226 = vmatprep.subr.mxu0 0.0
    %1227 = vmatpush1.msra.mxu0 0.0
    %1228 = vmatprep.subr.mxu0 0.0
    %1229 = vmatpush1.msra.mxu0 0.0
    %1230 = vmatprep.subr.mxu0 0.0
    %1231 = vmatpush1.msra.mxu0 0.0
    %1232 = vmatprep.subr.mxu0 0.0
    %1233 = vmatpush1.msra.mxu0 0.0
    %1234 = vmatprep.subr.mxu0 0.0
    %1235 = vmatpush1.msra.mxu0 0.0
    %1236 = vmatprep.subr.mxu0 0.0
    %1237 = vmatpush1.msra.mxu0 0.0
    %1238 = vmatprep.subr.mxu0 0.0
    %1239 = vmatpush1.msra.mxu0 0.0
    %1240 = vmatprep.subr.mxu0 0.0
    %1241 = vmatpush1.msra.mxu0 %v96
    %1242 = vmatprep.subr.mxu0 0.0
    %1243 = vmatpush1.msra.mxu0 %v95
    %1244 = vmatprep.subr.mxu0 0.0
    %1245 = vmatpush2.msra.mxu0 0.0
    %1246 = vmatprep.subr.mxu0 0.0
    %1247 = vmatpush2.msra.mxu0 0.0
    %1248 = vmatprep.subr.mxu0 0.0
    %1249 = vmatpush2.msra.mxu0 0.0
    %1250 = vmatprep.subr.mxu0 0.0
    %1251 = vmatpush2.msra.mxu0 0.0
    %1252 = vmatprep.subr.mxu0 0.0
    %1253 = vmatpush2.msra.mxu0 0.0
    %1254 = vmatprep.subr.mxu0 0.0
    %1255 = vmatpush2.msra.mxu0 0.0
    %1256 = vmatprep.subr.mxu0 0.0
    %1257 = vmatpush2.msra.mxu0 0.0
    %1258 = vmatprep.subr.mxu0 0.0
    %1259 = vmatpush2.msra.mxu0 0.0
    %1260 = vmatprep.subr.mxu0 0.0
    %1261 = vmatpush2.msra.mxu0 0.0
    %1262 = vmatprep.subr.mxu0 0.0
    %1263 = vmatpush2.msra.mxu0 0.0
    %1264 = vmatprep.subr.mxu0 0.0
    %1265 = vmatpush2.msra.mxu0 0.0
    %1266 = vmatprep.subr.mxu0 0.0
    %1267 = vmatpush2.msra.mxu0 0.0
    %1268 = vmatprep.subr.mxu0 0.0
    %1269 = vmatpush2.msra.mxu0 0.0
    %1270 = vmatprep.subr.mxu0 0.0
    %1271 = vmatpush2.msra.mxu0 0.0
    %1272 = vmatprep.subr.mxu0 0.0
    %1273 = vmatpush2.msra.mxu0 0.0
    %1274 = vmatprep.subr.mxu0 0.0
    %1275 = vmatpush2.msra.mxu0 0.0
    %1276 = vmatprep.mubr.f32.mxu0 0.0
    %1277 = vmatmul.mubr.f32.gmra.mxu0 %v1189
    %v1278 = vpop.f32.mrf.mxu0
    %v1279 = vadd.f32 0.0, %v1278
    %v1280 = vpop.f32.mrf.mxu0
    %1281 = vmatprep.mubr.f32.mxu0 0.0
    %1282 = vmatmul.mubr.f32.gmra.mxu0 %v1192
    %v1283 = vpop.f32.mrf.mxu0
    %v1284 = vadd.f32 0.0, %v1283
    %v1285 = vpop.f32.mrf.mxu0
    %1286 = vmatprep.mubr.f32.mxu0 0.0
    %1287 = vmatmul.mubr.f32.gmra.mxu0 %v1195
    %v1288 = vpop.f32.mrf.mxu0
    %v1289 = vadd.f32 0.0, %v1288
    %v1290 = vpop.f32.mrf.mxu0
    %1291 = vmatprep.mubr.f32.mxu0 0.0
    %1292 = vmatmul.mubr.f32.gmra.mxu0 %v1198
    %v1293 = vpop.f32.mrf.mxu0
    %v1294 = vadd.f32 0.0, %v1293
    %v1295 = vpop.f32.mrf.mxu0
    %1296 = vmatprep.mubr.f32.mxu0 0.0
    %1297 = vmatmul.mubr.f32.gmra.mxu0 %v1201
    %v1298 = vpop.f32.mrf.mxu0
    %v1299 = vadd.f32 0.0, %v1298
    %v1300 = vpop.f32.mrf.mxu0
    %1301 = vmatprep.mubr.f32.mxu0 0.0
    %1302 = vmatmul.mubr.f32.gmra.mxu0 %v1204
    %v1303 = vpop.f32.mrf.mxu0
    %v1304 = vadd.f32 0.0, %v1303
    %v1305 = vpop.f32.mrf.mxu0
    %1306 = vmatprep.mubr.f32.mxu0 0.0
    %1307 = vmatmul.mubr.f32.gmra.mxu0 %v1207
    %v1308 = vpop.f32.mrf.mxu0
    %v1309 = vadd.f32 0.0, %v1308
    %v1310 = vpop.f32.mrf.mxu0
    %1311 = vmatprep.mubr.f32.mxu0 0.0
    %1312 = vmatmul.mubr.f32.gmra.mxu0 %v1210
    %v1313 = vpop.f32.mrf.mxu0
    %v1314 = vadd.f32 0.0, %v1313
    %v1315 = vpop.f32.mrf.mxu0
    %1316 = vdwg.mxu0
    %v1317 = vmul.f32 %v1279, %v105
    %v1318 = vmul.f32 %v1284, %v106
    %v1319 = vmul.f32 %v1289, %v107
    %v1320 = vmul.f32 %v1294, %v108
    %v1321 = vmul.f32 %v1299, %v109
    %v1322 = vmul.f32 %v1304, %v110
    %v1323 = vmul.f32 %v1309, %v111
    %v1324 = vmul.f32 %v1314, %v112
    %v1326 = vsel %vm643, %v1317, 0
    %v1329 = vsel %vm643, %v1318, 0
    %v1332 = vsel %vm643, %v1319, 0
    %v1335 = vsel %vm643, %v1320, 0
    %v1338 = vsel %vm643, %v1321, 0
    %v1341 = vsel %vm643, %v1322, 0
    %v1344 = vsel %vm643, %v1323, 0
    %v1347 = vsel %vm643, %v1324, 0
    %1349 = vmatprep.subr.mxu0 0.0
    %1350 = vmatpush1.msra.mxu0 0.0
    %1351 = vmatprep.subr.mxu0 0.0
    %1352 = vmatpush1.msra.mxu0 0.0
    %1353 = vmatprep.subr.mxu0 0.0
    %1354 = vmatpush1.msra.mxu0 0.0
    %1355 = vmatprep.subr.mxu0 0.0
    %1356 = vmatpush1.msra.mxu0 0.0
    %1357 = vmatprep.subr.mxu0 0.0
    %1358 = vmatpush1.msra.mxu0 0.0
    %1359 = vmatprep.subr.mxu0 0.0
    %1360 = vmatpush1.msra.mxu0 0.0
    %1361 = vmatprep.subr.mxu0 0.0
    %1362 = vmatpush1.msra.mxu0 0.0
    %1363 = vmatprep.subr.mxu0 0.0
    %1364 = vmatpush1.msra.mxu0 0.0
    %1365 = vmatprep.subr.mxu0 0.0
    %1366 = vmatpush1.msra.mxu0 %v51
    %1367 = vmatprep.subr.mxu0 0.0
    %1368 = vmatpush1.msra.mxu0 %v50
    %1369 = vmatprep.subr.mxu0 0.0
    %1370 = vmatpush1.msra.mxu0 %v49
    %1371 = vmatprep.subr.mxu0 0.0
    %1372 = vmatpush1.msra.mxu0 %v48
    %1373 = vmatprep.subr.mxu0 0.0
    %1374 = vmatpush1.msra.mxu0 %v47
    %1375 = vmatprep.subr.mxu0 0.0
    %1376 = vmatpush1.msra.mxu0 %v46
    %1377 = vmatprep.subr.mxu0 0.0
    %1378 = vmatpush1.msra.mxu0 %v45
    %1379 = vmatprep.subr.mxu0 0.0
    %1380 = vmatpush1.msra.mxu0 %v44
    %1381 = vmatprep.subr.mxu0 0.0
    %1382 = vmatpush2.msra.mxu0 0.0
    %1383 = vmatprep.subr.mxu0 0.0
    %1384 = vmatpush2.msra.mxu0 0.0
    %1385 = vmatprep.subr.mxu0 0.0
    %1386 = vmatpush2.msra.mxu0 0.0
    %1387 = vmatprep.subr.mxu0 0.0
    %1388 = vmatpush2.msra.mxu0 0.0
    %1389 = vmatprep.subr.mxu0 0.0
    %1390 = vmatpush2.msra.mxu0 0.0
    %1391 = vmatprep.subr.mxu0 0.0
    %1392 = vmatpush2.msra.mxu0 0.0
    %1393 = vmatprep.subr.mxu0 0.0
    %1394 = vmatpush2.msra.mxu0 0.0
    %1395 = vmatprep.subr.mxu0 0.0
    %1396 = vmatpush2.msra.mxu0 0.0
    %1397 = vmatprep.subr.mxu0 0.0
    %1398 = vmatpush2.msra.mxu0 0.0
    %1399 = vmatprep.subr.mxu0 0.0
    %1400 = vmatpush2.msra.mxu0 0.0
    %1401 = vmatprep.subr.mxu0 0.0
    %1402 = vmatpush2.msra.mxu0 0.0
    %1403 = vmatprep.subr.mxu0 0.0
    %1404 = vmatpush2.msra.mxu0 0.0
    %1405 = vmatprep.subr.mxu0 0.0
    %1406 = vmatpush2.msra.mxu0 0.0
    %1407 = vmatprep.subr.mxu0 0.0
    %1408 = vmatpush2.msra.mxu0 0.0
    %1409 = vmatprep.subr.mxu0 0.0
    %1410 = vmatpush2.msra.mxu0 0.0
    %1411 = vmatprep.subr.mxu0 0.0
    %1412 = vmatpush2.msra.mxu0 0.0
    %1413 = vmatprep.mubr.f32.mxu0 0.0
    %1414 = vmatmul.mubr.f32.gmra.mxu0 %v1326
    %v1415 = vpop.f32.mrf.mxu0
    %v1416 = vadd.f32 0.0, %v1415
    %v1417 = vpop.f32.mrf.mxu0
    %1418 = vmatprep.mubr.f32.mxu0 0.0
    %1419 = vmatmul.mubr.f32.gmra.mxu0 %v1329
    %v1420 = vpop.f32.mrf.mxu0
    %v1421 = vadd.f32 0.0, %v1420
    %v1422 = vpop.f32.mrf.mxu0
    %1423 = vmatprep.mubr.f32.mxu0 0.0
    %1424 = vmatmul.mubr.f32.gmra.mxu0 %v1332
    %v1425 = vpop.f32.mrf.mxu0
    %v1426 = vadd.f32 0.0, %v1425
    %v1427 = vpop.f32.mrf.mxu0
    %1428 = vmatprep.mubr.f32.mxu0 0.0
    %1429 = vmatmul.mubr.f32.gmra.mxu0 %v1335
    %v1430 = vpop.f32.mrf.mxu0
    %v1431 = vadd.f32 0.0, %v1430
    %v1432 = vpop.f32.mrf.mxu0
    %1433 = vmatprep.mubr.f32.mxu0 0.0
    %1434 = vmatmul.mubr.f32.gmra.mxu0 %v1338
    %v1435 = vpop.f32.mrf.mxu0
    %v1436 = vadd.f32 0.0, %v1435
    %v1437 = vpop.f32.mrf.mxu0
    %1438 = vmatprep.mubr.f32.mxu0 0.0
    %1439 = vmatmul.mubr.f32.gmra.mxu0 %v1341
    %v1440 = vpop.f32.mrf.mxu0
    %v1441 = vadd.f32 0.0, %v1440
    %v1442 = vpop.f32.mrf.mxu0
    %1443 = vmatprep.mubr.f32.mxu0 0.0
    %1444 = vmatmul.mubr.f32.gmra.mxu0 %v1344
    %v1445 = vpop.f32.mrf.mxu0
    %v1446 = vadd.f32 0.0, %v1445
    %v1447 = vpop.f32.mrf.mxu0
    %1448 = vmatprep.mubr.f32.mxu0 0.0
    %1449 = vmatmul.mubr.f32.gmra.mxu0 %v1347
    %v1450 = vpop.f32.mrf.mxu0
    %v1451 = vadd.f32 0.0, %v1450
    %v1452 = vpop.f32.mrf.mxu0
    %1453 = vdwg.mxu0
    %v1454 = vld [vmem:[#allocation7 + $0x1e4] sm:$0xff]
    %v1456 = vsel %vm113, %v1416, 0
    %v1459 = vsel %vm113, %v1421, 0
    %v1462 = vsel %vm113, %v1426, 0
    %v1465 = vsel %vm113, %v1431, 0
    %v1468 = vsel %vm113, %v1436, 0
    %v1471 = vsel %vm113, %v1441, 0
    %v1474 = vsel %vm113, %v1446, 0
    %v1477 = vsel %vm113, %v1451, 0
    %1479 = vmatprep.subr.mxu0 0.0
    %1480 = vmatpush1.msra.mxu0 0.0
    %1481 = vmatprep.subr.mxu0 0.0
    %1482 = vmatpush1.msra.mxu0 0.0
    %1483 = vmatprep.subr.mxu0 0.0
    %1484 = vmatpush1.msra.mxu0 0.0
    %1485 = vmatprep.subr.mxu0 0.0
    %1486 = vmatpush1.msra.mxu0 0.0
    %1487 = vmatprep.subr.mxu0 0.0
    %1488 = vmatpush1.msra.mxu0 0.0
    %1489 = vmatprep.subr.mxu0 0.0
    %1490 = vmatpush1.msra.mxu0 0.0
    %1491 = vmatprep.subr.mxu0 0.0
    %1492 = vmatpush1.msra.mxu0 0.0
    %1493 = vmatprep.subr.mxu0 0.0
    %1494 = vmatpush1.msra.mxu0 0.0
    %1495 = vmatprep.subr.mxu0 0.0
    %1496 = vmatpush1.msra.mxu0 0.0
    %1497 = vmatprep.subr.mxu0 0.0
    %1498 = vmatpush1.msra.mxu0 0.0
    %1499 = vmatprep.subr.mxu0 0.0
    %1500 = vmatpush1.msra.mxu0 0.0
    %1501 = vmatprep.subr.mxu0 0.0
    %1502 = vmatpush1.msra.mxu0 0.0
    %1503 = vmatprep.subr.mxu0 0.0
    %1504 = vmatpush1.msra.mxu0 0.0
    %1505 = vmatprep.subr.mxu0 0.0
    %1506 = vmatpush1.msra.mxu0 0.0
    %1507 = vmatprep.subr.mxu0 0.0
    %1508 = vmatpush1.msra.mxu0 0.0
    %1509 = vmatprep.subr.mxu0 0.0
    %1510 = vmatpush1.msra.mxu0 %v1454
    %1511 = vmatprep.subr.mxu0 0.0
    %1512 = vmatpush2.msra.mxu0 0.0
    %1513 = vmatprep.subr.mxu0 0.0
    %1514 = vmatpush2.msra.mxu0 0.0
    %1515 = vmatprep.subr.mxu0 0.0
    %1516 = vmatpush2.msra.mxu0 0.0
    %1517 = vmatprep.subr.mxu0 0.0
    %1518 = vmatpush2.msra.mxu0 0.0
    %1519 = vmatprep.subr.mxu0 0.0
    %1520 = vmatpush2.msra.mxu0 0.0
    %1521 = vmatprep.subr.mxu0 0.0
    %1522 = vmatpush2.msra.mxu0 0.0
    %1523 = vmatprep.subr.mxu0 0.0
    %1524 = vmatpush2.msra.mxu0 0.0
    %1525 = vmatprep.subr.mxu0 0.0
    %1526 = vmatpush2.msra.mxu0 0.0
    %1527 = vmatprep.subr.mxu0 0.0
    %1528 = vmatpush2.msra.mxu0 0.0
    %1529 = vmatprep.subr.mxu0 0.0
    %1530 = vmatpush2.msra.mxu0 0.0
    %1531 = vmatprep.subr.mxu0 0.0
    %1532 = vmatpush2.msra.mxu0 0.0
    %1533 = vmatprep.subr.mxu0 0.0
    %1534 = vmatpush2.msra.mxu0 0.0
    %1535 = vmatprep.subr.mxu0 0.0
    %1536 = vmatpush2.msra.mxu0 0.0
    %1537 = vmatprep.subr.mxu0 0.0
    %1538 = vmatpush2.msra.mxu0 0.0
    %1539 = vmatprep.subr.mxu0 0.0
    %1540 = vmatpush2.msra.mxu0 0.0
    %1541 = vmatprep.subr.mxu0 0.0
    %1542 = vmatpush2.msra.mxu0 0.0
    %1543 = vmatprep.mubr.f32.mxu0 0.0
    %1544 = vmatmul.mubr.f32.gmra.mxu0 %v1456
    %v1545 = vpop.f32.mrf.mxu0
    %v1546 = vadd.f32 0.0, %v1545
    %v1547 = vpop.f32.mrf.mxu0
    %1548 = vmatprep.mubr.f32.mxu0 0.0
    %1549 = vmatmul.mubr.f32.gmra.mxu0 %v1459
    %v1550 = vpop.f32.mrf.mxu0
    %v1551 = vadd.f32 0.0, %v1550
    %v1552 = vpop.f32.mrf.mxu0
    %1553 = vmatprep.mubr.f32.mxu0 0.0
    %1554 = vmatmul.mubr.f32.gmra.mxu0 %v1462
    %v1555 = vpop.f32.mrf.mxu0
    %v1556 = vadd.f32 0.0, %v1555
    %v1557 = vpop.f32.mrf.mxu0
    %1558 = vmatprep.mubr.f32.mxu0 0.0
    %1559 = vmatmul.mubr.f32.gmra.mxu0 %v1465
    %v1560 = vpop.f32.mrf.mxu0
    %v1561 = vadd.f32 0.0, %v1560
    %v1562 = vpop.f32.mrf.mxu0
    %1563 = vmatprep.mubr.f32.mxu0 0.0
    %1564 = vmatmul.mubr.f32.gmra.mxu0 %v1468
    %v1565 = vpop.f32.mrf.mxu0
    %v1566 = vadd.f32 0.0, %v1565
    %v1567 = vpop.f32.mrf.mxu0
    %1568 = vmatprep.mubr.f32.mxu0 0.0
    %1569 = vmatmul.mubr.f32.gmra.mxu0 %v1471
    %v1570 = vpop.f32.mrf.mxu0
    %v1571 = vadd.f32 0.0, %v1570
    %v1572 = vpop.f32.mrf.mxu0
    %1573 = vmatprep.mubr.f32.mxu0 0.0
    %1574 = vmatmul.mubr.f32.gmra.mxu0 %v1474
    %v1575 = vpop.f32.mrf.mxu0
    %v1576 = vadd.f32 0.0, %v1575
    %v1577 = vpop.f32.mrf.mxu0
    %1578 = vmatprep.mubr.f32.mxu0 0.0
    %1579 = vmatmul.mubr.f32.gmra.mxu0 %v1477
    %v1580 = vpop.f32.mrf.mxu0
    %v1581 = vadd.f32 0.0, %v1580
    %v1582 = vpop.f32.mrf.mxu0
    %1583 = vdwg.mxu0
    %1584 = vmatprep.subr.mxu0 0.0
    %1585 = vmatpush1.msra.mxu0 0.0
    %1586 = vmatprep.subr.mxu0 0.0
    %1587 = vmatpush1.msra.mxu0 0.0
    %1588 = vmatprep.subr.mxu0 0.0
    %1589 = vmatpush1.msra.mxu0 0.0
    %1590 = vmatprep.subr.mxu0 0.0
    %1591 = vmatpush1.msra.mxu0 0.0
    %1592 = vmatprep.subr.mxu0 0.0
    %1593 = vmatpush1.msra.mxu0 0.0
    %1594 = vmatprep.subr.mxu0 0.0
    %1595 = vmatpush1.msra.mxu0 0.0
    %1596 = vmatprep.subr.mxu0 0.0
    %1597 = vmatpush1.msra.mxu0 0.0
    %1598 = vmatprep.subr.mxu0 0.0
    %1599 = vmatpush1.msra.mxu0 0.0
    %1600 = vmatprep.subr.mxu0 0.0
    %1601 = vmatpush1.msra.mxu0 0.0
    %1602 = vmatprep.subr.mxu0 0.0
    %1603 = vmatpush1.msra.mxu0 0.0
    %1604 = vmatprep.subr.mxu0 0.0
    %1605 = vmatpush1.msra.mxu0 0.0
    %1606 = vmatprep.subr.mxu0 0.0
    %1607 = vmatpush1.msra.mxu0 0.0
    %1608 = vmatprep.subr.mxu0 0.0
    %1609 = vmatpush1.msra.mxu0 0.0
    %1610 = vmatprep.subr.mxu0 0.0
    %1611 = vmatpush1.msra.mxu0 0.0
    %1612 = vmatprep.subr.mxu0 0.0
    %1613 = vmatpush1.msra.mxu0 0.0
    %1614 = vmatprep.subr.mxu0 0.0
    %1615 = vmatpush1.msra.mxu0 %v1187
    %1616 = vmatprep.subr.mxu0 0.0
    %1617 = vmatpush2.msra.mxu0 0.0
    %1618 = vmatprep.subr.mxu0 0.0
    %1619 = vmatpush2.msra.mxu0 0.0
    %1620 = vmatprep.subr.mxu0 0.0
    %1621 = vmatpush2.msra.mxu0 0.0
    %1622 = vmatprep.subr.mxu0 0.0
    %1623 = vmatpush2.msra.mxu0 0.0
    %1624 = vmatprep.subr.mxu0 0.0
    %1625 = vmatpush2.msra.mxu0 0.0
    %1626 = vmatprep.subr.mxu0 0.0
    %1627 = vmatpush2.msra.mxu0 0.0
    %1628 = vmatprep.subr.mxu0 0.0
    %1629 = vmatpush2.msra.mxu0 0.0
    %1630 = vmatprep.subr.mxu0 0.0
    %1631 = vmatpush2.msra.mxu0 0.0
    %1632 = vmatprep.subr.mxu0 0.0
    %1633 = vmatpush2.msra.mxu0 0.0
    %1634 = vmatprep.subr.mxu0 0.0
    %1635 = vmatpush2.msra.mxu0 0.0
    %1636 = vmatprep.subr.mxu0 0.0
    %1637 = vmatpush2.msra.mxu0 0.0
    %1638 = vmatprep.subr.mxu0 0.0
    %1639 = vmatpush2.msra.mxu0 0.0
    %1640 = vmatprep.subr.mxu0 0.0
    %1641 = vmatpush2.msra.mxu0 0.0
    %1642 = vmatprep.subr.mxu0 0.0
    %1643 = vmatpush2.msra.mxu0 0.0
    %1644 = vmatprep.subr.mxu0 0.0
    %1645 = vmatpush2.msra.mxu0 0.0
    %1646 = vmatprep.subr.mxu0 0.0
    %1647 = vmatpush2.msra.mxu0 0.0
    %1648 = vmatprep.mubr.f32.mxu0 0.0
    %1649 = vmatmul.mubr.f32.gmra.mxu0 %v115
    %v1650 = vpop.f32.mrf.mxu0
    %v1651 = vadd.f32 %v1546, %v1650
    %v1652 = vpop.f32.mrf.mxu0
    %1653 = vmatprep.mubr.f32.mxu0 0.0
    %1654 = vmatmul.mubr.f32.gmra.mxu0 %v118
    %v1655 = vpop.f32.mrf.mxu0
    %v1656 = vadd.f32 %v1551, %v1655
    %v1657 = vpop.f32.mrf.mxu0
    %1658 = vmatprep.mubr.f32.mxu0 0.0
    %1659 = vmatmul.mubr.f32.gmra.mxu0 %v121
    %v1660 = vpop.f32.mrf.mxu0
    %v1661 = vadd.f32 %v1556, %v1660
    %v1662 = vpop.f32.mrf.mxu0
    %1663 = vmatprep.mubr.f32.mxu0 0.0
    %1664 = vmatmul.mubr.f32.gmra.mxu0 %v124
    %v1665 = vpop.f32.mrf.mxu0
    %v1666 = vadd.f32 %v1561, %v1665
    %v1667 = vpop.f32.mrf.mxu0
    %1668 = vmatprep.mubr.f32.mxu0 0.0
    %1669 = vmatmul.mubr.f32.gmra.mxu0 %v127
    %v1670 = vpop.f32.mrf.mxu0
    %v1671 = vadd.f32 %v1566, %v1670
    %v1672 = vpop.f32.mrf.mxu0
    %1673 = vmatprep.mubr.f32.mxu0 0.0
    %1674 = vmatmul.mubr.f32.gmra.mxu0 %v130
    %v1675 = vpop.f32.mrf.mxu0
    %v1676 = vadd.f32 %v1571, %v1675
    %v1677 = vpop.f32.mrf.mxu0
    %1678 = vmatprep.mubr.f32.mxu0 0.0
    %1679 = vmatmul.mubr.f32.gmra.mxu0 %v133
    %v1680 = vpop.f32.mrf.mxu0
    %v1681 = vadd.f32 %v1576, %v1680
    %v1682 = vpop.f32.mrf.mxu0
    %1683 = vmatprep.mubr.f32.mxu0 0.0
    %1684 = vmatmul.mubr.f32.gmra.mxu0 %v136
    %v1685 = vpop.f32.mrf.mxu0
    %v1686 = vadd.f32 %v1581, %v1685
    %v1687 = vpop.f32.mrf.mxu0
    %1688 = vdwg.mxu0
    %v1690 = vsel %vm849, %v1179, 0
    %v1693 = vsel %vm849, %v1180, 0
    %v1696 = vsel %vm849, %v1181, 0
    %v1699 = vsel %vm849, %v1182, 0
    %v1702 = vsel %vm849, %v1183, 0
    %v1705 = vsel %vm849, %v1184, 0
    %v1708 = vsel %vm849, %v1185, 0
    %v1711 = vsel %vm849, %v1186, 0
    %1713 = vmatprep.subr.mxu0 0.0
    %1714 = vmatpush1.msra.mxu0 0.0
    %1715 = vmatprep.subr.mxu0 0.0
    %1716 = vmatpush1.msra.mxu0 0.0
    %1717 = vmatprep.subr.mxu0 0.0
    %1718 = vmatpush1.msra.mxu0 0.0
    %1719 = vmatprep.subr.mxu0 0.0
    %1720 = vmatpush1.msra.mxu0 0.0
    %1721 = vmatprep.subr.mxu0 0.0
    %1722 = vmatpush1.msra.mxu0 0.0
    %1723 = vmatprep.subr.mxu0 0.0
    %1724 = vmatpush1.msra.mxu0 0.0
    %1725 = vmatprep.subr.mxu0 0.0
    %1726 = vmatpush1.msra.mxu0 0.0
    %1727 = vmatprep.subr.mxu0 0.0
    %1728 = vmatpush1.msra.mxu0 0.0
    %1729 = vmatprep.subr.mxu0 0.0
    %1730 = vmatpush1.msra.mxu0 0.0
    %1731 = vmatprep.subr.mxu0 0.0
    %1732 = vmatpush1.msra.mxu0 0.0
    %1733 = vmatprep.subr.mxu0 0.0
    %1734 = vmatpush1.msra.mxu0 0.0
    %1735 = vmatprep.subr.mxu0 0.0
    %1736 = vmatpush1.msra.mxu0 0.0
    %1737 = vmatprep.subr.mxu0 0.0
    %1738 = vmatpush1.msra.mxu0 0.0
    %1739 = vmatprep.subr.mxu0 0.0
    %1740 = vmatpush1.msra.mxu0 0.0
    %1741 = vmatprep.subr.mxu0 0.0
    %1742 = vmatpush1.msra.mxu0 %v96
    %1743 = vmatprep.subr.mxu0 0.0
    %1744 = vmatpush1.msra.mxu0 %v95
    %1745 = vmatprep.subr.mxu0 0.0
    %1746 = vmatpush2.msra.mxu0 0.0
    %1747 = vmatprep.subr.mxu0 0.0
    %1748 = vmatpush2.msra.mxu0 0.0
    %1749 = vmatprep.subr.mxu0 0.0
    %1750 = vmatpush2.msra.mxu0 0.0
    %1751 = vmatprep.subr.mxu0 0.0
    %1752 = vmatpush2.msra.mxu0 0.0
    %1753 = vmatprep.subr.mxu0 0.0
    %1754 = vmatpush2.msra.mxu0 0.0
    %1755 = vmatprep.subr.mxu0 0.0
    %1756 = vmatpush2.msra.mxu0 0.0
    %1757 = vmatprep.subr.mxu0 0.0
    %1758 = vmatpush2.msra.mxu0 0.0
    %1759 = vmatprep.subr.mxu0 0.0
    %1760 = vmatpush2.msra.mxu0 0.0
    %1761 = vmatprep.subr.mxu0 0.0
    %1762 = vmatpush2.msra.mxu0 0.0
    %1763 = vmatprep.subr.mxu0 0.0
    %1764 = vmatpush2.msra.mxu0 0.0
    %1765 = vmatprep.subr.mxu0 0.0
    %1766 = vmatpush2.msra.mxu0 0.0
    %1767 = vmatprep.subr.mxu0 0.0
    %1768 = vmatpush2.msra.mxu0 0.0
    %1769 = vmatprep.subr.mxu0 0.0
    %1770 = vmatpush2.msra.mxu0 0.0
    %1771 = vmatprep.subr.mxu0 0.0
    %1772 = vmatpush2.msra.mxu0 0.0
    %1773 = vmatprep.subr.mxu0 0.0
    %1774 = vmatpush2.msra.mxu0 0.0
    %1775 = vmatprep.subr.mxu0 0.0
    %1776 = vmatpush2.msra.mxu0 0.0
    %1777 = vmatprep.mubr.f32.mxu0 0.0
    %1778 = vmatmul.mubr.f32.gmra.mxu0 %v1690
    %v1779 = vpop.f32.mrf.mxu0
    %v1780 = vadd.f32 0.0, %v1779
    %v1781 = vpop.f32.mrf.mxu0
    %1782 = vmatprep.mubr.f32.mxu0 0.0
    %1783 = vmatmul.mubr.f32.gmra.mxu0 %v1693
    %v1784 = vpop.f32.mrf.mxu0
    %v1785 = vadd.f32 0.0, %v1784
    %v1786 = vpop.f32.mrf.mxu0
    %1787 = vmatprep.mubr.f32.mxu0 0.0
    %1788 = vmatmul.mubr.f32.gmra.mxu0 %v1696
    %v1789 = vpop.f32.mrf.mxu0
    %v1790 = vadd.f32 0.0, %v1789
    %v1791 = vpop.f32.mrf.mxu0
    %1792 = vmatprep.mubr.f32.mxu0 0.0
    %1793 = vmatmul.mubr.f32.gmra.mxu0 %v1699
    %v1794 = vpop.f32.mrf.mxu0
    %v1795 = vadd.f32 0.0, %v1794
    %v1796 = vpop.f32.mrf.mxu0
    %1797 = vmatprep.mubr.f32.mxu0 0.0
    %1798 = vmatmul.mubr.f32.gmra.mxu0 %v1702
    %v1799 = vpop.f32.mrf.mxu0
    %v1800 = vadd.f32 0.0, %v1799
    %v1801 = vpop.f32.mrf.mxu0
    %1802 = vmatprep.mubr.f32.mxu0 0.0
    %1803 = vmatmul.mubr.f32.gmra.mxu0 %v1705
    %v1804 = vpop.f32.mrf.mxu0
    %v1805 = vadd.f32 0.0, %v1804
    %v1806 = vpop.f32.mrf.mxu0
    %1807 = vmatprep.mubr.f32.mxu0 0.0
    %1808 = vmatmul.mubr.f32.gmra.mxu0 %v1708
    %v1809 = vpop.f32.mrf.mxu0
    %v1810 = vadd.f32 0.0, %v1809
    %v1811 = vpop.f32.mrf.mxu0
    %1812 = vmatprep.mubr.f32.mxu0 0.0
    %1813 = vmatmul.mubr.f32.gmra.mxu0 %v1711
    %v1814 = vpop.f32.mrf.mxu0
    %v1815 = vadd.f32 0.0, %v1814
    %v1816 = vpop.f32.mrf.mxu0
    %1817 = vdwg.mxu0
    %v1818 = vmul.f32 %v1780, %v105
    %v1819 = vmul.f32 %v1785, %v106
    %v1820 = vmul.f32 %v1790, %v107
    %v1821 = vmul.f32 %v1795, %v108
    %v1822 = vmul.f32 %v1800, %v109
    %v1823 = vmul.f32 %v1805, %v110
    %v1824 = vmul.f32 %v1810, %v111
    %v1825 = vmul.f32 %v1815, %v112
    %v1827 = vsel %vm643, %v1818, 0
    %v1830 = vsel %vm643, %v1819, 0
    %v1833 = vsel %vm643, %v1820, 0
    %v1836 = vsel %vm643, %v1821, 0
    %v1839 = vsel %vm643, %v1822, 0
    %v1842 = vsel %vm643, %v1823, 0
    %v1845 = vsel %vm643, %v1824, 0
    %v1848 = vsel %vm643, %v1825, 0
    %1850 = vmatprep.subr.mxu0 0.0
    %1851 = vmatpush1.msra.mxu0 0.0
    %1852 = vmatprep.subr.mxu0 0.0
    %1853 = vmatpush1.msra.mxu0 0.0
    %1854 = vmatprep.subr.mxu0 0.0
    %1855 = vmatpush1.msra.mxu0 0.0
    %1856 = vmatprep.subr.mxu0 0.0
    %1857 = vmatpush1.msra.mxu0 0.0
    %1858 = vmatprep.subr.mxu0 0.0
    %1859 = vmatpush1.msra.mxu0 0.0
    %1860 = vmatprep.subr.mxu0 0.0
    %1861 = vmatpush1.msra.mxu0 0.0
    %1862 = vmatprep.subr.mxu0 0.0
    %1863 = vmatpush1.msra.mxu0 0.0
    %1864 = vmatprep.subr.mxu0 0.0
    %1865 = vmatpush1.msra.mxu0 0.0
    %1866 = vmatprep.subr.mxu0 0.0
    %1867 = vmatpush1.msra.mxu0 %v51
    %1868 = vmatprep.subr.mxu0 0.0
    %1869 = vmatpush1.msra.mxu0 %v50
    %1870 = vmatprep.subr.mxu0 0.0
    %1871 = vmatpush1.msra.mxu0 %v49
    %1872 = vmatprep.subr.mxu0 0.0
    %1873 = vmatpush1.msra.mxu0 %v48
    %1874 = vmatprep.subr.mxu0 0.0
    %1875 = vmatpush1.msra.mxu0 %v47
    %1876 = vmatprep.subr.mxu0 0.0
    %1877 = vmatpush1.msra.mxu0 %v46
    %1878 = vmatprep.subr.mxu0 0.0
    %1879 = vmatpush1.msra.mxu0 %v45
    %1880 = vmatprep.subr.mxu0 0.0
    %1881 = vmatpush1.msra.mxu0 %v44
    %1882 = vmatprep.subr.mxu0 0.0
    %1883 = vmatpush2.msra.mxu0 0.0
    %1884 = vmatprep.subr.mxu0 0.0
    %1885 = vmatpush2.msra.mxu0 0.0
    %1886 = vmatprep.subr.mxu0 0.0
    %1887 = vmatpush2.msra.mxu0 0.0
    %1888 = vmatprep.subr.mxu0 0.0
    %1889 = vmatpush2.msra.mxu0 0.0
    %1890 = vmatprep.subr.mxu0 0.0
    %1891 = vmatpush2.msra.mxu0 0.0
    %1892 = vmatprep.subr.mxu0 0.0
    %1893 = vmatpush2.msra.mxu0 0.0
    %1894 = vmatprep.subr.mxu0 0.0
    %1895 = vmatpush2.msra.mxu0 0.0
    %1896 = vmatprep.subr.mxu0 0.0
    %1897 = vmatpush2.msra.mxu0 0.0
    %1898 = vmatprep.subr.mxu0 0.0
    %1899 = vmatpush2.msra.mxu0 0.0
    %1900 = vmatprep.subr.mxu0 0.0
    %1901 = vmatpush2.msra.mxu0 0.0
    %1902 = vmatprep.subr.mxu0 0.0
    %1903 = vmatpush2.msra.mxu0 0.0
    %1904 = vmatprep.subr.mxu0 0.0
    %1905 = vmatpush2.msra.mxu0 0.0
    %1906 = vmatprep.subr.mxu0 0.0
    %1907 = vmatpush2.msra.mxu0 0.0
    %1908 = vmatprep.subr.mxu0 0.0
    %1909 = vmatpush2.msra.mxu0 0.0
    %1910 = vmatprep.subr.mxu0 0.0
    %1911 = vmatpush2.msra.mxu0 0.0
    %1912 = vmatprep.subr.mxu0 0.0
    %1913 = vmatpush2.msra.mxu0 0.0
    %1914 = vmatprep.mubr.f32.mxu0 0.0
    %1915 = vmatmul.mubr.f32.gmra.mxu0 %v1827
    %v1916 = vpop.f32.mrf.mxu0
    %v1917 = vadd.f32 0.0, %v1916
    %v1918 = vpop.f32.mrf.mxu0
    %1919 = vmatprep.mubr.f32.mxu0 0.0
    %1920 = vmatmul.mubr.f32.gmra.mxu0 %v1830
    %v1921 = vpop.f32.mrf.mxu0
    %v1922 = vadd.f32 0.0, %v1921
    %v1923 = vpop.f32.mrf.mxu0
    %1924 = vmatprep.mubr.f32.mxu0 0.0
    %1925 = vmatmul.mubr.f32.gmra.mxu0 %v1833
    %v1926 = vpop.f32.mrf.mxu0
    %v1927 = vadd.f32 0.0, %v1926
    %v1928 = vpop.f32.mrf.mxu0
    %1929 = vmatprep.mubr.f32.mxu0 0.0
    %1930 = vmatmul.mubr.f32.gmra.mxu0 %v1836
    %v1931 = vpop.f32.mrf.mxu0
    %v1932 = vadd.f32 0.0, %v1931
    %v1933 = vpop.f32.mrf.mxu0
    %1934 = vmatprep.mubr.f32.mxu0 0.0
    %1935 = vmatmul.mubr.f32.gmra.mxu0 %v1839
    %v1936 = vpop.f32.mrf.mxu0
    %v1937 = vadd.f32 0.0, %v1936
    %v1938 = vpop.f32.mrf.mxu0
    %1939 = vmatprep.mubr.f32.mxu0 0.0
    %1940 = vmatmul.mubr.f32.gmra.mxu0 %v1842
    %v1941 = vpop.f32.mrf.mxu0
    %v1942 = vadd.f32 0.0, %v1941
    %v1943 = vpop.f32.mrf.mxu0
    %1944 = vmatprep.mubr.f32.mxu0 0.0
    %1945 = vmatmul.mubr.f32.gmra.mxu0 %v1845
    %v1946 = vpop.f32.mrf.mxu0
    %v1947 = vadd.f32 0.0, %v1946
    %v1948 = vpop.f32.mrf.mxu0
    %1949 = vmatprep.mubr.f32.mxu0 0.0
    %1950 = vmatmul.mubr.f32.gmra.mxu0 %v1848
    %v1951 = vpop.f32.mrf.mxu0
    %v1952 = vadd.f32 0.0, %v1951
    %v1953 = vpop.f32.mrf.mxu0
    %1954 = vdwg.mxu0
    %v1955 = vld [vmem:[#allocation7 + $0x1ec] sm:$0xff]
    %v1957 = vsel %vm113, %v1917, 0
    %v1960 = vsel %vm113, %v1922, 0
    %v1963 = vsel %vm113, %v1927, 0
    %v1966 = vsel %vm113, %v1932, 0
    %v1969 = vsel %vm113, %v1937, 0
    %v1972 = vsel %vm113, %v1942, 0
    %v1975 = vsel %vm113, %v1947, 0
    %v1978 = vsel %vm113, %v1952, 0
    %1980 = vmatprep.subr.mxu0 0.0
    %1981 = vmatpush1.msra.mxu0 0.0
    %1982 = vmatprep.subr.mxu0 0.0
    %1983 = vmatpush1.msra.mxu0 0.0
    %1984 = vmatprep.subr.mxu0 0.0
    %1985 = vmatpush1.msra.mxu0 0.0
    %1986 = vmatprep.subr.mxu0 0.0
    %1987 = vmatpush1.msra.mxu0 0.0
    %1988 = vmatprep.subr.mxu0 0.0
    %1989 = vmatpush1.msra.mxu0 0.0
    %1990 = vmatprep.subr.mxu0 0.0
    %1991 = vmatpush1.msra.mxu0 0.0
    %1992 = vmatprep.subr.mxu0 0.0
    %1993 = vmatpush1.msra.mxu0 0.0
    %1994 = vmatprep.subr.mxu0 0.0
    %1995 = vmatpush1.msra.mxu0 0.0
    %1996 = vmatprep.subr.mxu0 0.0
    %1997 = vmatpush1.msra.mxu0 0.0
    %1998 = vmatprep.subr.mxu0 0.0
    %1999 = vmatpush1.msra.mxu0 0.0
    %2000 = vmatprep.subr.mxu0 0.0
    %2001 = vmatpush1.msra.mxu0 0.0
    %2002 = vmatprep.subr.mxu0 0.0
    %2003 = vmatpush1.msra.mxu0 0.0
    %2004 = vmatprep.subr.mxu0 0.0
    %2005 = vmatpush1.msra.mxu0 0.0
    %2006 = vmatprep.subr.mxu0 0.0
    %2007 = vmatpush1.msra.mxu0 0.0
    %2008 = vmatprep.subr.mxu0 0.0
    %2009 = vmatpush1.msra.mxu0 0.0
    %2010 = vmatprep.subr.mxu0 0.0
    %2011 = vmatpush1.msra.mxu0 %v1955
    %2012 = vmatprep.subr.mxu0 0.0
    %2013 = vmatpush2.msra.mxu0 0.0
    %2014 = vmatprep.subr.mxu0 0.0
    %2015 = vmatpush2.msra.mxu0 0.0
    %2016 = vmatprep.subr.mxu0 0.0
    %2017 = vmatpush2.msra.mxu0 0.0
    %2018 = vmatprep.subr.mxu0 0.0
    %2019 = vmatpush2.msra.mxu0 0.0
    %2020 = vmatprep.subr.mxu0 0.0
    %2021 = vmatpush2.msra.mxu0 0.0
    %2022 = vmatprep.subr.mxu0 0.0
    %2023 = vmatpush2.msra.mxu0 0.0
    %2024 = vmatprep.subr.mxu0 0.0
    %2025 = vmatpush2.msra.mxu0 0.0
    %2026 = vmatprep.subr.mxu0 0.0
    %2027 = vmatpush2.msra.mxu0 0.0
    %2028 = vmatprep.subr.mxu0 0.0
    %2029 = vmatpush2.msra.mxu0 0.0
    %2030 = vmatprep.subr.mxu0 0.0
    %2031 = vmatpush2.msra.mxu0 0.0
    %2032 = vmatprep.subr.mxu0 0.0
    %2033 = vmatpush2.msra.mxu0 0.0
    %2034 = vmatprep.subr.mxu0 0.0
    %2035 = vmatpush2.msra.mxu0 0.0
    %2036 = vmatprep.subr.mxu0 0.0
    %2037 = vmatpush2.msra.mxu0 0.0
    %2038 = vmatprep.subr.mxu0 0.0
    %2039 = vmatpush2.msra.mxu0 0.0
    %2040 = vmatprep.subr.mxu0 0.0
    %2041 = vmatpush2.msra.mxu0 0.0
    %2042 = vmatprep.subr.mxu0 0.0
    %2043 = vmatpush2.msra.mxu0 0.0
    %2044 = vmatprep.mubr.f32.mxu0 0.0
    %2045 = vmatmul.mubr.f32.gmra.mxu0 %v1957
    %v2046 = vpop.f32.mrf.mxu0
    %v2047 = vadd.f32 0.0, %v2046
    %v2048 = vpop.f32.mrf.mxu0
    %2049 = vmatprep.mubr.f32.mxu0 0.0
    %2050 = vmatmul.mubr.f32.gmra.mxu0 %v1960
    %v2051 = vpop.f32.mrf.mxu0
    %v2052 = vadd.f32 0.0, %v2051
    %v2053 = vpop.f32.mrf.mxu0
    %2054 = vmatprep.mubr.f32.mxu0 0.0
    %2055 = vmatmul.mubr.f32.gmra.mxu0 %v1963
    %v2056 = vpop.f32.mrf.mxu0
    %v2057 = vadd.f32 0.0, %v2056
    %v2058 = vpop.f32.mrf.mxu0
    %2059 = vmatprep.mubr.f32.mxu0 0.0
    %2060 = vmatmul.mubr.f32.gmra.mxu0 %v1966
    %v2061 = vpop.f32.mrf.mxu0
    %v2062 = vadd.f32 0.0, %v2061
    %v2063 = vpop.f32.mrf.mxu0
    %2064 = vmatprep.mubr.f32.mxu0 0.0
    %2065 = vmatmul.mubr.f32.gmra.mxu0 %v1969
    %v2066 = vpop.f32.mrf.mxu0
    %v2067 = vadd.f32 0.0, %v2066
    %v2068 = vpop.f32.mrf.mxu0
    %2069 = vmatprep.mubr.f32.mxu0 0.0
    %2070 = vmatmul.mubr.f32.gmra.mxu0 %v1972
    %v2071 = vpop.f32.mrf.mxu0
    %v2072 = vadd.f32 0.0, %v2071
    %v2073 = vpop.f32.mrf.mxu0
    %2074 = vmatprep.mubr.f32.mxu0 0.0
    %2075 = vmatmul.mubr.f32.gmra.mxu0 %v1975
    %v2076 = vpop.f32.mrf.mxu0
    %v2077 = vadd.f32 0.0, %v2076
    %v2078 = vpop.f32.mrf.mxu0
    %2079 = vmatprep.mubr.f32.mxu0 0.0
    %2080 = vmatmul.mubr.f32.gmra.mxu0 %v1978
    %v2081 = vpop.f32.mrf.mxu0
    %v2082 = vadd.f32 0.0, %v2081
    %v2083 = vpop.f32.mrf.mxu0
    %2084 = vdwg.mxu0
    %v2085 = vadd.f32 %v1651, %v2047
    %v2086 = vadd.f32 %v1656, %v2052
    %v2087 = vadd.f32 %v1661, %v2057
    %v2088 = vadd.f32 %v1666, %v2062
    %v2089 = vadd.f32 %v1671, %v2067
    %v2090 = vadd.f32 %v1676, %v2072
    %v2091 = vadd.f32 %v1681, %v2077
    %v2092 = vadd.f32 %v1686, %v2082
    %v2093 = vmax.f32 %v2085, 0.0
    %v2094 = vmax.f32 %v2086, 0.0
    %v2095 = vmax.f32 %v2087, 0.0
    %v2096 = vmax.f32 %v2088, 0.0
    %v2097 = vmax.f32 %v2089, 0.0
    %v2098 = vmax.f32 %v2090, 0.0
    %v2099 = vmax.f32 %v2091, 0.0
    %v2100 = vmax.f32 %v2092, 0.0
    %2101 = vst.msk [vmem:[#allocation2] sm:$0xff] %vm113, %v2093
    %2102 = vst.msk [vmem:[#allocation2 + $0x8] sm:$0xff] %vm113, %v2094
    %2103 = vst.msk [vmem:[#allocation2 + $0x10] sm:$0xff] %vm113, %v2095
    %2104 = vst.msk [vmem:[#allocation2 + $0x18] sm:$0xff] %vm113, %v2096
    %2105 = vst.msk [vmem:[#allocation2 + $0x20] sm:$0xff] %vm113, %v2097
    %2106 = vst.msk [vmem:[#allocation2 + $0x28] sm:$0xff] %vm113, %v2098
    %2107 = vst.msk [vmem:[#allocation2 + $0x30] sm:$0xff] %vm113, %v2099
    %2108 = vst.msk [vmem:[#allocation2 + $0x38] sm:$0xff] %vm113, %v2100
    %s2109 = sld [smem:[#allocation4]]
    %s2110 = scalar_lea.vmem [#allocation2], %s2109
    %v2111 = vld [vmem:[%s2110] sm:$0x1]
    %vm2112 = vcmask 57344
    %2113 = vst.msk [vmem:[#allocation3] sm:$0x1] %vm2112, %v2111
    %s2114 = sld [smem:[#allocation4 + $0x1]]
    %s2115 = scalar_lea.vmem [#allocation2], %s2114
    %v2116 = vld [vmem:[%s2115] sm:$0x1]
    %2118 = vrot.lane.b32.xlu0 %v2116, 8
    %v2119 = vpop.permute.xlu0 %2118
    %vm2121 = vcmask 122944
    %2122 = vst.msk [vmem:[#allocation3] sm:$0x1] %vm2121, %v2119
    %s2123 = sld [smem:[#allocation4 + $0x2]]
    %s2124 = scalar_lea.vmem [#allocation2], %s2123
    %v2125 = vld [vmem:[%s2124] sm:$0x1]
    %2127 = vrot.lane.b32.xlu0 %v2125, 16
    %v2128 = vpop.permute.xlu0 %2127
    %vm2130 = vcmask 188544
    %2131 = vst.msk [vmem:[#allocation3] sm:$0x1] %vm2130, %v2128
    %s2132 = sld [smem:[#allocation4 + $0x3]]
    %s2133 = scalar_lea.vmem [#allocation2], %s2132
    %v2134 = vld [vmem:[%s2133] sm:$0x1]
    %2136 = vrot.lane.b32.xlu0 %v2134, 24
    %v2137 = vpop.permute.xlu0 %2136
    %vm2139 = vcmask 254144
    %2140 = vst.msk [vmem:[#allocation3] sm:$0x1] %vm2139, %v2137
    %s2141 = sld [smem:[#allocation4 + $0x4]]
    %s2142 = scalar_lea.vmem [#allocation2], %s2141
    %v2143 = vld [vmem:[%s2142] sm:$0x1]
    %2145 = vrot.lane.b32.xlu0 %v2143, 32
    %v2146 = vpop.permute.xlu0 %2145
    %vm2148 = vcmask 319744
    %2149 = vst.msk [vmem:[#allocation3] sm:$0x1] %vm2148, %v2146
    %s2150 = sld [smem:[#allocation4 + $0x5]]
    %s2151 = scalar_lea.vmem [#allocation2], %s2150
    %v2152 = vld [vmem:[%s2151] sm:$0x1]
    %2154 = vrot.lane.b32.xlu0 %v2152, 40
    %v2155 = vpop.permute.xlu0 %2154
    %vm2157 = vcmask 385344
    %2158 = vst.msk [vmem:[#allocation3] sm:$0x1] %vm2157, %v2155
    %s2159 = sld [smem:[#allocation4 + $0x6]]
    %s2160 = scalar_lea.vmem [#allocation2], %s2159
    %v2161 = vld [vmem:[%s2160] sm:$0x1]
    %2163 = vrot.lane.b32.xlu0 %v2161, 48
    %v2164 = vpop.permute.xlu0 %2163
    %vm2166 = vcmask 450944
    %2167 = vst.msk [vmem:[#allocation3] sm:$0x1] %vm2166, %v2164
    %s2168 = sld [smem:[#allocation4 + $0x7]]
    %s2169 = scalar_lea.vmem [#allocation2], %s2168
    %v2170 = vld [vmem:[%s2169] sm:$0x1]
    %2172 = vrot.lane.b32.xlu0 %v2170, 56
    %v2173 = vpop.permute.xlu0 %2172
    %vm2175 = vcmask 516544
    %2176 = vst.msk [vmem:[#allocation3] sm:$0x1] %vm2175, %v2173
    %s2177 = sld [smem:[#allocation4 + $0x8]]
    %s2178 = scalar_lea.vmem [#allocation2], %s2177
    %v2179 = vld [vmem:[%s2178] sm:$0x1]
    %2181 = vrot.lane.b32.xlu0 %v2179, 64
    %v2182 = vpop.permute.xlu0 %2181
    %vm2184 = vcmask 582144
    %2185 = vst.msk [vmem:[#allocation3] sm:$0x1] %vm2184, %v2182
    %s2186 = sld [smem:[#allocation4 + $0x9]]
    %s2187 = scalar_lea.vmem [#allocation2], %s2186
    %v2188 = vld [vmem:[%s2187] sm:$0x1]
    %2190 = vrot.lane.b32.xlu0 %v2188, 72
    %v2191 = vpop.permute.xlu0 %2190
    %vm2193 = vcmask 647744
    %2194 = vst.msk [vmem:[#allocation3] sm:$0x1] %vm2193, %v2191
    %s2195 = sld [smem:[#allocation4 + $0xa]]
    %s2196 = scalar_lea.vmem [#allocation2], %s2195
    %v2197 = vld [vmem:[%s2196] sm:$0x1]
    %2199 = vrot.lane.b32.xlu0 %v2197, 80
    %v2200 = vpop.permute.xlu0 %2199
    %vm2202 = vcmask 713344
    %2203 = vst.msk [vmem:[#allocation3] sm:$0x1] %vm2202, %v2200
    %s2204 = sld [smem:[#allocation4 + $0xb]]
    %s2205 = scalar_lea.vmem [#allocation2], %s2204
    %v2206 = vld [vmem:[%s2205] sm:$0x1]
    %2208 = vrot.lane.b32.xlu0 %v2206, 88
    %v2209 = vpop.permute.xlu0 %2208
    %vm2211 = vcmask 778944
    %2212 = vst.msk [vmem:[#allocation3] sm:$0x1] %vm2211, %v2209
    %s2213 = sld [smem:[#allocation4 + $0x80]]
    %s2214 = sadd.s32 %s2213, 16
    %s2215 = scalar_lea.vmem [#allocation2], %s2214
    %v2216 = vld [vmem:[%s2215] sm:$0x1]
    %2217 = vst.msk [vmem:[#allocation3 + $0x1] sm:$0x1] %vm2112, %v2216
    %s2218 = sld [smem:[#allocation4 + $0x81]]
    %s2219 = sadd.s32 %s2218, 16
    %s2220 = scalar_lea.vmem [#allocation2], %s2219
    %v2221 = vld [vmem:[%s2220] sm:$0x1]
    %2223 = vrot.lane.b32.xlu0 %v2221, 8
    %v2224 = vpop.permute.xlu0 %2223
    %2226 = vst.msk [vmem:[#allocation3 + $0x1] sm:$0x1] %vm2121, %v2224
    %s2227 = sld [smem:[#allocation4 + $0x82]]
    %s2228 = sadd.s32 %s2227, 16
    %s2229 = scalar_lea.vmem [#allocation2], %s2228
    %v2230 = vld [vmem:[%s2229] sm:$0x1]
    %2232 = vrot.lane.b32.xlu0 %v2230, 16
    %v2233 = vpop.permute.xlu0 %2232
    %2235 = vst.msk [vmem:[#allocation3 + $0x1] sm:$0x1] %vm2130, %v2233
    %s2236 = sld [smem:[#allocation4 + $0x83]]
    %s2237 = sadd.s32 %s2236, 16
    %s2238 = scalar_lea.vmem [#allocation2], %s2237
    %v2239 = vld [vmem:[%s2238] sm:$0x1]
    %2241 = vrot.lane.b32.xlu0 %v2239, 24
    %v2242 = vpop.permute.xlu0 %2241
    %2244 = vst.msk [vmem:[#allocation3 + $0x1] sm:$0x1] %vm2139, %v2242
    %s2245 = sld [smem:[#allocation4 + $0x84]]
    %s2246 = sadd.s32 %s2245, 16
    %s2247 = scalar_lea.vmem [#allocation2], %s2246
    %v2248 = vld [vmem:[%s2247] sm:$0x1]
    %2250 = vrot.lane.b32.xlu0 %v2248, 32
    %v2251 = vpop.permute.xlu0 %2250
    %2253 = vst.msk [vmem:[#allocation3 + $0x1] sm:$0x1] %vm2148, %v2251
    %s2254 = sld [smem:[#allocation4 + $0x85]]
    %s2255 = sadd.s32 %s2254, 16
    %s2256 = scalar_lea.vmem [#allocation2], %s2255
    %v2257 = vld [vmem:[%s2256] sm:$0x1]
    %2259 = vrot.lane.b32.xlu0 %v2257, 40
    %v2260 = vpop.permute.xlu0 %2259
    %2262 = vst.msk [vmem:[#allocation3 + $0x1] sm:$0x1] %vm2157, %v2260
    %s2263 = sld [smem:[#allocation4 + $0x86]]
    %s2264 = sadd.s32 %s2263, 16
    %s2265 = scalar_lea.vmem [#allocation2], %s2264
    %v2266 = vld [vmem:[%s2265] sm:$0x1]
    %2268 = vrot.lane.b32.xlu0 %v2266, 48
    %v2269 = vpop.permute.xlu0 %2268
    %2271 = vst.msk [vmem:[#allocation3 + $0x1] sm:$0x1] %vm2166, %v2269
    %s2272 = sld [smem:[#allocation4 + $0x87]]
    %s2273 = sadd.s32 %s2272, 16
    %s2274 = scalar_lea.vmem [#allocation2], %s2273
    %v2275 = vld [vmem:[%s2274] sm:$0x1]
    %2277 = vrot.lane.b32.xlu0 %v2275, 56
    %v2278 = vpop.permute.xlu0 %2277
    %2280 = vst.msk [vmem:[#allocation3 + $0x1] sm:$0x1] %vm2175, %v2278
    %s2281 = sld [smem:[#allocation4 + $0x88]]
    %s2282 = sadd.s32 %s2281, 16
    %s2283 = scalar_lea.vmem [#allocation2], %s2282
    %v2284 = vld [vmem:[%s2283] sm:$0x1]
    %2286 = vrot.lane.b32.xlu0 %v2284, 64
    %v2287 = vpop.permute.xlu0 %2286
    %2289 = vst.msk [vmem:[#allocation3 + $0x1] sm:$0x1] %vm2184, %v2287
    %s2290 = sld [smem:[#allocation4 + $0x89]]
    %s2291 = sadd.s32 %s2290, 16
    %s2292 = scalar_lea.vmem [#allocation2], %s2291
    %v2293 = vld [vmem:[%s2292] sm:$0x1]
    %2295 = vrot.lane.b32.xlu0 %v2293, 72
    %v2296 = vpop.permute.xlu0 %2295
    %2298 = vst.msk [vmem:[#allocation3 + $0x1] sm:$0x1] %vm2193, %v2296
    %s2299 = sld [smem:[#allocation4 + $0x8a]]
    %s2300 = sadd.s32 %s2299, 16
    %s2301 = scalar_lea.vmem [#allocation2], %s2300
    %v2302 = vld [vmem:[%s2301] sm:$0x1]
    %2304 = vrot.lane.b32.xlu0 %v2302, 80
    %v2305 = vpop.permute.xlu0 %2304
    %2307 = vst.msk [vmem:[#allocation3 + $0x1] sm:$0x1] %vm2202, %v2305
    %s2308 = sld [smem:[#allocation4 + $0x8b]]
    %s2309 = sadd.s32 %s2308, 16
    %s2310 = scalar_lea.vmem [#allocation2], %s2309
    %v2311 = vld [vmem:[%s2310] sm:$0x1]
    %2313 = vrot.lane.b32.xlu0 %v2311, 88
    %v2314 = vpop.permute.xlu0 %2313
    %2316 = vst.msk [vmem:[#allocation3 + $0x1] sm:$0x1] %vm2211, %v2314
    %s2317 = sld [smem:[#allocation4 + $0x100]]
    %s2318 = sadd.s32 %s2317, 32
    %s2319 = scalar_lea.vmem [#allocation2], %s2318
    %v2320 = vld [vmem:[%s2319] sm:$0x1]
    %2321 = vst.msk [vmem:[#allocation3 + $0x2] sm:$0x1] %vm2112, %v2320
    %s2322 = sld [smem:[#allocation4 + $0x101]]
    %s2323 = sadd.s32 %s2322, 32
    %s2324 = scalar_lea.vmem [#allocation2], %s2323
    %v2325 = vld [vmem:[%s2324] sm:$0x1]
    %2327 = vrot.lane.b32.xlu0 %v2325, 8
    %v2328 = vpop.permute.xlu0 %2327
    %2330 = vst.msk [vmem:[#allocation3 + $0x2] sm:$0x1] %vm2121, %v2328
    %s2331 = sld [smem:[#allocation4 + $0x102]]
    %s2332 = sadd.s32 %s2331, 32
    %s2333 = scalar_lea.vmem [#allocation2], %s2332
    %v2334 = vld [vmem:[%s2333] sm:$0x1]
    %2336 = vrot.lane.b32.xlu0 %v2334, 16
    %v2337 = vpop.permute.xlu0 %2336
    %2339 = vst.msk [vmem:[#allocation3 + $0x2] sm:$0x1] %vm2130, %v2337
    %s2340 = sld [smem:[#allocation4 + $0x103]]
    %s2341 = sadd.s32 %s2340, 32
    %s2342 = scalar_lea.vmem [#allocation2], %s2341
    %v2343 = vld [vmem:[%s2342] sm:$0x1]
    %2345 = vrot.lane.b32.xlu0 %v2343, 24
    %v2346 = vpop.permute.xlu0 %2345
    %2348 = vst.msk [vmem:[#allocation3 + $0x2] sm:$0x1] %vm2139, %v2346
    %s2349 = sld [smem:[#allocation4 + $0x104]]
    %s2350 = sadd.s32 %s2349, 32
    %s2351 = scalar_lea.vmem [#allocation2], %s2350
    %v2352 = vld [vmem:[%s2351] sm:$0x1]
    %2354 = vrot.lane.b32.xlu0 %v2352, 32
    %v2355 = vpop.permute.xlu0 %2354
    %2357 = vst.msk [vmem:[#allocation3 + $0x2] sm:$0x1] %vm2148, %v2355
    %s2358 = sld [smem:[#allocation4 + $0x105]]
    %s2359 = sadd.s32 %s2358, 32
    %s2360 = scalar_lea.vmem [#allocation2], %s2359
    %v2361 = vld [vmem:[%s2360] sm:$0x1]
    %2363 = vrot.lane.b32.xlu0 %v2361, 40
    %v2364 = vpop.permute.xlu0 %2363
    %2366 = vst.msk [vmem:[#allocation3 + $0x2] sm:$0x1] %vm2157, %v2364
    %s2367 = sld [smem:[#allocation4 + $0x106]]
    %s2368 = sadd.s32 %s2367, 32
    %s2369 = scalar_lea.vmem [#allocation2], %s2368
    %v2370 = vld [vmem:[%s2369] sm:$0x1]
    %2372 = vrot.lane.b32.xlu0 %v2370, 48
    %v2373 = vpop.permute.xlu0 %2372
    %2375 = vst.msk [vmem:[#allocation3 + $0x2] sm:$0x1] %vm2166, %v2373
    %s2376 = sld [smem:[#allocation4 + $0x107]]
    %s2377 = sadd.s32 %s2376, 32
    %s2378 = scalar_lea.vmem [#allocation2], %s2377
    %v2379 = vld [vmem:[%s2378] sm:$0x1]
    %2381 = vrot.lane.b32.xlu0 %v2379, 56
    %v2382 = vpop.permute.xlu0 %2381
    %2384 = vst.msk [vmem:[#allocation3 + $0x2] sm:$0x1] %vm2175, %v2382
    %s2385 = sld [smem:[#allocation4 + $0x108]]
    %s2386 = sadd.s32 %s2385, 32
    %s2387 = scalar_lea.vmem [#allocation2], %s2386
    %v2388 = vld [vmem:[%s2387] sm:$0x1]
    %2390 = vrot.lane.b32.xlu0 %v2388, 64
    %v2391 = vpop.permute.xlu0 %2390
    %2393 = vst.msk [vmem:[#allocation3 + $0x2] sm:$0x1] %vm2184, %v2391
    %s2394 = sld [smem:[#allocation4 + $0x109]]
    %s2395 = sadd.s32 %s2394, 32
    %s2396 = scalar_lea.vmem [#allocation2], %s2395
    %v2397 = vld [vmem:[%s2396] sm:$0x1]
    %2399 = vrot.lane.b32.xlu0 %v2397, 72
    %v2400 = vpop.permute.xlu0 %2399
    %2402 = vst.msk [vmem:[#allocation3 + $0x2] sm:$0x1] %vm2193, %v2400
    %s2403 = sld [smem:[#allocation4 + $0x10a]]
    %s2404 = sadd.s32 %s2403, 32
    %s2405 = scalar_lea.vmem [#allocation2], %s2404
    %v2406 = vld [vmem:[%s2405] sm:$0x1]
    %2408 = vrot.lane.b32.xlu0 %v2406, 80
    %v2409 = vpop.permute.xlu0 %2408
    %2411 = vst.msk [vmem:[#allocation3 + $0x2] sm:$0x1] %vm2202, %v2409
    %s2412 = sld [smem:[#allocation4 + $0x10b]]
    %s2413 = sadd.s32 %s2412, 32
    %s2414 = scalar_lea.vmem [#allocation2], %s2413
    %v2415 = vld [vmem:[%s2414] sm:$0x1]
    %2417 = vrot.lane.b32.xlu0 %v2415, 88
    %v2418 = vpop.permute.xlu0 %2417
    %2420 = vst.msk [vmem:[#allocation3 + $0x2] sm:$0x1] %vm2211, %v2418
    %s2421 = sld [smem:[#allocation4 + $0x180]]
    %s2422 = sadd.s32 %s2421, 48
    %s2423 = scalar_lea.vmem [#allocation2], %s2422
    %v2424 = vld [vmem:[%s2423] sm:$0x1]
    %2425 = vst.msk [vmem:[#allocation3 + $0x3] sm:$0x1] %vm2112, %v2424
    %s2426 = sld [smem:[#allocation4 + $0x181]]
    %s2427 = sadd.s32 %s2426, 48
    %s2428 = scalar_lea.vmem [#allocation2], %s2427
    %v2429 = vld [vmem:[%s2428] sm:$0x1]
    %2431 = vrot.lane.b32.xlu0 %v2429, 8
    %v2432 = vpop.permute.xlu0 %2431
    %2434 = vst.msk [vmem:[#allocation3 + $0x3] sm:$0x1] %vm2121, %v2432
    %s2435 = sld [smem:[#allocation4 + $0x182]]
    %s2436 = sadd.s32 %s2435, 48
    %s2437 = scalar_lea.vmem [#allocation2], %s2436
    %v2438 = vld [vmem:[%s2437] sm:$0x1]
    %2440 = vrot.lane.b32.xlu0 %v2438, 16
    %v2441 = vpop.permute.xlu0 %2440
    %2443 = vst.msk [vmem:[#allocation3 + $0x3] sm:$0x1] %vm2130, %v2441
    %s2444 = sld [smem:[#allocation4 + $0x183]]
    %s2445 = sadd.s32 %s2444, 48
    %s2446 = scalar_lea.vmem [#allocation2], %s2445
    %v2447 = vld [vmem:[%s2446] sm:$0x1]
    %2449 = vrot.lane.b32.xlu0 %v2447, 24
    %v2450 = vpop.permute.xlu0 %2449
    %2452 = vst.msk [vmem:[#allocation3 + $0x3] sm:$0x1] %vm2139, %v2450
    %s2453 = sld [smem:[#allocation4 + $0x184]]
    %s2454 = sadd.s32 %s2453, 48
    %s2455 = scalar_lea.vmem [#allocation2], %s2454
    %v2456 = vld [vmem:[%s2455] sm:$0x1]
    %2458 = vrot.lane.b32.xlu0 %v2456, 32
    %v2459 = vpop.permute.xlu0 %2458
    %2461 = vst.msk [vmem:[#allocation3 + $0x3] sm:$0x1] %vm2148, %v2459
    %s2462 = sld [smem:[#allocation4 + $0x185]]
    %s2463 = sadd.s32 %s2462, 48
    %s2464 = scalar_lea.vmem [#allocation2], %s2463
    %v2465 = vld [vmem:[%s2464] sm:$0x1]
    %2467 = vrot.lane.b32.xlu0 %v2465, 40
    %v2468 = vpop.permute.xlu0 %2467
    %2470 = vst.msk [vmem:[#allocation3 + $0x3] sm:$0x1] %vm2157, %v2468
    %s2471 = sld [smem:[#allocation4 + $0x186]]
    %s2472 = sadd.s32 %s2471, 48
    %s2473 = scalar_lea.vmem [#allocation2], %s2472
    %v2474 = vld [vmem:[%s2473] sm:$0x1]
    %2476 = vrot.lane.b32.xlu0 %v2474, 48
    %v2477 = vpop.permute.xlu0 %2476
    %2479 = vst.msk [vmem:[#allocation3 + $0x3] sm:$0x1] %vm2166, %v2477
    %s2480 = sld [smem:[#allocation4 + $0x187]]
    %s2481 = sadd.s32 %s2480, 48
    %s2482 = scalar_lea.vmem [#allocation2], %s2481
    %v2483 = vld [vmem:[%s2482] sm:$0x1]
    %2485 = vrot.lane.b32.xlu0 %v2483, 56
    %v2486 = vpop.permute.xlu0 %2485
    %2488 = vst.msk [vmem:[#allocation3 + $0x3] sm:$0x1] %vm2175, %v2486
    %s2489 = sld [smem:[#allocation4 + $0x188]]
    %s2490 = sadd.s32 %s2489, 48
    %s2491 = scalar_lea.vmem [#allocation2], %s2490
    %v2492 = vld [vmem:[%s2491] sm:$0x1]
    %2494 = vrot.lane.b32.xlu0 %v2492, 64
    %v2495 = vpop.permute.xlu0 %2494
    %2497 = vst.msk [vmem:[#allocation3 + $0x3] sm:$0x1] %vm2184, %v2495
    %s2498 = sld [smem:[#allocation4 + $0x189]]
    %s2499 = sadd.s32 %s2498, 48
    %s2500 = scalar_lea.vmem [#allocation2], %s2499
    %v2501 = vld [vmem:[%s2500] sm:$0x1]
    %2503 = vrot.lane.b32.xlu0 %v2501, 72
    %v2504 = vpop.permute.xlu0 %2503
    %2506 = vst.msk [vmem:[#allocation3 + $0x3] sm:$0x1] %vm2193, %v2504
    %s2507 = sld [smem:[#allocation4 + $0x18a]]
    %s2508 = sadd.s32 %s2507, 48
    %s2509 = scalar_lea.vmem [#allocation2], %s2508
    %v2510 = vld [vmem:[%s2509] sm:$0x1]
    %2512 = vrot.lane.b32.xlu0 %v2510, 80
    %v2513 = vpop.permute.xlu0 %2512
    %2515 = vst.msk [vmem:[#allocation3 + $0x3] sm:$0x1] %vm2202, %v2513
    %s2516 = sld [smem:[#allocation4 + $0x18b]]
    %s2517 = sadd.s32 %s2516, 48
    %s2518 = scalar_lea.vmem [#allocation2], %s2517
    %v2519 = vld [vmem:[%s2518] sm:$0x1]
    %2521 = vrot.lane.b32.xlu0 %v2519, 88
    %v2522 = vpop.permute.xlu0 %2521
    %2524 = vst.msk [vmem:[#allocation3 + $0x3] sm:$0x1] %vm2211, %v2522
    %s2525 = sld [smem:[#allocation4 + $0x200]]
    %s2526 = scalar_lea.vmem [#allocation2], %s2525
    %v2527 = vld [vmem:[%s2526] sm:$0x1]
    %2528 = vst.msk [vmem:[#allocation3 + $0x4] sm:$0x1] %vm2112, %v2527
    %s2529 = sld [smem:[#allocation4 + $0x201]]
    %s2530 = scalar_lea.vmem [#allocation2], %s2529
    %v2531 = vld [vmem:[%s2530] sm:$0x1]
    %2533 = vrot.lane.b32.xlu0 %v2531, 8
    %v2534 = vpop.permute.xlu0 %2533
    %2536 = vst.msk [vmem:[#allocation3 + $0x4] sm:$0x1] %vm2121, %v2534
    %s2537 = sld [smem:[#allocation4 + $0x202]]
    %s2538 = scalar_lea.vmem [#allocation2], %s2537
    %v2539 = vld [vmem:[%s2538] sm:$0x1]
    %2541 = vrot.lane.b32.xlu0 %v2539, 16
    %v2542 = vpop.permute.xlu0 %2541
    %2544 = vst.msk [vmem:[#allocation3 + $0x4] sm:$0x1] %vm2130, %v2542
    %s2545 = sld [smem:[#allocation4 + $0x203]]
    %s2546 = scalar_lea.vmem [#allocation2], %s2545
    %v2547 = vld [vmem:[%s2546] sm:$0x1]
    %2549 = vrot.lane.b32.xlu0 %v2547, 24
    %v2550 = vpop.permute.xlu0 %2549
    %2552 = vst.msk [vmem:[#allocation3 + $0x4] sm:$0x1] %vm2139, %v2550
    %s2553 = sld [smem:[#allocation4 + $0x204]]
    %s2554 = scalar_lea.vmem [#allocation2], %s2553
    %v2555 = vld [vmem:[%s2554] sm:$0x1]
    %2557 = vrot.lane.b32.xlu0 %v2555, 32
    %v2558 = vpop.permute.xlu0 %2557
    %2560 = vst.msk [vmem:[#allocation3 + $0x4] sm:$0x1] %vm2148, %v2558
    %s2561 = sld [smem:[#allocation4 + $0x205]]
    %s2562 = scalar_lea.vmem [#allocation2], %s2561
    %v2563 = vld [vmem:[%s2562] sm:$0x1]
    %2565 = vrot.lane.b32.xlu0 %v2563, 40
    %v2566 = vpop.permute.xlu0 %2565
    %2568 = vst.msk [vmem:[#allocation3 + $0x4] sm:$0x1] %vm2157, %v2566
    %s2569 = sld [smem:[#allocation4 + $0x206]]
    %s2570 = scalar_lea.vmem [#allocation2], %s2569
    %v2571 = vld [vmem:[%s2570] sm:$0x1]
    %2573 = vrot.lane.b32.xlu0 %v2571, 48
    %v2574 = vpop.permute.xlu0 %2573
    %2576 = vst.msk [vmem:[#allocation3 + $0x4] sm:$0x1] %vm2166, %v2574
    %s2577 = sld [smem:[#allocation4 + $0x207]]
    %s2578 = scalar_lea.vmem [#allocation2], %s2577
    %v2579 = vld [vmem:[%s2578] sm:$0x1]
    %2581 = vrot.lane.b32.xlu0 %v2579, 56
    %v2582 = vpop.permute.xlu0 %2581
    %2584 = vst.msk [vmem:[#allocation3 + $0x4] sm:$0x1] %vm2175, %v2582
    %s2585 = sld [smem:[#allocation4 + $0x208]]
    %s2586 = scalar_lea.vmem [#allocation2], %s2585
    %v2587 = vld [vmem:[%s2586] sm:$0x1]
    %2589 = vrot.lane.b32.xlu0 %v2587, 64
    %v2590 = vpop.permute.xlu0 %2589
    %2592 = vst.msk [vmem:[#allocation3 + $0x4] sm:$0x1] %vm2184, %v2590
    %s2593 = sld [smem:[#allocation4 + $0x209]]
    %s2594 = scalar_lea.vmem [#allocation2], %s2593
    %v2595 = vld [vmem:[%s2594] sm:$0x1]
    %2597 = vrot.lane.b32.xlu0 %v2595, 72
    %v2598 = vpop.permute.xlu0 %2597
    %2600 = vst.msk [vmem:[#allocation3 + $0x4] sm:$0x1] %vm2193, %v2598
    %s2601 = sld [smem:[#allocation4 + $0x20a]]
    %s2602 = scalar_lea.vmem [#allocation2], %s2601
    %v2603 = vld [vmem:[%s2602] sm:$0x1]
    %2605 = vrot.lane.b32.xlu0 %v2603, 80
    %v2606 = vpop.permute.xlu0 %2605
    %2608 = vst.msk [vmem:[#allocation3 + $0x4] sm:$0x1] %vm2202, %v2606
    %s2609 = sld [smem:[#allocation4 + $0x20b]]
    %s2610 = scalar_lea.vmem [#allocation2], %s2609
    %v2611 = vld [vmem:[%s2610] sm:$0x1]
    %2613 = vrot.lane.b32.xlu0 %v2611, 88
    %v2614 = vpop.permute.xlu0 %2613
    %2616 = vst.msk [vmem:[#allocation3 + $0x4] sm:$0x1] %vm2211, %v2614
    %s2617 = sld [smem:[#allocation4 + $0x280]]
    %s2618 = sadd.s32 %s2617, 16
    %s2619 = scalar_lea.vmem [#allocation2], %s2618
    %v2620 = vld [vmem:[%s2619] sm:$0x1]
    %2621 = vst.msk [vmem:[#allocation3 + $0x5] sm:$0x1] %vm2112, %v2620
    %s2622 = sld [smem:[#allocation4 + $0x281]]
    %s2623 = sadd.s32 %s2622, 16
    %s2624 = scalar_lea.vmem [#allocation2], %s2623
    %v2625 = vld [vmem:[%s2624] sm:$0x1]
    %2627 = vrot.lane.b32.xlu0 %v2625, 8
    %v2628 = vpop.permute.xlu0 %2627
    %2630 = vst.msk [vmem:[#allocation3 + $0x5] sm:$0x1] %vm2121, %v2628
    %s2631 = sld [smem:[#allocation4 + $0x282]]
    %s2632 = sadd.s32 %s2631, 16
    %s2633 = scalar_lea.vmem [#allocation2], %s2632
    %v2634 = vld [vmem:[%s2633] sm:$0x1]
    %2636 = vrot.lane.b32.xlu0 %v2634, 16
    %v2637 = vpop.permute.xlu0 %2636
    %2639 = vst.msk [vmem:[#allocation3 + $0x5] sm:$0x1] %vm2130, %v2637
    %s2640 = sld [smem:[#allocation4 + $0x283]]
    %s2641 = sadd.s32 %s2640, 16
    %s2642 = scalar_lea.vmem [#allocation2], %s2641
    %v2643 = vld [vmem:[%s2642] sm:$0x1]
    %2645 = vrot.lane.b32.xlu0 %v2643, 24
    %v2646 = vpop.permute.xlu0 %2645
    %2648 = vst.msk [vmem:[#allocation3 + $0x5] sm:$0x1] %vm2139, %v2646
    %s2649 = sld [smem:[#allocation4 + $0x284]]
    %s2650 = sadd.s32 %s2649, 16
    %s2651 = scalar_lea.vmem [#allocation2], %s2650
    %v2652 = vld [vmem:[%s2651] sm:$0x1]
    %2654 = vrot.lane.b32.xlu0 %v2652, 32
    %v2655 = vpop.permute.xlu0 %2654
    %2657 = vst.msk [vmem:[#allocation3 + $0x5] sm:$0x1] %vm2148, %v2655
    %s2658 = sld [smem:[#allocation4 + $0x285]]
    %s2659 = sadd.s32 %s2658, 16
    %s2660 = scalar_lea.vmem [#allocation2], %s2659
    %v2661 = vld [vmem:[%s2660] sm:$0x1]
    %2663 = vrot.lane.b32.xlu0 %v2661, 40
    %v2664 = vpop.permute.xlu0 %2663
    %2666 = vst.msk [vmem:[#allocation3 + $0x5] sm:$0x1] %vm2157, %v2664
    %s2667 = sld [smem:[#allocation4 + $0x286]]
    %s2668 = sadd.s32 %s2667, 16
    %s2669 = scalar_lea.vmem [#allocation2], %s2668
    %v2670 = vld [vmem:[%s2669] sm:$0x1]
    %2672 = vrot.lane.b32.xlu0 %v2670, 48
    %v2673 = vpop.permute.xlu0 %2672
    %2675 = vst.msk [vmem:[#allocation3 + $0x5] sm:$0x1] %vm2166, %v2673
    %s2676 = sld [smem:[#allocation4 + $0x287]]
    %s2677 = sadd.s32 %s2676, 16
    %s2678 = scalar_lea.vmem [#allocation2], %s2677
    %v2679 = vld [vmem:[%s2678] sm:$0x1]
    %2681 = vrot.lane.b32.xlu0 %v2679, 56
    %v2682 = vpop.permute.xlu0 %2681
    %2684 = vst.msk [vmem:[#allocation3 + $0x5] sm:$0x1] %vm2175, %v2682
    %s2685 = sld [smem:[#allocation4 + $0x288]]
    %s2686 = sadd.s32 %s2685, 16
    %s2687 = scalar_lea.vmem [#allocation2], %s2686
    %v2688 = vld [vmem:[%s2687] sm:$0x1]
    %2690 = vrot.lane.b32.xlu0 %v2688, 64
    %v2691 = vpop.permute.xlu0 %2690
    %2693 = vst.msk [vmem:[#allocation3 + $0x5] sm:$0x1] %vm2184, %v2691
    %s2694 = sld [smem:[#allocation4 + $0x289]]
    %s2695 = sadd.s32 %s2694, 16
    %s2696 = scalar_lea.vmem [#allocation2], %s2695
    %v2697 = vld [vmem:[%s2696] sm:$0x1]
    %2699 = vrot.lane.b32.xlu0 %v2697, 72
    %v2700 = vpop.permute.xlu0 %2699
    %2702 = vst.msk [vmem:[#allocation3 + $0x5] sm:$0x1] %vm2193, %v2700
    %s2703 = sld [smem:[#allocation4 + $0x28a]]
    %s2704 = sadd.s32 %s2703, 16
    %s2705 = scalar_lea.vmem [#allocation2], %s2704
    %v2706 = vld [vmem:[%s2705] sm:$0x1]
    %2708 = vrot.lane.b32.xlu0 %v2706, 80
    %v2709 = vpop.permute.xlu0 %2708
    %2711 = vst.msk [vmem:[#allocation3 + $0x5] sm:$0x1] %vm2202, %v2709
    %s2712 = sld [smem:[#allocation4 + $0x28b]]
    %s2713 = sadd.s32 %s2712, 16
    %s2714 = scalar_lea.vmem [#allocation2], %s2713
    %v2715 = vld [vmem:[%s2714] sm:$0x1]
    %2717 = vrot.lane.b32.xlu0 %v2715, 88
    %v2718 = vpop.permute.xlu0 %2717
    %2720 = vst.msk [vmem:[#allocation3 + $0x5] sm:$0x1] %vm2211, %v2718
    %s2721 = sld [smem:[#allocation4 + $0x300]]
    %s2722 = sadd.s32 %s2721, 32
    %s2723 = scalar_lea.vmem [#allocation2], %s2722
    %v2724 = vld [vmem:[%s2723] sm:$0x1]
    %2725 = vst.msk [vmem:[#allocation3 + $0x6] sm:$0x1] %vm2112, %v2724
    %s2726 = sld [smem:[#allocation4 + $0x301]]
    %s2727 = sadd.s32 %s2726, 32
    %s2728 = scalar_lea.vmem [#allocation2], %s2727
    %v2729 = vld [vmem:[%s2728] sm:$0x1]
    %2731 = vrot.lane.b32.xlu0 %v2729, 8
    %v2732 = vpop.permute.xlu0 %2731
    %2734 = vst.msk [vmem:[#allocation3 + $0x6] sm:$0x1] %vm2121, %v2732
    %s2735 = sld [smem:[#allocation4 + $0x302]]
    %s2736 = sadd.s32 %s2735, 32
    %s2737 = scalar_lea.vmem [#allocation2], %s2736
    %v2738 = vld [vmem:[%s2737] sm:$0x1]
    %2740 = vrot.lane.b32.xlu0 %v2738, 16
    %v2741 = vpop.permute.xlu0 %2740
    %2743 = vst.msk [vmem:[#allocation3 + $0x6] sm:$0x1] %vm2130, %v2741
    %s2744 = sld [smem:[#allocation4 + $0x303]]
    %s2745 = sadd.s32 %s2744, 32
    %s2746 = scalar_lea.vmem [#allocation2], %s2745
    %v2747 = vld [vmem:[%s2746] sm:$0x1]
    %2749 = vrot.lane.b32.xlu0 %v2747, 24
    %v2750 = vpop.permute.xlu0 %2749
    %2752 = vst.msk [vmem:[#allocation3 + $0x6] sm:$0x1] %vm2139, %v2750
    %s2753 = sld [smem:[#allocation4 + $0x304]]
    %s2754 = sadd.s32 %s2753, 32
    %s2755 = scalar_lea.vmem [#allocation2], %s2754
    %v2756 = vld [vmem:[%s2755] sm:$0x1]
    %2758 = vrot.lane.b32.xlu0 %v2756, 32
    %v2759 = vpop.permute.xlu0 %2758
    %2761 = vst.msk [vmem:[#allocation3 + $0x6] sm:$0x1] %vm2148, %v2759
    %s2762 = sld [smem:[#allocation4 + $0x305]]
    %s2763 = sadd.s32 %s2762, 32
    %s2764 = scalar_lea.vmem [#allocation2], %s2763
    %v2765 = vld [vmem:[%s2764] sm:$0x1]
    %2767 = vrot.lane.b32.xlu0 %v2765, 40
    %v2768 = vpop.permute.xlu0 %2767
    %2770 = vst.msk [vmem:[#allocation3 + $0x6] sm:$0x1] %vm2157, %v2768
    %s2771 = sld [smem:[#allocation4 + $0x306]]
    %s2772 = sadd.s32 %s2771, 32
    %s2773 = scalar_lea.vmem [#allocation2], %s2772
    %v2774 = vld [vmem:[%s2773] sm:$0x1]
    %2776 = vrot.lane.b32.xlu0 %v2774, 48
    %v2777 = vpop.permute.xlu0 %2776
    %2779 = vst.msk [vmem:[#allocation3 + $0x6] sm:$0x1] %vm2166, %v2777
    %s2780 = sld [smem:[#allocation4 + $0x307]]
    %s2781 = sadd.s32 %s2780, 32
    %s2782 = scalar_lea.vmem [#allocation2], %s2781
    %v2783 = vld [vmem:[%s2782] sm:$0x1]
    %2785 = vrot.lane.b32.xlu0 %v2783, 56
    %v2786 = vpop.permute.xlu0 %2785
    %2788 = vst.msk [vmem:[#allocation3 + $0x6] sm:$0x1] %vm2175, %v2786
    %s2789 = sld [smem:[#allocation4 + $0x308]]
    %s2790 = sadd.s32 %s2789, 32
    %s2791 = scalar_lea.vmem [#allocation2], %s2790
    %v2792 = vld [vmem:[%s2791] sm:$0x1]
    %2794 = vrot.lane.b32.xlu0 %v2792, 64
    %v2795 = vpop.permute.xlu0 %2794
    %2797 = vst.msk [vmem:[#allocation3 + $0x6] sm:$0x1] %vm2184, %v2795
    %s2798 = sld [smem:[#allocation4 + $0x309]]
    %s2799 = sadd.s32 %s2798, 32
    %s2800 = scalar_lea.vmem [#allocation2], %s2799
    %v2801 = vld [vmem:[%s2800] sm:$0x1]
    %2803 = vrot.lane.b32.xlu0 %v2801, 72
    %v2804 = vpop.permute.xlu0 %2803
    %2806 = vst.msk [vmem:[#allocation3 + $0x6] sm:$0x1] %vm2193, %v2804
    %s2807 = sld [smem:[#allocation4 + $0x30a]]
    %s2808 = sadd.s32 %s2807, 32
    %s2809 = scalar_lea.vmem [#allocation2], %s2808
    %v2810 = vld [vmem:[%s2809] sm:$0x1]
    %2812 = vrot.lane.b32.xlu0 %v2810, 80
    %v2813 = vpop.permute.xlu0 %2812
    %2815 = vst.msk [vmem:[#allocation3 + $0x6] sm:$0x1] %vm2202, %v2813
    %s2816 = sld [smem:[#allocation4 + $0x30b]]
    %s2817 = sadd.s32 %s2816, 32
    %s2818 = scalar_lea.vmem [#allocation2], %s2817
    %v2819 = vld [vmem:[%s2818] sm:$0x1]
    %2821 = vrot.lane.b32.xlu0 %v2819, 88
    %v2822 = vpop.permute.xlu0 %2821
    %2824 = vst.msk [vmem:[#allocation3 + $0x6] sm:$0x1] %vm2211, %v2822
    %s2825 = sld [smem:[#allocation4 + $0x380]]
    %s2826 = sadd.s32 %s2825, 48
    %s2827 = scalar_lea.vmem [#allocation2], %s2826
    %v2828 = vld [vmem:[%s2827] sm:$0x1]
    %2829 = vst.msk [vmem:[#allocation3 + $0x7] sm:$0x1] %vm2112, %v2828
    %s2830 = sld [smem:[#allocation4 + $0x381]]
    %s2831 = sadd.s32 %s2830, 48
    %s2832 = scalar_lea.vmem [#allocation2], %s2831
    %v2833 = vld [vmem:[%s2832] sm:$0x1]
    %2835 = vrot.lane.b32.xlu0 %v2833, 8
    %v2836 = vpop.permute.xlu0 %2835
    %2838 = vst.msk [vmem:[#allocation3 + $0x7] sm:$0x1] %vm2121, %v2836
    %s2839 = sld [smem:[#allocation4 + $0x382]]
    %s2840 = sadd.s32 %s2839, 48
    %s2841 = scalar_lea.vmem [#allocation2], %s2840
    %v2842 = vld [vmem:[%s2841] sm:$0x1]
    %2844 = vrot.lane.b32.xlu0 %v2842, 16
    %v2845 = vpop.permute.xlu0 %2844
    %2847 = vst.msk [vmem:[#allocation3 + $0x7] sm:$0x1] %vm2130, %v2845
    %s2848 = sld [smem:[#allocation4 + $0x383]]
    %s2849 = sadd.s32 %s2848, 48
    %s2850 = scalar_lea.vmem [#allocation2], %s2849
    %v2851 = vld [vmem:[%s2850] sm:$0x1]
    %2853 = vrot.lane.b32.xlu0 %v2851, 24
    %v2854 = vpop.permute.xlu0 %2853
    %2856 = vst.msk [vmem:[#allocation3 + $0x7] sm:$0x1] %vm2139, %v2854
    %s2857 = sld [smem:[#allocation4 + $0x384]]
    %s2858 = sadd.s32 %s2857, 48
    %s2859 = scalar_lea.vmem [#allocation2], %s2858
    %v2860 = vld [vmem:[%s2859] sm:$0x1]
    %2862 = vrot.lane.b32.xlu0 %v2860, 32
    %v2863 = vpop.permute.xlu0 %2862
    %2865 = vst.msk [vmem:[#allocation3 + $0x7] sm:$0x1] %vm2148, %v2863
    %s2866 = sld [smem:[#allocation4 + $0x385]]
    %s2867 = sadd.s32 %s2866, 48
    %s2868 = scalar_lea.vmem [#allocation2], %s2867
    %v2869 = vld [vmem:[%s2868] sm:$0x1]
    %2871 = vrot.lane.b32.xlu0 %v2869, 40
    %v2872 = vpop.permute.xlu0 %2871
    %2874 = vst.msk [vmem:[#allocation3 + $0x7] sm:$0x1] %vm2157, %v2872
    %s2875 = sld [smem:[#allocation4 + $0x386]]
    %s2876 = sadd.s32 %s2875, 48
    %s2877 = scalar_lea.vmem [#allocation2], %s2876
    %v2878 = vld [vmem:[%s2877] sm:$0x1]
    %2880 = vrot.lane.b32.xlu0 %v2878, 48
    %v2881 = vpop.permute.xlu0 %2880
    %2883 = vst.msk [vmem:[#allocation3 + $0x7] sm:$0x1] %vm2166, %v2881
    %s2884 = sld [smem:[#allocation4 + $0x387]]
    %s2885 = sadd.s32 %s2884, 48
    %s2886 = scalar_lea.vmem [#allocation2], %s2885
    %v2887 = vld [vmem:[%s2886] sm:$0x1]
    %2889 = vrot.lane.b32.xlu0 %v2887, 56
    %v2890 = vpop.permute.xlu0 %2889
    %2892 = vst.msk [vmem:[#allocation3 + $0x7] sm:$0x1] %vm2175, %v2890
    %s2893 = sld [smem:[#allocation4 + $0x388]]
    %s2894 = sadd.s32 %s2893, 48
    %s2895 = scalar_lea.vmem [#allocation2], %s2894
    %v2896 = vld [vmem:[%s2895] sm:$0x1]
    %2898 = vrot.lane.b32.xlu0 %v2896, 64
    %v2899 = vpop.permute.xlu0 %2898
    %2901 = vst.msk [vmem:[#allocation3 + $0x7] sm:$0x1] %vm2184, %v2899
    %s2902 = sld [smem:[#allocation4 + $0x389]]
    %s2903 = sadd.s32 %s2902, 48
    %s2904 = scalar_lea.vmem [#allocation2], %s2903
    %v2905 = vld [vmem:[%s2904] sm:$0x1]
    %2907 = vrot.lane.b32.xlu0 %v2905, 72
    %v2908 = vpop.permute.xlu0 %2907
    %2910 = vst.msk [vmem:[#allocation3 + $0x7] sm:$0x1] %vm2193, %v2908
    %s2911 = sld [smem:[#allocation4 + $0x38a]]
    %s2912 = sadd.s32 %s2911, 48
    %s2913 = scalar_lea.vmem [#allocation2], %s2912
    %v2914 = vld [vmem:[%s2913] sm:$0x1]
    %2916 = vrot.lane.b32.xlu0 %v2914, 80
    %v2917 = vpop.permute.xlu0 %2916
    %2919 = vst.msk [vmem:[#allocation3 + $0x7] sm:$0x1] %vm2202, %v2917
    %s2920 = sld [smem:[#allocation4 + $0x38b]]
    %s2921 = sadd.s32 %s2920, 48
    %s2922 = scalar_lea.vmem [#allocation2], %s2921
    %v2923 = vld [vmem:[%s2922] sm:$0x1]
    %2925 = vrot.lane.b32.xlu0 %v2923, 88
    %v2926 = vpop.permute.xlu0 %2925
    %2928 = vst.msk [vmem:[#allocation3 + $0x7] sm:$0x1] %vm2211, %v2926
    %v2929 = vld [vmem:[#allocation3] sm:$0xff]
    %v2930 = vld [vmem:[#allocation7 + $0x1f4] sm:$0xff]
    %v2931 = vld [vmem:[#allocation7 + $0x1fc] sm:$0xff]
    %v2932 = vld [vmem:[#allocation7 + $0x204] sm:$0xff]
    %v2933 = vld [vmem:[#allocation7 + $0x20c] sm:$0xff]
    %v2934 = vld [vmem:[#allocation7 + $0x214] sm:$0xff]
    %v2935 = vld [vmem:[#allocation7 + $0x21c] sm:$0xff]
    %v2936 = vld [vmem:[#allocation7 + $0x224] sm:$0xff]
    %v2937 = vld [vmem:[#allocation7 + $0x22c] sm:$0xff]
    %v2938 = vld [vmem:[#allocation7 + $0x234] sm:$0xff]
    %v2939 = vld [vmem:[#allocation7 + $0x23c] sm:$0xff]
    %v2940 = vld [vmem:[#allocation7 + $0x244] sm:$0xff]
    %v2941 = vld [vmem:[#allocation7 + $0x24c] sm:$0xff]
    %v2942 = vld [vmem:[#allocation7 + $0x254] sm:$0xff]
    %v2943 = vld [vmem:[#allocation7 + $0x25c] sm:$0xff]
    %v2944 = vld [vmem:[#allocation7 + $0x264] sm:$0xff]
    %v2945 = vld [vmem:[#allocation7 + $0x26c] sm:$0xff]
    %v2946 = vld [vmem:[#allocation7 + $0x274] sm:$0x1]
    %v2947 = vlaneseq
    %v2948 = vshrl.u32 %v2947, 7
    %v2949 = vsub.s32 0, %v2948
    %v2950 = vrot.slane %v2946, %v2949
    %2951 = vmatprep.subr.mxu0 0.0
    %2952 = vmatpush1.msra.mxu0 %v2945
    %2953 = vmatprep.subr.mxu0 0.0
    %2954 = vmatpush1.msra.mxu0 %v2944
    %2955 = vmatprep.subr.mxu0 0.0
    %2956 = vmatpush1.msra.mxu0 %v2943
    %2957 = vmatprep.subr.mxu0 0.0
    %2958 = vmatpush1.msra.mxu0 %v2942
    %2959 = vmatprep.subr.mxu0 0.0
    %2960 = vmatpush1.msra.mxu0 %v2941
    %2961 = vmatprep.subr.mxu0 0.0
    %2962 = vmatpush1.msra.mxu0 %v2940
    %2963 = vmatprep.subr.mxu0 0.0
    %2964 = vmatpush1.msra.mxu0 %v2939
    %2965 = vmatprep.subr.mxu0 0.0
    %2966 = vmatpush1.msra.mxu0 %v2938
    %2967 = vmatprep.subr.mxu0 0.0
    %2968 = vmatpush1.msra.mxu0 %v2937
    %2969 = vmatprep.subr.mxu0 0.0
    %2970 = vmatpush1.msra.mxu0 %v2936
    %2971 = vmatprep.subr.mxu0 0.0
    %2972 = vmatpush1.msra.mxu0 %v2935
    %2973 = vmatprep.subr.mxu0 0.0
    %2974 = vmatpush1.msra.mxu0 %v2934
    %2975 = vmatprep.subr.mxu0 0.0
    %2976 = vmatpush1.msra.mxu0 %v2933
    %2977 = vmatprep.subr.mxu0 0.0
    %2978 = vmatpush1.msra.mxu0 %v2932
    %2979 = vmatprep.subr.mxu0 0.0
    %2980 = vmatpush1.msra.mxu0 %v2931
    %2981 = vmatprep.subr.mxu0 0.0
    %2982 = vmatpush1.msra.mxu0 %v2930
    %2983 = vmatprep.subr.mxu0 0.0
    %2984 = vmatpush2.msra.mxu0 0.0
    %2985 = vmatprep.subr.mxu0 0.0
    %2986 = vmatpush2.msra.mxu0 0.0
    %2987 = vmatprep.subr.mxu0 0.0
    %2988 = vmatpush2.msra.mxu0 0.0
    %2989 = vmatprep.subr.mxu0 0.0
    %2990 = vmatpush2.msra.mxu0 0.0
    %2991 = vmatprep.subr.mxu0 0.0
    %2992 = vmatpush2.msra.mxu0 0.0
    %2993 = vmatprep.subr.mxu0 0.0
    %2994 = vmatpush2.msra.mxu0 0.0
    %2995 = vmatprep.subr.mxu0 0.0
    %2996 = vmatpush2.msra.mxu0 0.0
    %2997 = vmatprep.subr.mxu0 0.0
    %2998 = vmatpush2.msra.mxu0 0.0
    %2999 = vmatprep.subr.mxu0 0.0
    %3000 = vmatpush2.msra.mxu0 0.0
    %3001 = vmatprep.subr.mxu0 0.0
    %3002 = vmatpush2.msra.mxu0 0.0
    %3003 = vmatprep.subr.mxu0 0.0
    %3004 = vmatpush2.msra.mxu0 0.0
    %3005 = vmatprep.subr.mxu0 0.0
    %3006 = vmatpush2.msra.mxu0 0.0
    %3007 = vmatprep.subr.mxu0 0.0
    %3008 = vmatpush2.msra.mxu0 0.0
    %3009 = vmatprep.subr.mxu0 0.0
    %3010 = vmatpush2.msra.mxu0 0.0
    %3011 = vmatprep.subr.mxu0 0.0
    %3012 = vmatpush2.msra.mxu0 0.0
    %3013 = vmatprep.subr.mxu0 0.0
    %3014 = vmatpush2.msra.mxu0 0.0
    %3015 = vmatprep.mubr.f32.mxu0 0.0
    %3016 = vmatmul.mubr.f32.gmra.mxu0 %v52
    %v3017 = vpop.f32.mrf.mxu0
    %v3018 = vadd.f32 %v2950, %v3017
    %v3019 = vpop.f32.mrf.mxu0
    %3020 = vdwg.mxu0
    %v3021 = vmax.f32 %v3018, 0.0
    %v3022 = vld [vmem:[#allocation7 + $0x275] sm:$0xff]
    %v3023 = vld [vmem:[#allocation7 + $0x27d] sm:$0xff]
    %v3024 = vld [vmem:[#allocation7 + $0x285] sm:$0xff]
    %v3025 = vld [vmem:[#allocation7 + $0x28d] sm:$0xff]
    %v3026 = vld [vmem:[#allocation7 + $0x295] sm:$0xff]
    %v3027 = vld [vmem:[#allocation7 + $0x29d] sm:$0xff]
    %v3028 = vld [vmem:[#allocation7 + $0x2a5] sm:$0xff]
    %v3029 = vld [vmem:[#allocation7 + $0x2ad] sm:$0xff]
    %v3030 = vld [vmem:[#allocation7 + $0x2b5] sm:$0x1]
    %v3031 = vlaneseq
    %v3032 = vshrl.u32 %v3031, 7
    %v3033 = vsub.s32 0, %v3032
    %v3034 = vrot.slane %v3030, %v3033
    %v3036 = vsel %vm643, %v3021, 0
    %3038 = vmatprep.subr.mxu0 0.0
    %3039 = vmatpush1.msra.mxu0 0.0
    %3040 = vmatprep.subr.mxu0 0.0
    %3041 = vmatpush1.msra.mxu0 0.0
    %3042 = vmatprep.subr.mxu0 0.0
    %3043 = vmatpush1.msra.mxu0 0.0
    %3044 = vmatprep.subr.mxu0 0.0
    %3045 = vmatpush1.msra.mxu0 0.0
    %3046 = vmatprep.subr.mxu0 0.0
    %3047 = vmatpush1.msra.mxu0 0.0
    %3048 = vmatprep.subr.mxu0 0.0
    %3049 = vmatpush1.msra.mxu0 0.0
    %3050 = vmatprep.subr.mxu0 0.0
    %3051 = vmatpush1.msra.mxu0 0.0
    %3052 = vmatprep.subr.mxu0 0.0
    %3053 = vmatpush1.msra.mxu0 0.0
    %3054 = vmatprep.subr.mxu0 0.0
    %3055 = vmatpush1.msra.mxu0 %v3029
    %3056 = vmatprep.subr.mxu0 0.0
    %3057 = vmatpush1.msra.mxu0 %v3028
    %3058 = vmatprep.subr.mxu0 0.0
    %3059 = vmatpush1.msra.mxu0 %v3027
    %3060 = vmatprep.subr.mxu0 0.0
    %3061 = vmatpush1.msra.mxu0 %v3026
    %3062 = vmatprep.subr.mxu0 0.0
    %3063 = vmatpush1.msra.mxu0 %v3025
    %3064 = vmatprep.subr.mxu0 0.0
    %3065 = vmatpush1.msra.mxu0 %v3024
    %3066 = vmatprep.subr.mxu0 0.0
    %3067 = vmatpush1.msra.mxu0 %v3023
    %3068 = vmatprep.subr.mxu0 0.0
    %3069 = vmatpush1.msra.mxu0 %v3022
    %3070 = vmatprep.subr.mxu0 0.0
    %3071 = vmatpush2.msra.mxu0 0.0
    %3072 = vmatprep.subr.mxu0 0.0
    %3073 = vmatpush2.msra.mxu0 0.0
    %3074 = vmatprep.subr.mxu0 0.0
    %3075 = vmatpush2.msra.mxu0 0.0
    %3076 = vmatprep.subr.mxu0 0.0
    %3077 = vmatpush2.msra.mxu0 0.0
    %3078 = vmatprep.subr.mxu0 0.0
    %3079 = vmatpush2.msra.mxu0 0.0
    %3080 = vmatprep.subr.mxu0 0.0
    %3081 = vmatpush2.msra.mxu0 0.0
    %3082 = vmatprep.subr.mxu0 0.0
    %3083 = vmatpush2.msra.mxu0 0.0
    %3084 = vmatprep.subr.mxu0 0.0
    %3085 = vmatpush2.msra.mxu0 0.0
    %3086 = vmatprep.subr.mxu0 0.0
    %3087 = vmatpush2.msra.mxu0 0.0
    %3088 = vmatprep.subr.mxu0 0.0
    %3089 = vmatpush2.msra.mxu0 0.0
    %3090 = vmatprep.subr.mxu0 0.0
    %3091 = vmatpush2.msra.mxu0 0.0
    %3092 = vmatprep.subr.mxu0 0.0
    %3093 = vmatpush2.msra.mxu0 0.0
    %3094 = vmatprep.subr.mxu0 0.0
    %3095 = vmatpush2.msra.mxu0 0.0
    %3096 = vmatprep.subr.mxu0 0.0
    %3097 = vmatpush2.msra.mxu0 0.0
    %3098 = vmatprep.subr.mxu0 0.0
    %3099 = vmatpush2.msra.mxu0 0.0
    %3100 = vmatprep.subr.mxu0 0.0
    %3101 = vmatpush2.msra.mxu0 0.0
    %3102 = vmatprep.mubr.f32.mxu0 0.0
    %3103 = vmatmul.mubr.f32.gmra.mxu0 %v3036
    %v3104 = vpop.f32.mrf.mxu0
    %v3105 = vadd.f32 %v3034, %v3104
    %v3106 = vpop.f32.mrf.mxu0
    %3107 = vdwg.mxu0
    %v3108 = vmax.f32 %v3105, 0.0
    %v3109 = vld [vmem:[#allocation7 + $0x2b6] sm:$0xff]
    %v3110 = vld [vmem:[#allocation7 + $0x2be] sm:$0xff]
    %v3111 = vld [vmem:[#allocation7 + $0x2c6] sm:$0xff]
    %v3112 = vld [vmem:[#allocation7 + $0x2ce] sm:$0xff]
    %v3113 = vld [vmem:[#allocation7 + $0x2d6] sm:$0xff]
    %v3114 = vld [vmem:[#allocation7 + $0x2de] sm:$0xff]
    %v3115 = vld [vmem:[#allocation7 + $0x2e6] sm:$0xff]
    %v3116 = vld [vmem:[#allocation7 + $0x2ee] sm:$0xff]
    %v3117 = vld [vmem:[#allocation7 + $0x2f6] sm:$0xff]
    %v3118 = vld [vmem:[#allocation7 + $0x2fe] sm:$0xff]
    %v3119 = vld [vmem:[#allocation7 + $0x306] sm:$0xff]
    %v3120 = vld [vmem:[#allocation7 + $0x30e] sm:$0xff]
    %v3121 = vld [vmem:[#allocation7 + $0x316] sm:$0x1]
    %v3122 = vlaneseq
    %v3123 = vshrl.u32 %v3122, 7
    %v3124 = vsub.s32 0, %v3123
    %v3125 = vrot.slane %v3121, %v3124
    %vm3126 = vcmask 785408
    %v3128 = vsel %vm3126, %v2929, 0
    %3130 = vmatprep.subr.mxu0 0.0
    %3131 = vmatpush1.msra.mxu0 0.0
    %3132 = vmatprep.subr.mxu0 0.0
    %3133 = vmatpush1.msra.mxu0 0.0
    %3134 = vmatprep.subr.mxu0 0.0
    %3135 = vmatpush1.msra.mxu0 0.0
    %3136 = vmatprep.subr.mxu0 0.0
    %3137 = vmatpush1.msra.mxu0 0.0
    %3138 = vmatprep.subr.mxu0 0.0
    %3139 = vmatpush1.msra.mxu0 %v3120
    %3140 = vmatprep.subr.mxu0 0.0
    %3141 = vmatpush1.msra.mxu0 %v3119
    %3142 = vmatprep.subr.mxu0 0.0
    %3143 = vmatpush1.msra.mxu0 %v3118
    %3144 = vmatprep.subr.mxu0 0.0
    %3145 = vmatpush1.msra.mxu0 %v3117
    %3146 = vmatprep.subr.mxu0 0.0
    %3147 = vmatpush1.msra.mxu0 %v3116
    %3148 = vmatprep.subr.mxu0 0.0
    %3149 = vmatpush1.msra.mxu0 %v3115
    %3150 = vmatprep.subr.mxu0 0.0
    %3151 = vmatpush1.msra.mxu0 %v3114
    %3152 = vmatprep.subr.mxu0 0.0
    %3153 = vmatpush1.msra.mxu0 %v3113
    %3154 = vmatprep.subr.mxu0 0.0
    %3155 = vmatpush1.msra.mxu0 %v3112
    %3156 = vmatprep.subr.mxu0 0.0
    %3157 = vmatpush1.msra.mxu0 %v3111
    %3158 = vmatprep.subr.mxu0 0.0
    %3159 = vmatpush1.msra.mxu0 %v3110
    %3160 = vmatprep.subr.mxu0 0.0
    %3161 = vmatpush1.msra.mxu0 %v3109
    %3162 = vmatprep.subr.mxu0 0.0
    %3163 = vmatpush2.msra.mxu0 0.0
    %3164 = vmatprep.subr.mxu0 0.0
    %3165 = vmatpush2.msra.mxu0 0.0
    %3166 = vmatprep.subr.mxu0 0.0
    %3167 = vmatpush2.msra.mxu0 0.0
    %3168 = vmatprep.subr.mxu0 0.0
    %3169 = vmatpush2.msra.mxu0 0.0
    %3170 = vmatprep.subr.mxu0 0.0
    %3171 = vmatpush2.msra.mxu0 0.0
    %3172 = vmatprep.subr.mxu0 0.0
    %3173 = vmatpush2.msra.mxu0 0.0
    %3174 = vmatprep.subr.mxu0 0.0
    %3175 = vmatpush2.msra.mxu0 0.0
    %3176 = vmatprep.subr.mxu0 0.0
    %3177 = vmatpush2.msra.mxu0 0.0
    %3178 = vmatprep.subr.mxu0 0.0
    %3179 = vmatpush2.msra.mxu0 0.0
    %3180 = vmatprep.subr.mxu0 0.0
    %3181 = vmatpush2.msra.mxu0 0.0
    %3182 = vmatprep.subr.mxu0 0.0
    %3183 = vmatpush2.msra.mxu0 0.0
    %3184 = vmatprep.subr.mxu0 0.0
    %3185 = vmatpush2.msra.mxu0 0.0
    %3186 = vmatprep.subr.mxu0 0.0
    %3187 = vmatpush2.msra.mxu0 0.0
    %3188 = vmatprep.subr.mxu0 0.0
    %3189 = vmatpush2.msra.mxu0 0.0
    %3190 = vmatprep.subr.mxu0 0.0
    %3191 = vmatpush2.msra.mxu0 0.0
    %3192 = vmatprep.subr.mxu0 0.0
    %3193 = vmatpush2.msra.mxu0 0.0
    %3194 = vmatprep.mubr.f32.mxu0 0.0
    %3195 = vmatmul.mubr.f32.gmra.mxu0 %v3128
    %v3196 = vpop.f32.mrf.mxu0
    %v3197 = vadd.f32 %v3125, %v3196
    %v3198 = vpop.f32.mrf.mxu0
    %3199 = vdwg.mxu0
    %v3200 = vmax.f32 %v3197, 0.0
    %v3201 = vld [vmem:[#allocation7 + $0x317] sm:$0xff]
    %v3202 = vld [vmem:[#allocation7 + $0x31f] sm:$0xff]
    %v3203 = vld [vmem:[#allocation7 + $0x327] sm:$0xff]
    %v3204 = vld [vmem:[#allocation7 + $0x32f] sm:$0xff]
    %v3205 = vld [vmem:[#allocation7 + $0x337] sm:$0x1]
    %v3206 = vlaneseq
    %v3207 = vshrl.u32 %v3206, 7
    %v3208 = vsub.s32 0, %v3207
    %v3209 = vrot.slane %v3205, %v3208
    %vm3210 = vcmask 261120
    %v3212 = vsel %vm3210, %v3200, 0
    %3214 = vmatprep.subr.mxu0 0.0
    %3215 = vmatpush1.msra.mxu0 0.0
    %3216 = vmatprep.subr.mxu0 0.0
    %3217 = vmatpush1.msra.mxu0 0.0
    %3218 = vmatprep.subr.mxu0 0.0
    %3219 = vmatpush1.msra.mxu0 0.0
    %3220 = vmatprep.subr.mxu0 0.0
    %3221 = vmatpush1.msra.mxu0 0.0
    %3222 = vmatprep.subr.mxu0 0.0
    %3223 = vmatpush1.msra.mxu0 0.0
    %3224 = vmatprep.subr.mxu0 0.0
    %3225 = vmatpush1.msra.mxu0 0.0
    %3226 = vmatprep.subr.mxu0 0.0
    %3227 = vmatpush1.msra.mxu0 0.0
    %3228 = vmatprep.subr.mxu0 0.0
    %3229 = vmatpush1.msra.mxu0 0.0
    %3230 = vmatprep.subr.mxu0 0.0
    %3231 = vmatpush1.msra.mxu0 0.0
    %3232 = vmatprep.subr.mxu0 0.0
    %3233 = vmatpush1.msra.mxu0 0.0
    %3234 = vmatprep.subr.mxu0 0.0
    %3235 = vmatpush1.msra.mxu0 0.0
    %3236 = vmatprep.subr.mxu0 0.0
    %3237 = vmatpush1.msra.mxu0 0.0
    %3238 = vmatprep.subr.mxu0 0.0
    %3239 = vmatpush1.msra.mxu0 %v3204
    %3240 = vmatprep.subr.mxu0 0.0
    %3241 = vmatpush1.msra.mxu0 %v3203
    %3242 = vmatprep.subr.mxu0 0.0
    %3243 = vmatpush1.msra.mxu0 %v3202
    %3244 = vmatprep.subr.mxu0 0.0
    %3245 = vmatpush1.msra.mxu0 %v3201
    %3246 = vmatprep.subr.mxu0 0.0
    %3247 = vmatpush2.msra.mxu0 0.0
    %3248 = vmatprep.subr.mxu0 0.0
    %3249 = vmatpush2.msra.mxu0 0.0
    %3250 = vmatprep.subr.mxu0 0.0
    %3251 = vmatpush2.msra.mxu0 0.0
    %3252 = vmatprep.subr.mxu0 0.0
    %3253 = vmatpush2.msra.mxu0 0.0
    %3254 = vmatprep.subr.mxu0 0.0
    %3255 = vmatpush2.msra.mxu0 0.0
    %3256 = vmatprep.subr.mxu0 0.0
    %3257 = vmatpush2.msra.mxu0 0.0
    %3258 = vmatprep.subr.mxu0 0.0
    %3259 = vmatpush2.msra.mxu0 0.0
    %3260 = vmatprep.subr.mxu0 0.0
    %3261 = vmatpush2.msra.mxu0 0.0
    %3262 = vmatprep.subr.mxu0 0.0
    %3263 = vmatpush2.msra.mxu0 0.0
    %3264 = vmatprep.subr.mxu0 0.0
    %3265 = vmatpush2.msra.mxu0 0.0
    %3266 = vmatprep.subr.mxu0 0.0
    %3267 = vmatpush2.msra.mxu0 0.0
    %3268 = vmatprep.subr.mxu0 0.0
    %3269 = vmatpush2.msra.mxu0 0.0
    %3270 = vmatprep.subr.mxu0 0.0
    %3271 = vmatpush2.msra.mxu0 0.0
    %3272 = vmatprep.subr.mxu0 0.0
    %3273 = vmatpush2.msra.mxu0 0.0
    %3274 = vmatprep.subr.mxu0 0.0
    %3275 = vmatpush2.msra.mxu0 0.0
    %3276 = vmatprep.subr.mxu0 0.0
    %3277 = vmatpush2.msra.mxu0 0.0
    %3278 = vmatprep.mubr.f32.mxu0 0.0
    %3279 = vmatmul.mubr.f32.gmra.mxu0 %v3212
    %v3280 = vpop.f32.mrf.mxu0
    %v3281 = vadd.f32 %v3209, %v3280
    %v3282 = vpop.f32.mrf.mxu0
    %3283 = vdwg.mxu0
    %v3284 = vmax.f32 %v3281, 0.0
    %v3285 = vld [vmem:[#allocation7 + $0x338] sm:$0xff]
    %v3286 = vld [vmem:[#allocation7 + $0x340] sm:$0xff]
    %v3287 = vld [vmem:[#allocation7 + $0x348] sm:$0xff]
    %v3288 = vld [vmem:[#allocation7 + $0x350] sm:$0xff]
    %v3289 = vld [vmem:[#allocation7 + $0x358] sm:$0xff]
    %v3290 = vld [vmem:[#allocation7 + $0x360] sm:$0xff]
    %v3291 = vld [vmem:[#allocation7 + $0x368] sm:$0xff]
    %v3292 = vld [vmem:[#allocation7 + $0x370] sm:$0xff]
    %v3293 = vld [vmem:[#allocation7 + $0x378] sm:$0x1]
    %v3294 = vlaneseq
    %v3295 = vshrl.u32 %v3294, 7
    %v3296 = vsub.s32 0, %v3295
    %v3297 = vrot.slane %v3293, %v3296
    %v3299 = vsel %vm643, %v3284, 0
    %3301 = vmatprep.subr.mxu0 0.0
    %3302 = vmatpush1.msra.mxu0 0.0
    %3303 = vmatprep.subr.mxu0 0.0
    %3304 = vmatpush1.msra.mxu0 0.0
    %3305 = vmatprep.subr.mxu0 0.0
    %3306 = vmatpush1.msra.mxu0 0.0
    %3307 = vmatprep.subr.mxu0 0.0
    %3308 = vmatpush1.msra.mxu0 0.0
    %3309 = vmatprep.subr.mxu0 0.0
    %3310 = vmatpush1.msra.mxu0 0.0
    %3311 = vmatprep.subr.mxu0 0.0
    %3312 = vmatpush1.msra.mxu0 0.0
    %3313 = vmatprep.subr.mxu0 0.0
    %3314 = vmatpush1.msra.mxu0 0.0
    %3315 = vmatprep.subr.mxu0 0.0
    %3316 = vmatpush1.msra.mxu0 0.0
    %3317 = vmatprep.subr.mxu0 0.0
    %3318 = vmatpush1.msra.mxu0 %v3292
    %3319 = vmatprep.subr.mxu0 0.0
    %3320 = vmatpush1.msra.mxu0 %v3291
    %3321 = vmatprep.subr.mxu0 0.0
    %3322 = vmatpush1.msra.mxu0 %v3290
    %3323 = vmatprep.subr.mxu0 0.0
    %3324 = vmatpush1.msra.mxu0 %v3289
    %3325 = vmatprep.subr.mxu0 0.0
    %3326 = vmatpush1.msra.mxu0 %v3288
    %3327 = vmatprep.subr.mxu0 0.0
    %3328 = vmatpush1.msra.mxu0 %v3287
    %3329 = vmatprep.subr.mxu0 0.0
    %3330 = vmatpush1.msra.mxu0 %v3286
    %3331 = vmatprep.subr.mxu0 0.0
    %3332 = vmatpush1.msra.mxu0 %v3285
    %3333 = vmatprep.subr.mxu0 0.0
    %3334 = vmatpush2.msra.mxu0 0.0
    %3335 = vmatprep.subr.mxu0 0.0
    %3336 = vmatpush2.msra.mxu0 0.0
    %3337 = vmatprep.subr.mxu0 0.0
    %3338 = vmatpush2.msra.mxu0 0.0
    %3339 = vmatprep.subr.mxu0 0.0
    %3340 = vmatpush2.msra.mxu0 0.0
    %3341 = vmatprep.subr.mxu0 0.0
    %3342 = vmatpush2.msra.mxu0 0.0
    %3343 = vmatprep.subr.mxu0 0.0
    %3344 = vmatpush2.msra.mxu0 0.0
    %3345 = vmatprep.subr.mxu0 0.0
    %3346 = vmatpush2.msra.mxu0 0.0
    %3347 = vmatprep.subr.mxu0 0.0
    %3348 = vmatpush2.msra.mxu0 0.0
    %3349 = vmatprep.subr.mxu0 0.0
    %3350 = vmatpush2.msra.mxu0 0.0
    %3351 = vmatprep.subr.mxu0 0.0
    %3352 = vmatpush2.msra.mxu0 0.0
    %3353 = vmatprep.subr.mxu0 0.0
    %3354 = vmatpush2.msra.mxu0 0.0
    %3355 = vmatprep.subr.mxu0 0.0
    %3356 = vmatpush2.msra.mxu0 0.0
    %3357 = vmatprep.subr.mxu0 0.0
    %3358 = vmatpush2.msra.mxu0 0.0
    %3359 = vmatprep.subr.mxu0 0.0
    %3360 = vmatpush2.msra.mxu0 0.0
    %3361 = vmatprep.subr.mxu0 0.0
    %3362 = vmatpush2.msra.mxu0 0.0
    %3363 = vmatprep.subr.mxu0 0.0
    %3364 = vmatpush2.msra.mxu0 0.0
    %3365 = vmatprep.mubr.f32.mxu0 0.0
    %3366 = vmatmul.mubr.f32.gmra.mxu0 %v3299
    %v3367 = vpop.f32.mrf.mxu0
    %v3368 = vadd.f32 %v3297, %v3367
    %v3369 = vpop.f32.mrf.mxu0
    %3370 = vdwg.mxu0
    %v3371 = vmax.f32 %v3368, 0.0
    %v3372 = vld [vmem:[#allocation7 + $0x379] sm:$0xff]
    %v3373 = vld [vmem:[#allocation7 + $0x381] sm:$0xff]
    %v3374 = vld [vmem:[#allocation7 + $0x389] sm:$0xff]
    %v3375 = vld [vmem:[#allocation7 + $0x391] sm:$0xff]
    %v3376 = vld [vmem:[#allocation7 + $0x399] sm:$0xff]
    %v3377 = vld [vmem:[#allocation7 + $0x3a1] sm:$0xff]
    %v3378 = vld [vmem:[#allocation7 + $0x3a9] sm:$0xff]
    %v3379 = vld [vmem:[#allocation7 + $0x3b1] sm:$0xff]
    %v3380 = vld [vmem:[#allocation7 + $0x3b9] sm:$0x1]
    %v3381 = vlaneseq
    %v3382 = vshrl.u32 %v3381, 7
    %v3383 = vsub.s32 0, %v3382
    %v3384 = vrot.slane %v3380, %v3383
    %v3386 = vsel %vm643, %v3371, 0
    %3388 = vmatprep.subr.mxu0 0.0
    %3389 = vmatpush1.msra.mxu0 0.0
    %3390 = vmatprep.subr.mxu0 0.0
    %3391 = vmatpush1.msra.mxu0 0.0
    %3392 = vmatprep.subr.mxu0 0.0
    %3393 = vmatpush1.msra.mxu0 0.0
    %3394 = vmatprep.subr.mxu0 0.0
    %3395 = vmatpush1.msra.mxu0 0.0
    %3396 = vmatprep.subr.mxu0 0.0
    %3397 = vmatpush1.msra.mxu0 0.0
    %3398 = vmatprep.subr.mxu0 0.0
    %3399 = vmatpush1.msra.mxu0 0.0
    %3400 = vmatprep.subr.mxu0 0.0
    %3401 = vmatpush1.msra.mxu0 0.0
    %3402 = vmatprep.subr.mxu0 0.0
    %3403 = vmatpush1.msra.mxu0 0.0
    %3404 = vmatprep.subr.mxu0 0.0
    %3405 = vmatpush1.msra.mxu0 %v3379
    %3406 = vmatprep.subr.mxu0 0.0
    %3407 = vmatpush1.msra.mxu0 %v3378
    %3408 = vmatprep.subr.mxu0 0.0
    %3409 = vmatpush1.msra.mxu0 %v3377
    %3410 = vmatprep.subr.mxu0 0.0
    %3411 = vmatpush1.msra.mxu0 %v3376
    %3412 = vmatprep.subr.mxu0 0.0
    %3413 = vmatpush1.msra.mxu0 %v3375
    %3414 = vmatprep.subr.mxu0 0.0
    %3415 = vmatpush1.msra.mxu0 %v3374
    %3416 = vmatprep.subr.mxu0 0.0
    %3417 = vmatpush1.msra.mxu0 %v3373
    %3418 = vmatprep.subr.mxu0 0.0
    %3419 = vmatpush1.msra.mxu0 %v3372
    %3420 = vmatprep.subr.mxu0 0.0
    %3421 = vmatpush2.msra.mxu0 0.0
    %3422 = vmatprep.subr.mxu0 0.0
    %3423 = vmatpush2.msra.mxu0 0.0
    %3424 = vmatprep.subr.mxu0 0.0
    %3425 = vmatpush2.msra.mxu0 0.0
    %3426 = vmatprep.subr.mxu0 0.0
    %3427 = vmatpush2.msra.mxu0 0.0
    %3428 = vmatprep.subr.mxu0 0.0
    %3429 = vmatpush2.msra.mxu0 0.0
    %3430 = vmatprep.subr.mxu0 0.0
    %3431 = vmatpush2.msra.mxu0 0.0
    %3432 = vmatprep.subr.mxu0 0.0
    %3433 = vmatpush2.msra.mxu0 0.0
    %3434 = vmatprep.subr.mxu0 0.0
    %3435 = vmatpush2.msra.mxu0 0.0
    %3436 = vmatprep.subr.mxu0 0.0
    %3437 = vmatpush2.msra.mxu0 0.0
    %3438 = vmatprep.subr.mxu0 0.0
    %3439 = vmatpush2.msra.mxu0 0.0
    %3440 = vmatprep.subr.mxu0 0.0
    %3441 = vmatpush2.msra.mxu0 0.0
    %3442 = vmatprep.subr.mxu0 0.0
    %3443 = vmatpush2.msra.mxu0 0.0
    %3444 = vmatprep.subr.mxu0 0.0
    %3445 = vmatpush2.msra.mxu0 0.0
    %3446 = vmatprep.subr.mxu0 0.0
    %3447 = vmatpush2.msra.mxu0 0.0
    %3448 = vmatprep.subr.mxu0 0.0
    %3449 = vmatpush2.msra.mxu0 0.0
    %3450 = vmatprep.subr.mxu0 0.0
    %3451 = vmatpush2.msra.mxu0 0.0
    %3452 = vmatprep.mubr.f32.mxu0 0.0
    %3453 = vmatmul.mubr.f32.gmra.mxu0 %v3386
    %v3454 = vpop.f32.mrf.mxu0
    %v3455 = vadd.f32 %v3384, %v3454
    %v3456 = vpop.f32.mrf.mxu0
    %3457 = vdwg.mxu0
    %v3458 = vrot.slane %v3284, 4
    %v3460 = vsub.f32 %v3284, %v3458
    %v3461 = vmul.f32 %v3460, %v3460
    %vm3462 = vcmask 519168
    %v3463 = vsel %vm3462, %v3461, 0.0
    %3464 = vadd.xlane.f32.xlu0 %v3463
    %v3465 = vpop.xlane.xlu0 %3464
    %v3466 = vrot.slane %v3465, 4
    %v3467 = vadd.f32 %v3465, %v3466
    %v3468 = vrot.slane %v3467, 2
    %v3469 = vadd.f32 %v3467, %v3468
    %v3470 = vrot.slane %v3469, 1
    %v3471 = vadd.f32 %v3469, %v3470
    %s3472 = vtos %v3471
    %v3473 = vrcp.pop 256.0
    %s3474 = vtos %v3473
    %s3475 = smul.f32 %s3472, %s3474
    %v3476 = vmul.f32 %v3455, %v3455
    %v3477 = vsel %vm1018, %v3476, 0.0
    %3478 = vadd.xlane.f32.xlu0 %v3477
    %v3479 = vpop.xlane.xlu0 %3478
    %v3480 = vmax.f32 %v3479, 1e-16
    %v3481 = vrsqrt.pop %v3480
    %vm3482 = vcmask 130052
    %v3483 = vsel %vm3482, %v3476, 0.0
    %3484 = vadd.xlane.f32.xlu0 %v3483
    %v3485 = vpop.xlane.xlu0 %3484
    %v3486 = vmax.f32 %v3485, 1e-16
    %v3487 = vrsqrt.pop %v3486
    %v3488 = vmul.f32 %v3455, %v3481
    %v3489 = vmul.f32 %v3455, %v3487
    %v3491 = vrot.slane %v3489, 4
    %v3493 = vsel %vm849, %v3488, 0
    %v3495 = vsel %vm849, %v3491, 0
    %3497 = vmatprep.subr.mxu0 0.0
    %3498 = vmatpush1.xpose.msra.mxu0 0.0
    %3499 = vmatprep.subr.mxu0 0.0
    %3500 = vmatpush1.xpose.msra.mxu0 0.0
    %3501 = vmatprep.subr.mxu0 0.0
    %3502 = vmatpush1.xpose.msra.mxu0 0.0
    %3503 = vmatprep.subr.mxu0 0.0
    %3504 = vmatpush1.xpose.msra.mxu0 0.0
    %3505 = vmatprep.subr.mxu0 0.0
    %3506 = vmatpush1.xpose.msra.mxu0 0.0
    %3507 = vmatprep.subr.mxu0 0.0
    %3508 = vmatpush1.xpose.msra.mxu0 0.0
    %3509 = vmatprep.subr.mxu0 0.0
    %3510 = vmatpush1.xpose.msra.mxu0 0.0
    %3511 = vmatprep.subr.mxu0 0.0
    %3512 = vmatpush1.xpose.msra.mxu0 0.0
    %3513 = vmatprep.subr.mxu0 0.0
    %3514 = vmatpush1.xpose.msra.mxu0 0.0
    %3515 = vmatprep.subr.mxu0 0.0
    %3516 = vmatpush1.xpose.msra.mxu0 0.0
    %3517 = vmatprep.subr.mxu0 0.0
    %3518 = vmatpush1.xpose.msra.mxu0 0.0
    %3519 = vmatprep.subr.mxu0 0.0
    %3520 = vmatpush1.xpose.msra.mxu0 0.0
    %3521 = vmatprep.subr.mxu0 0.0
    %3522 = vmatpush1.xpose.msra.mxu0 0.0
    %3523 = vmatprep.subr.mxu0 0.0
    %3524 = vmatpush1.xpose.msra.mxu0 0.0
    %3525 = vmatprep.subr.mxu0 0.0
    %3526 = vmatpush1.xpose.msra.mxu0 0.0
    %3527 = vmatprep.subr.mxu0 0.0
    %3528 = vmatpush1.xpose.msra.mxu0 %v3495
    %3529 = vmatprep.subr.mxu0 0.0
    %3530 = vmatpush2.xpose.msra.mxu0 0.0
    %3531 = vmatprep.subr.mxu0 0.0
    %3532 = vmatpush2.xpose.msra.mxu0 0.0
    %3533 = vmatprep.subr.mxu0 0.0
    %3534 = vmatpush2.xpose.msra.mxu0 0.0
    %3535 = vmatprep.subr.mxu0 0.0
    %3536 = vmatpush2.xpose.msra.mxu0 0.0
    %3537 = vmatprep.subr.mxu0 0.0
    %3538 = vmatpush2.xpose.msra.mxu0 0.0
    %3539 = vmatprep.subr.mxu0 0.0
    %3540 = vmatpush2.xpose.msra.mxu0 0.0
    %3541 = vmatprep.subr.mxu0 0.0
    %3542 = vmatpush2.xpose.msra.mxu0 0.0
    %3543 = vmatprep.subr.mxu0 0.0
    %3544 = vmatpush2.xpose.msra.mxu0 0.0
    %3545 = vmatprep.subr.mxu0 0.0
    %3546 = vmatpush2.xpose.msra.mxu0 0.0
    %3547 = vmatprep.subr.mxu0 0.0
    %3548 = vmatpush2.xpose.msra.mxu0 0.0
    %3549 = vmatprep.subr.mxu0 0.0
    %3550 = vmatpush2.xpose.msra.mxu0 0.0
    %3551 = vmatprep.subr.mxu0 0.0
    %3552 = vmatpush2.xpose.msra.mxu0 0.0
    %3553 = vmatprep.subr.mxu0 0.0
    %3554 = vmatpush2.xpose.msra.mxu0 0.0
    %3555 = vmatprep.subr.mxu0 0.0
    %3556 = vmatpush2.xpose.msra.mxu0 0.0
    %3557 = vmatprep.subr.mxu0 0.0
    %3558 = vmatpush2.xpose.msra.mxu0 0.0
    %3559 = vmatprep.subr.mxu0 0.0
    %3560 = vmatpush2.xpose.msra.mxu0 0.0
    %3561 = vmatprep.mubr.f32.mxu0 0.0
    %3562 = vmatmul.mubr.f32.gmra.mxu0 %v3493
    %v3563 = vpop.f32.mrf.mxu0
    %v3564 = vadd.f32 0.0, %v3563
    %v3565 = vpop.f32.mrf.mxu0
    %3566 = vdwg.mxu0
    %v3567 = vlaneseq
    %v3568 = vshrl.u32 %v3567, 7
    %v3569 = vlaneseq
    %v3570 = vand.u32 %v3569, 127
    %vm3571 = vcmp.eq.s32.totalorder %v3568, %v3570
    %v3572 = vsel %vm3571, %v3564, 0.0
    %vm3573 = vcmask 27648
    %v3574 = vsel %vm3573, %v3572, 0.0
    %3575 = vadd.xlane.f32.xlu0 %v3574
    %v3576 = vpop.xlane.xlu0 %3575
    %v3577 = vrot.slane %v3576, 4
    %v3578 = vadd.f32 %v3576, %v3577
    %v3579 = vrot.slane %v3578, 2
    %v3580 = vadd.f32 %v3578, %v3579
    %v3581 = vrot.slane %v3580, 1
    %v3582 = vadd.f32 %v3580, %v3581
    %s3583 = vtos %v3582
    %v3584 = vsel %vm3573, %v3564, -inf
    %3585 = vmax.xlane.f32.xlu0 %v3584
    %v3586 = vpop.xlane.xlu0 %3585
    %v3587 = vsub.f32 %v3564, %v3586
    %v3588 = vmul.f32 %v3587, 1.442695
    %v3589 = vpow.pop %v3588
    %v3590 = vsel %vm3573, %v3589, 0.0
    %3591 = vadd.xlane.f32.xlu0 %v3590
    %v3592 = vpop.xlane.xlu0 %3591
    %v3593 = vlog2.pop %v3592
    %v3594 = vmul.f32 %v3593, 0.6931472
    %v3595 = vadd.f32 %v3586, %v3594
    %v3596 = vrot.slane %v3584, 4
    %v3597 = vmax.f32 %v3584, %v3596
    %v3598 = vrot.slane %v3597, 2
    %v3599 = vmax.f32 %v3597, %v3598
    %v3600 = vrot.slane %v3599, 1
    %v3601 = vmax.f32 %v3599, %v3600
    %v3602 = vsub.f32 %v3564, %v3601
    %v3603 = vmul.f32 %v3602, 1.442695
    %v3604 = vpow.pop %v3603
    %v3605 = vsel %vm3573, %v3604, 0.0
    %v3606 = vrot.slane %v3605, 4
    %v3607 = vadd.f32 %v3605, %v3606
    %v3608 = vrot.slane %v3607, 2
    %v3609 = vadd.f32 %v3607, %v3608
    %v3610 = vrot.slane %v3609, 1
    %v3611 = vadd.f32 %v3609, %v3610
    %v3612 = vlog2.pop %v3611
    %v3613 = vmul.f32 %v3612, 0.6931472
    %v3614 = vadd.f32 %v3601, %v3613
    %vm3615 = vcmask 3072
    %v3616 = vsel %vm3615, %v3595, 0.0
    %3617 = vadd.xlane.f32.xlu0 %v3616
    %v3618 = vpop.xlane.xlu0 %3617
    %v3619 = vrot.slane %v3618, 4
    %v3620 = vadd.f32 %v3618, %v3619
    %v3621 = vrot.slane %v3620, 2
    %v3622 = vadd.f32 %v3620, %v3621
    %v3623 = vrot.slane %v3622, 1
    %v3624 = vadd.f32 %v3622, %v3623
    %s3625 = vtos %v3624
    %vm3626 = vcmask 24576
    %v3627 = vsel %vm3626, %v3614, 0.0
    %3628 = vadd.xlane.f32.xlu0 %v3627
    %v3629 = vpop.xlane.xlu0 %3628
    %v3630 = vrot.slane %v3629, 4
    %v3631 = vadd.f32 %v3629, %v3630
    %v3632 = vrot.slane %v3631, 2
    %v3633 = vadd.f32 %v3631, %v3632
    %v3634 = vrot.slane %v3633, 1
    %v3635 = vadd.f32 %v3633, %v3634
    %s3636 = vtos %v3635
    %s3637 = sadd.f32 %s3625, %s3636
    %s3638 = smul.f32 %s3583, 2.0
    %s3639 = ssub.f32 %s3637, %s3638
    %v3640 = vrcp.pop 8.0
    %s3641 = vtos %v3640
    %s3642 = smul.f32 %s3639, %s3641
    %v3643 = vld [vmem:[#allocation7 + $0x3ba] sm:$0xff]
    %v3644 = vld [vmem:[#allocation7 + $0x3c2] sm:$0xff]
    %v3645 = vld [vmem:[#allocation7 + $0x3ca] sm:$0xff]
    %v3646 = vld [vmem:[#allocation7 + $0x3d2] sm:$0xff]
    %v3647 = vld [vmem:[#allocation7 + $0x3da] sm:$0xff]
    %v3648 = vld [vmem:[#allocation7 + $0x3e2] sm:$0xff]
    %v3649 = vld [vmem:[#allocation7 + $0x3ea] sm:$0xff]
    %v3650 = vld [vmem:[#allocation7 + $0x3f2] sm:$0xff]
    %v3651 = vld [vmem:[#allocation7 + $0x3fa] sm:$0xff]
    %v3652 = vld [vmem:[#allocation7 + $0x402] sm:$0xff]
    %v3653 = vld [vmem:[#allocation7 + $0x40a] sm:$0xff]
    %v3654 = vld [vmem:[#allocation7 + $0x412] sm:$0xff]
    %v3655 = vld [vmem:[#allocation7 + $0x41a] sm:$0xff]
    %v3656 = vld [vmem:[#allocation7 + $0x422] sm:$0xff]
    %v3657 = vld [vmem:[#allocation7 + $0x42a] sm:$0xff]
    %v3658 = vld [vmem:[#allocation7 + $0x432] sm:$0xff]
    %3659 = vmatprep.subr.mxu0 0.0
    %3660 = vmatpush1.msra.mxu0 0.0
    %3661 = vmatprep.subr.mxu0 0.0
    %3662 = vmatpush1.msra.mxu0 0.0
    %3663 = vmatprep.subr.mxu0 0.0
    %3664 = vmatpush1.msra.mxu0 0.0
    %3665 = vmatprep.subr.mxu0 0.0
    %3666 = vmatpush1.msra.mxu0 0.0
    %3667 = vmatprep.subr.mxu0 0.0
    %3668 = vmatpush1.msra.mxu0 0.0
    %3669 = vmatprep.subr.mxu0 0.0
    %3670 = vmatpush1.msra.mxu0 0.0
    %3671 = vmatprep.subr.mxu0 0.0
    %3672 = vmatpush1.msra.mxu0 0.0
    %3673 = vmatprep.subr.mxu0 0.0
    %3674 = vmatpush1.msra.mxu0 0.0
    %3675 = vmatprep.subr.mxu0 0.0
    %3676 = vmatpush1.msra.mxu0 %v3658
    %3677 = vmatprep.subr.mxu0 0.0
    %3678 = vmatpush1.msra.mxu0 %v3657
    %3679 = vmatprep.subr.mxu0 0.0
    %3680 = vmatpush1.msra.mxu0 %v3656
    %3681 = vmatprep.subr.mxu0 0.0
    %3682 = vmatpush1.msra.mxu0 %v3655
    %3683 = vmatprep.subr.mxu0 0.0
    %3684 = vmatpush1.msra.mxu0 %v3654
    %3685 = vmatprep.subr.mxu0 0.0
    %3686 = vmatpush1.msra.mxu0 %v3653
    %3687 = vmatprep.subr.mxu0 0.0
    %3688 = vmatpush1.msra.mxu0 %v3652
    %3689 = vmatprep.subr.mxu0 0.0
    %3690 = vmatpush1.msra.mxu0 %v3651
    %3691 = vmatprep.subr.mxu0 0.0
    %3692 = vmatpush2.msra.mxu0 0.0
    %3693 = vmatprep.subr.mxu0 0.0
    %3694 = vmatpush2.msra.mxu0 0.0
    %3695 = vmatprep.subr.mxu0 0.0
    %3696 = vmatpush2.msra.mxu0 0.0
    %3697 = vmatprep.subr.mxu0 0.0
    %3698 = vmatpush2.msra.mxu0 0.0
    %3699 = vmatprep.subr.mxu0 0.0
    %3700 = vmatpush2.msra.mxu0 0.0
    %3701 = vmatprep.subr.mxu0 0.0
    %3702 = vmatpush2.msra.mxu0 0.0
    %3703 = vmatprep.subr.mxu0 0.0
    %3704 = vmatpush2.msra.mxu0 0.0
    %3705 = vmatprep.subr.mxu0 0.0
    %3706 = vmatpush2.msra.mxu0 0.0
    %3707 = vmatprep.subr.mxu0 0.0
    %3708 = vmatpush2.msra.mxu0 0.0
    %3709 = vmatprep.subr.mxu0 0.0
    %3710 = vmatpush2.msra.mxu0 0.0
    %3711 = vmatprep.subr.mxu0 0.0
    %3712 = vmatpush2.msra.mxu0 0.0
    %3713 = vmatprep.subr.mxu0 0.0
    %3714 = vmatpush2.msra.mxu0 0.0
    %3715 = vmatprep.subr.mxu0 0.0
    %3716 = vmatpush2.msra.mxu0 0.0
    %3717 = vmatprep.subr.mxu0 0.0
    %3718 = vmatpush2.msra.mxu0 0.0
    %3719 = vmatprep.subr.mxu0 0.0
    %3720 = vmatpush2.msra.mxu0 0.0
    %3721 = vmatprep.subr.mxu0 0.0
    %3722 = vmatpush2.msra.mxu0 0.0
    %3723 = vmatprep.mubr.f32.mxu0 0.0
    %3724 = vmatmul.mubr.f32.gmra.mxu0 %v3299
    %v3725 = vpop.f32.mrf.mxu0
    %v3726 = vadd.f32 0.0, %v3725
    %v3727 = vpop.f32.mrf.mxu0
    %3728 = vdwg.mxu0
    %v3730 = vsel %vm643, %v3108, 0
    %3732 = vmatprep.subr.mxu0 0.0
    %3733 = vmatpush1.msra.mxu0 0.0
    %3734 = vmatprep.subr.mxu0 0.0
    %3735 = vmatpush1.msra.mxu0 0.0
    %3736 = vmatprep.subr.mxu0 0.0
    %3737 = vmatpush1.msra.mxu0 0.0
    %3738 = vmatprep.subr.mxu0 0.0
    %3739 = vmatpush1.msra.mxu0 0.0
    %3740 = vmatprep.subr.mxu0 0.0
    %3741 = vmatpush1.msra.mxu0 0.0
    %3742 = vmatprep.subr.mxu0 0.0
    %3743 = vmatpush1.msra.mxu0 0.0
    %3744 = vmatprep.subr.mxu0 0.0
    %3745 = vmatpush1.msra.mxu0 0.0
    %3746 = vmatprep.subr.mxu0 0.0
    %3747 = vmatpush1.msra.mxu0 0.0
    %3748 = vmatprep.subr.mxu0 0.0
    %3749 = vmatpush1.msra.mxu0 %v3650
    %3750 = vmatprep.subr.mxu0 0.0
    %3751 = vmatpush1.msra.mxu0 %v3649
    %3752 = vmatprep.subr.mxu0 0.0
    %3753 = vmatpush1.msra.mxu0 %v3648
    %3754 = vmatprep.subr.mxu0 0.0
    %3755 = vmatpush1.msra.mxu0 %v3647
    %3756 = vmatprep.subr.mxu0 0.0
    %3757 = vmatpush1.msra.mxu0 %v3646
    %3758 = vmatprep.subr.mxu0 0.0
    %3759 = vmatpush1.msra.mxu0 %v3645
    %3760 = vmatprep.subr.mxu0 0.0
    %3761 = vmatpush1.msra.mxu0 %v3644
    %3762 = vmatprep.subr.mxu0 0.0
    %3763 = vmatpush1.msra.mxu0 %v3643
    %3764 = vmatprep.subr.mxu0 0.0
    %3765 = vmatpush2.msra.mxu0 0.0
    %3766 = vmatprep.subr.mxu0 0.0
    %3767 = vmatpush2.msra.mxu0 0.0
    %3768 = vmatprep.subr.mxu0 0.0
    %3769 = vmatpush2.msra.mxu0 0.0
    %3770 = vmatprep.subr.mxu0 0.0
    %3771 = vmatpush2.msra.mxu0 0.0
    %3772 = vmatprep.subr.mxu0 0.0
    %3773 = vmatpush2.msra.mxu0 0.0
    %3774 = vmatprep.subr.mxu0 0.0
    %3775 = vmatpush2.msra.mxu0 0.0
    %3776 = vmatprep.subr.mxu0 0.0
    %3777 = vmatpush2.msra.mxu0 0.0
    %3778 = vmatprep.subr.mxu0 0.0
    %3779 = vmatpush2.msra.mxu0 0.0
    %3780 = vmatprep.subr.mxu0 0.0
    %3781 = vmatpush2.msra.mxu0 0.0
    %3782 = vmatprep.subr.mxu0 0.0
    %3783 = vmatpush2.msra.mxu0 0.0
    %3784 = vmatprep.subr.mxu0 0.0
    %3785 = vmatpush2.msra.mxu0 0.0
    %3786 = vmatprep.subr.mxu0 0.0
    %3787 = vmatpush2.msra.mxu0 0.0
    %3788 = vmatprep.subr.mxu0 0.0
    %3789 = vmatpush2.msra.mxu0 0.0
    %3790 = vmatprep.subr.mxu0 0.0
    %3791 = vmatpush2.msra.mxu0 0.0
    %3792 = vmatprep.subr.mxu0 0.0
    %3793 = vmatpush2.msra.mxu0 0.0
    %3794 = vmatprep.subr.mxu0 0.0
    %3795 = vmatpush2.msra.mxu0 0.0
    %3796 = vmatprep.mubr.f32.mxu0 0.0
    %3797 = vmatmul.mubr.f32.gmra.mxu0 %v3730
    %v3798 = vpop.f32.mrf.mxu0
    %v3799 = vadd.f32 %v3726, %v3798
    %v3800 = vpop.f32.mrf.mxu0
    %3801 = vdwg.mxu0
    %v3802 = vld [vmem:[#allocation7 + $0x43a] sm:$0x1]
    %v3803 = vlaneseq
    %v3804 = vshrl.u32 %v3803, 7
    %v3805 = vsub.s32 0, %v3804
    %v3806 = vrot.slane %v3802, %v3805
    %v3807 = vadd.f32 %v3799, %v3806
    %v3808 = vmax.f32 %v3807, 0.0
    %v3809 = vld [vmem:[#allocation7 + $0x43b] sm:$0xff]
    %v3810 = vld [vmem:[#allocation7 + $0x443] sm:$0xff]
    %v3811 = vld [vmem:[#allocation7 + $0x44b] sm:$0xff]
    %v3812 = vld [vmem:[#allocation7 + $0x453] sm:$0xff]
    %v3813 = vld [vmem:[#allocation7 + $0x45b] sm:$0xff]
    %v3814 = vld [vmem:[#allocation7 + $0x463] sm:$0xff]
    %v3815 = vld [vmem:[#allocation7 + $0x46b] sm:$0xff]
    %v3816 = vld [vmem:[#allocation7 + $0x473] sm:$0xff]
    %v3817 = vld [vmem:[#allocation7 + $0x47b] sm:$0x1]
    %v3818 = vlaneseq
    %v3819 = vshrl.u32 %v3818, 7
    %v3820 = vsub.s32 0, %v3819
    %v3821 = vrot.slane %v3817, %v3820
    %v3823 = vsel %vm643, %v3808, 0
    %3825 = vmatprep.subr.mxu0 0.0
    %3826 = vmatpush1.msra.mxu0 0.0
    %3827 = vmatprep.subr.mxu0 0.0
    %3828 = vmatpush1.msra.mxu0 0.0
    %3829 = vmatprep.subr.mxu0 0.0
    %3830 = vmatpush1.msra.mxu0 0.0
    %3831 = vmatprep.subr.mxu0 0.0
    %3832 = vmatpush1.msra.mxu0 0.0
    %3833 = vmatprep.subr.mxu0 0.0
    %3834 = vmatpush1.msra.mxu0 0.0
    %3835 = vmatprep.subr.mxu0 0.0
    %3836 = vmatpush1.msra.mxu0 0.0
    %3837 = vmatprep.subr.mxu0 0.0
    %3838 = vmatpush1.msra.mxu0 0.0
    %3839 = vmatprep.subr.mxu0 0.0
    %3840 = vmatpush1.msra.mxu0 0.0
    %3841 = vmatprep.subr.mxu0 0.0
    %3842 = vmatpush1.msra.mxu0 %v3816
    %3843 = vmatprep.subr.mxu0 0.0
    %3844 = vmatpush1.msra.mxu0 %v3815
    %3845 = vmatprep.subr.mxu0 0.0
    %3846 = vmatpush1.msra.mxu0 %v3814
    %3847 = vmatprep.subr.mxu0 0.0
    %3848 = vmatpush1.msra.mxu0 %v3813
    %3849 = vmatprep.subr.mxu0 0.0
    %3850 = vmatpush1.msra.mxu0 %v3812
    %3851 = vmatprep.subr.mxu0 0.0
    %3852 = vmatpush1.msra.mxu0 %v3811
    %3853 = vmatprep.subr.mxu0 0.0
    %3854 = vmatpush1.msra.mxu0 %v3810
    %3855 = vmatprep.subr.mxu0 0.0
    %3856 = vmatpush1.msra.mxu0 %v3809
    %3857 = vmatprep.subr.mxu0 0.0
    %3858 = vmatpush2.msra.mxu0 0.0
    %3859 = vmatprep.subr.mxu0 0.0
    %3860 = vmatpush2.msra.mxu0 0.0
    %3861 = vmatprep.subr.mxu0 0.0
    %3862 = vmatpush2.msra.mxu0 0.0
    %3863 = vmatprep.subr.mxu0 0.0
    %3864 = vmatpush2.msra.mxu0 0.0
    %3865 = vmatprep.subr.mxu0 0.0
    %3866 = vmatpush2.msra.mxu0 0.0
    %3867 = vmatprep.subr.mxu0 0.0
    %3868 = vmatpush2.msra.mxu0 0.0
    %3869 = vmatprep.subr.mxu0 0.0
    %3870 = vmatpush2.msra.mxu0 0.0
    %3871 = vmatprep.subr.mxu0 0.0
    %3872 = vmatpush2.msra.mxu0 0.0
    %3873 = vmatprep.subr.mxu0 0.0
    %3874 = vmatpush2.msra.mxu0 0.0
    %3875 = vmatprep.subr.mxu0 0.0
    %3876 = vmatpush2.msra.mxu0 0.0
    %3877 = vmatprep.subr.mxu0 0.0
    %3878 = vmatpush2.msra.mxu0 0.0
    %3879 = vmatprep.subr.mxu0 0.0
    %3880 = vmatpush2.msra.mxu0 0.0
    %3881 = vmatprep.subr.mxu0 0.0
    %3882 = vmatpush2.msra.mxu0 0.0
    %3883 = vmatprep.subr.mxu0 0.0
    %3884 = vmatpush2.msra.mxu0 0.0
    %3885 = vmatprep.subr.mxu0 0.0
    %3886 = vmatpush2.msra.mxu0 0.0
    %3887 = vmatprep.subr.mxu0 0.0
    %3888 = vmatpush2.msra.mxu0 0.0
    %3889 = vmatprep.mubr.f32.mxu0 0.0
    %3890 = vmatmul.mubr.f32.gmra.mxu0 %v3823
    %v3891 = vpop.f32.mrf.mxu0
    %v3892 = vadd.f32 %v3821, %v3891
    %v3893 = vpop.f32.mrf.mxu0
    %3894 = vdwg.mxu0
    %v3895 = vmul.f32 %v3808, %v3808
    %vm3896 = vcmask 517120
    %v3897 = vsel %vm3896, %v3895, 0.0
    %3898 = vadd.xlane.f32.xlu0 %v3897
    %v3899 = vpop.xlane.xlu0 %3898
    %v3900 = vmax.f32 %v3899, 1e-16
    %v3901 = vrsqrt.pop %v3900
    %vm3902 = vcmask 519170
    %v3903 = vsel %vm3902, %v3895, 0.0
    %3904 = vadd.xlane.f32.xlu0 %v3903
    %v3905 = vpop.xlane.xlu0 %3904
    %v3906 = vmax.f32 %v3905, 1e-16
    %v3907 = vrsqrt.pop %v3906
    %v3908 = vmul.f32 %v3808, %v3901
    %v3909 = vmul.f32 %v3808, %v3907
    %v3911 = vrot.slane %v3909, 2
    %v3913 = vsel %vm643, %v3908, 0
    %v3915 = vsel %vm643, %v3911, 0
    %3917 = vmatprep.subr.mxu0 0.0
    %3918 = vmatpush1.xpose.msra.mxu0 0.0
    %3919 = vmatprep.subr.mxu0 0.0
    %3920 = vmatpush1.xpose.msra.mxu0 0.0
    %3921 = vmatprep.subr.mxu0 0.0
    %3922 = vmatpush1.xpose.msra.mxu0 0.0
    %3923 = vmatprep.subr.mxu0 0.0
    %3924 = vmatpush1.xpose.msra.mxu0 0.0
    %3925 = vmatprep.subr.mxu0 0.0
    %3926 = vmatpush1.xpose.msra.mxu0 0.0
    %3927 = vmatprep.subr.mxu0 0.0
    %3928 = vmatpush1.xpose.msra.mxu0 0.0
    %3929 = vmatprep.subr.mxu0 0.0
    %3930 = vmatpush1.xpose.msra.mxu0 0.0
    %3931 = vmatprep.subr.mxu0 0.0
    %3932 = vmatpush1.xpose.msra.mxu0 0.0
    %3933 = vmatprep.subr.mxu0 0.0
    %3934 = vmatpush1.xpose.msra.mxu0 0.0
    %3935 = vmatprep.subr.mxu0 0.0
    %3936 = vmatpush1.xpose.msra.mxu0 0.0
    %3937 = vmatprep.subr.mxu0 0.0
    %3938 = vmatpush1.xpose.msra.mxu0 0.0
    %3939 = vmatprep.subr.mxu0 0.0
    %3940 = vmatpush1.xpose.msra.mxu0 0.0
    %3941 = vmatprep.subr.mxu0 0.0
    %3942 = vmatpush1.xpose.msra.mxu0 0.0
    %3943 = vmatprep.subr.mxu0 0.0
    %3944 = vmatpush1.xpose.msra.mxu0 0.0
    %3945 = vmatprep.subr.mxu0 0.0
    %3946 = vmatpush1.xpose.msra.mxu0 0.0
    %3947 = vmatprep.subr.mxu0 0.0
    %3948 = vmatpush1.xpose.msra.mxu0 %v3915
    %3949 = vmatprep.subr.mxu0 0.0
    %3950 = vmatpush2.xpose.msra.mxu0 0.0
    %3951 = vmatprep.subr.mxu0 0.0
    %3952 = vmatpush2.xpose.msra.mxu0 0.0
    %3953 = vmatprep.subr.mxu0 0.0
    %3954 = vmatpush2.xpose.msra.mxu0 0.0
    %3955 = vmatprep.subr.mxu0 0.0
    %3956 = vmatpush2.xpose.msra.mxu0 0.0
    %3957 = vmatprep.subr.mxu0 0.0
    %3958 = vmatpush2.xpose.msra.mxu0 0.0
    %3959 = vmatprep.subr.mxu0 0.0
    %3960 = vmatpush2.xpose.msra.mxu0 0.0
    %3961 = vmatprep.subr.mxu0 0.0
    %3962 = vmatpush2.xpose.msra.mxu0 0.0
    %3963 = vmatprep.subr.mxu0 0.0
    %3964 = vmatpush2.xpose.msra.mxu0 0.0
    %3965 = vmatprep.subr.mxu0 0.0
    %3966 = vmatpush2.xpose.msra.mxu0 0.0
    %3967 = vmatprep.subr.mxu0 0.0
    %3968 = vmatpush2.xpose.msra.mxu0 0.0
    %3969 = vmatprep.subr.mxu0 0.0
    %3970 = vmatpush2.xpose.msra.mxu0 0.0
    %3971 = vmatprep.subr.mxu0 0.0
    %3972 = vmatpush2.xpose.msra.mxu0 0.0
    %3973 = vmatprep.subr.mxu0 0.0
    %3974 = vmatpush2.xpose.msra.mxu0 0.0
    %3975 = vmatprep.subr.mxu0 0.0
    %3976 = vmatpush2.xpose.msra.mxu0 0.0
    %3977 = vmatprep.subr.mxu0 0.0
    %3978 = vmatpush2.xpose.msra.mxu0 0.0
    %3979 = vmatprep.subr.mxu0 0.0
    %3980 = vmatpush2.xpose.msra.mxu0 0.0
    %3981 = vmatprep.mubr.f32.mxu0 0.0
    %3982 = vmatmul.mubr.f32.gmra.mxu0 %v3913
    %v3983 = vpop.f32.mrf.mxu0
    %v3984 = vadd.f32 0.0, %v3983
    %v3985 = vpop.f32.mrf.mxu0
    %3986 = vdwg.mxu0
    %vm3987 = vcmask 9216
    %v3988 = vsel %vm3987, %v3984, 0.0
    %3989 = vadd.xlane.f32.xlu0 %v3988
    %v3990 = vpop.xlane.xlu0 %3989
    %v3991 = vrcp.pop 2.0
    %v3992 = vmul.f32 %v3990, %v3991
    %vm3993 = vcmask 1041408
    %v3994 = vsel %vm3993, %v3992, -inf
    %v3995 = vrot.slane %v3994, 4
    %v3996 = vmax.f32 %v3994, %v3995
    %v3997 = vrot.slane %v3996, 2
    %v3998 = vmax.f32 %v3996, %v3997
    %v3999 = vrot.slane %v3998, 1
    %v4000 = vmax.f32 %v3998, %v3999
    %v4001 = vsub.f32 %v3992, %v4000
    %v4002 = vmul.f32 %v4001, 1.442695
    %v4003 = vpow.pop %v4002
    %v4004 = vsel %vm3993, %v4003, 0.0
    %v4005 = vrot.slane %v4004, 4
    %v4006 = vadd.f32 %v4004, %v4005
    %v4007 = vrot.slane %v4006, 2
    %v4008 = vadd.f32 %v4006, %v4007
    %v4009 = vrot.slane %v4008, 1
    %v4010 = vadd.f32 %v4008, %v4009
    %v4011 = vrcp.pop %v4010
    %v4012 = vmul.f32 %v4003, %v4011
    %4013 = vst [vmem:[%s4] sm:$0xff] 0.0
    %vm4014 = vcmask 19456
    %4015 = vst.msk [vmem:[%s4] sm:$0xf] %vm4014, %v3892
    %vm4016 = vcmask 525824
    %4017 = vst.msk [vmem:[%s4] sm:$0x3] %vm4016, %v4012
    %v4018 = vstv %s1030
    %vm4019 = vcmask 787200
    %4020 = vst.msk [vmem:[%s4] sm:$0x1] %vm4019, %v4018
    %v4021 = vstv %s3642
    %vm4022 = vcmask 795400
    %4023 = vst.msk [vmem:[%s4] sm:$0x1] %vm4022, %v4021
    %v4024 = vstv %s3475
    %vm4025 = vcmask 803600
    %4026 = vst.msk [vmem:[%s4] sm:$0x1] %vm4025, %v4024
    // Predicated region
    $region26: #{_lambda_.1} parent=1 // pred_check
      _
    $region27: #{_lambda_.1} parent=1 // pred_check_branch
      %4028 = sbr.rel (0) target = $region29
    $region28: #{_lambda_.1} parent=1 // pred_region
      _
    $region29: #{_lambda_.1} parent=1 // pred_fallthru
      _
    // Predicated region
    $region30: #{_lambda_.1} parent=1 // pred_check
      _
    $region31: #{_lambda_.1} parent=1 // pred_check_branch
      %4030 = sbr.rel (0) target = $region33
    $region32: #{_lambda_.1} parent=1 // pred_region
      _
    $region33: #{_lambda_.1} parent=1 // pred_fallthru
      _
    %4031 = vsyncpa [#allocation5], 1
    %4032 = vsyncpa [#allocation6], 1

</llo_original>
